<compile_context>
chip_gen: v5e
topology: v5e:2x2
jax: 0.10.0
libtpu: 0.0.40
codegen_flags: <defaults>
</compile_context>

<pallas_src>
import math
import functools

import jax
import jax.numpy as jnp
from jax import lax
from jax.experimental import pallas as pl
from jax.experimental.pallas import tpu as pltpu

CONV_NUM = 4
HIDDEN = 128          # hidden_size; 128 = one TPU lane width
NUM_HEADS = 8
KERNEL_SIZE = 7
LN_EPS = 1e-5         # PyTorch nn.LayerNorm default


def get_timing_signal(length, channels, min_timescale=1.0, max_timescale=10000.0):
    """JAX port of the PyTorch helper; returns (length, channels) float32."""
    position = jnp.arange(length, dtype=jnp.float32)
    num_timescales = channels // 2
    log_timescale_increment = math.log(float(max_timescale) / float(min_timescale)) / (
        float(num_timescales) - 1.0)
    inv_timescales = min_timescale * jnp.exp(
        jnp.arange(num_timescales, dtype=jnp.float32) * -log_timescale_increment)
    scaled_time = position[:, None] * inv_timescales[None, :]
    signal = jnp.concatenate([jnp.sin(scaled_time), jnp.cos(scaled_time)], axis=1)
    if channels % 2:
        signal = jnp.pad(signal, ((0, 0), (0, 1)))
    return signal


def _layer_norm(x, gamma, beta):
    mu = jnp.mean(x, axis=-1, keepdims=True)
    xc = x - mu
    var = jnp.mean(xc * xc, axis=-1, keepdims=True)
    return xc * lax.rsqrt(var + LN_EPS) * gamma + beta


def encoder_block_kernel(x_ref, pos_ref, mask_ref, cln_g_ref, cln_b_ref, *rest,
                         conv_num, kernel_size, num_heads, fold_dw):
    if fold_dw:
        (dwpw_ref, pw_b_ref,
         aln_g_ref, aln_b_ref, w_qkv_ref, b_qkv_ref, w_out_ref, b_out_ref,
         fln_g_ref, fln_b_ref, w1_ref, b1_ref, w2_ref, b2_ref,
         out_ref) = rest
        dw_w_ref = pw_w_ref = None
    else:
        (dw_w_ref, pw_w_ref, pw_b_ref,
         aln_g_ref, aln_b_ref, w_qkv_ref, b_qkv_ref, w_out_ref, b_out_ref,
         fln_g_ref, fln_b_ref, w1_ref, b1_ref, w2_ref, b2_ref,
         out_ref) = rest
        dwpw_ref = None

    Bt, L, C = x_ref.shape
    R = Bt * L
    pad = kernel_size // 2
    d = C // num_heads
    scale = 1.0 / math.sqrt(d)
    bf16 = jnp.bfloat16

    # ---- PosEncoder: x + timing signal; flatten position-wise work to (Bt*L, C) ----
    h = (x_ref[...] + pos_ref[...][None]).reshape(R, C)

    # Per-tap sequence-boundary masks, built once per grid step from an iota and
    # reused across all conv layers (replaces the lane-padded edge-mask input).
    row = lax.broadcasted_iota(jnp.int32, (R, 1), 0)
    l_idx = row % L                                          # position within sequence
    tap_mask = {}
    for k in range(kernel_size):
        off = k - pad
        if off != 0:
            src = l_idx + off
            tap_mask[off] = ((src >= 0) & (src < L)).astype(jnp.float32)  # (R, 1)

    # ---- RepeatedDepthwiseSeparableConv (eval mode: dropout = identity) ----
    # TODO(synk): training-time dropout is not implemented (eval-mode semantics).
    for i in range(conv_num):
        res = h
        hn = _layer_norm(h, cln_g_ref[i:i + 1, :], cln_b_ref[i:i + 1, :])
        if fold_dw:
            # Depthwise taps folded into the pointwise matmul: for each tap k,
            # dot with fused W_k[c,:] = dw[k,c]*pw[c,:] and accumulate in f32.
            out = None
            for k in range(kernel_size):
                off = k - pad
                if off == 0:
                    tap = hn
                else:
                    # shifted[r] = hn[r + off], zeroed outside the own sequence
                    tap = pltpu.roll(hn, (-off) % R, axis=0) * tap_mask[off]
                part = jnp.dot(tap.astype(bf16), dwpw_ref[i, k],
                               preferred_element_type=jnp.float32)
                out = part if out is None else out + part
            out = out + pw_b_ref[i:i + 1, :]
        else:
            # VPU tap chain (preferred on v5e) + one pointwise matmul.
            w_dw = dw_w_ref[i]                               # (K, C) f32
            acc = jnp.zeros((R, C), dtype=jnp.float32)
            for k in range(kernel_size):
                off = k - pad
                if off == 0:
                    tap = hn
                else:
                    tap = pltpu.roll(hn, (-off) % R, axis=0) * tap_mask[off]
                acc = acc + tap * w_dw[k:k + 1, :]
            out = jnp.dot(acc.astype(bf16), pw_w_ref[i],
                          preferred_element_type=jnp.float32) + pw_b_ref[i:i + 1, :]
        h = jnp.maximum(out, 0.0) + res                      # ReLU + residual

    # ---- multi-head self-attention (key_padding_mask semantics) ----
    res = h
    hn = _layer_norm(h, aln_g_ref[...], aln_b_ref[...])
    # fused QKV: one (R, C) @ (C, 3C) matmul
    qkv = jnp.dot(hn.astype(bf16), w_qkv_ref[...],
                  preferred_element_type=jnp.float32) + b_qkv_ref[...]    # (R, 3C)
    # mask value 1.0 -> padded key position (ignored), 0.0 -> attended
    neg = mask_ref[...] * (-1e30)                                         # (Bt, 1, L)
    # TODO(synk): per-head loop keeps 16-lane qkv slices; full head batching
    # needs a lane->sublane relayout of (R, C) -> (Bt, H, L, d) in-kernel.
    attn = None
    for hh in range(num_heads):
        lo = hh * d
        qh = (qkv[:, lo:lo + d] * scale).reshape(Bt, L, d)
        kh = qkv[:, C + lo:C + lo + d].reshape(Bt, L, d)
        vh = qkv[:, 2 * C + lo:2 * C + lo + d].reshape(Bt, L, d)
        s = jnp.einsum('bld,bmd->blm', qh.astype(bf16), kh.astype(bf16),
                       preferred_element_type=jnp.float32)                # (Bt, L, L)
        s = s + neg
        s = s - jnp.max(s, axis=-1, keepdims=True)
        p = jnp.exp(s)
        denom = jnp.sum(p, axis=-1, keepdims=True)                        # (Bt, L, 1)
        # normalize AFTER P@V: scale the (Bt, L, d) output, not the (Bt, L, L) probs
        oh = jnp.einsum('blm,bmd->bld', p.astype(bf16), vh.astype(bf16),
                        preferred_element_type=jnp.float32)               # (Bt, L, d)
        oh = oh * pl.reciprocal(denom, approx=True)
        # fold the output projection per head (no scratch, no masked 16-lane stores)
        part = jnp.dot(oh.reshape(R, d).astype(bf16), w_out_ref[lo:lo + d, :],
                       preferred_element_type=jnp.float32)                # (R, C)
        attn = part if attn is None else attn + part
    h = attn + b_out_ref[...] + res

    # ---- feed-forward: ffn_1 (relu, bias) -> ffn_2 (bias) + residual ----
    res = h
    hn = _layer_norm(h, fln_g_ref[...], fln_b_ref[...])
    h1 = jnp.maximum(
        jnp.dot(hn.astype(bf16), w1_ref[...], preferred_element_type=jnp.float32)
        + b1_ref[...], 0.0)
    h2 = jnp.dot(h1.astype(bf16), w2_ref[...],
                 preferred_element_type=jnp.float32) + b2_ref[...]
    out_ref[...] = (h2 + res).reshape(Bt, L, C).astype(out_ref.dtype)


def _choose_block_batch(B, L, target_rows=256, max_rows=2048, max_score_elems=1 << 20):
    """Pick Bt (divisor of B): fill the MXU M-dim (Bt*L) while bounding both the
    (Bt*L, C) activation rows and the (Bt, L, L) attention-score footprint, and
    prefer >=2 grid steps so both v7x TensorCores get work."""
    if L >= 512:
        max_rows = min(max_rows, 1024)   # v7x (64 MiB): keep L^2 score temporaries small
    divisors = [b for b in range(1, B + 1) if B % b == 0]
    candidates = [b for b in divisors
                  if b * L <= max_rows and b * L * L <= max_score_elems] or [1]
    bt = max(candidates)
    if B // bt < 2:
        alt = [b for b in candidates if B // b >= 2]
        if alt:
            if bt * L < target_rows:
                bt = max(alt)            # rows were small anyway; feed both cores
            else:
                big = [b for b in alt if b * L >= target_rows]
                if big:
                    bt = max(big)
    # TODO(synk): for B == 1 a query-block grid axis over L would be needed to
    # give both v7x TensorCores work.
    return bt


def encoder_block(x, key_padding_mask, params, *, conv_num=CONV_NUM,
                  kernel_size=KERNEL_SIZE, num_heads=NUM_HEADS, block_batch=None,
                  fold_depthwise_into_mxu=True):
    """x: (B, L, C) float32.  key_padding_mask: (B, L) bool, True = padded key.

    fold_depthwise_into_mxu=True  -> depthwise taps folded into MXU (v6e/v7x).
    fold_depthwise_into_mxu=False -> VPU tap chain + single pointwise matmul (v5e).
    """
    B, L, C = x.shape
    Bt = _choose_block_batch(B, L) if block_batch is None else block_batch
    assert B % Bt == 0

    pos = get_timing_signal(L, C).astype(jnp.float32)                # (L, C)
    mask_f = key_padding_mask.astype(jnp.float32).reshape(B, 1, L)

    bf16 = jnp.bfloat16
    # fused QKV weight (C, 3C) + bias (1, 3C); matmul weights pre-cast to bf16
    w_qkv = jnp.concatenate(
        [params["w_in"][0], params["w_in"][1], params["w_in"][2]], axis=1).astype(bf16)
    b_qkv = params["b_in"].reshape(1, 3 * C).astype(jnp.float32)
    w_out = params["w_out"].astype(bf16)
    w1 = params["w1"].astype(bf16)
    w2 = params["w2"].astype(bf16)

    full2 = lambda b: (0, 0)
    full3 = lambda b: (0, 0, 0)
    full4 = lambda b: (0, 0, 0, 0)

    if fold_depthwise_into_mxu:
        # fused per-tap depthwise*pointwise weights: W[i,k,c,o] = dw[i,k,c] * pw[i,c,o]
        dwpw = (params["dw_w"][:, :, :, None] * params["pw_w"][:, None, :, :]).astype(bf16)
        conv_inputs = [dwpw]
        conv_specs = [pl.BlockSpec((conv_num, kernel_size, C, C), full4)]
    else:
        conv_inputs = [params["dw_w"], params["pw_w"].astype(bf16)]
        conv_specs = [pl.BlockSpec((conv_num, kernel_size, C), full3),
                      pl.BlockSpec((conv_num, C, C), full3)]

    kernel = functools.partial(encoder_block_kernel, conv_num=conv_num,
                               kernel_size=kernel_size, num_heads=num_heads,
                               fold_dw=fold_depthwise_into_mxu)

    in_specs = ([
        pl.BlockSpec((Bt, L, C), lambda b: (b, 0, 0)),        # x
        pl.BlockSpec((L, C), full2),                          # timing signal
        pl.BlockSpec((Bt, 1, L), lambda b: (b, 0, 0)),        # key padding mask
        pl.BlockSpec((conv_num, C), full2),                   # conv LN gamma
        pl.BlockSpec((conv_num, C), full2),                   # conv LN beta
    ] + conv_specs + [
        pl.BlockSpec((conv_num, C), full2),                   # pointwise bias
        pl.BlockSpec((1, C), full2),                          # attn LN gamma
        pl.BlockSpec((1, C), full2),                          # attn LN beta
        pl.BlockSpec((C, 3 * C), full2),                      # fused QKV weight (bf16)
        pl.BlockSpec((1, 3 * C), full2),                      # fused QKV bias
        pl.BlockSpec((C, C), full2),                          # out proj weight (bf16)
        pl.BlockSpec((1, C), full2),                          # out proj bias
        pl.BlockSpec((1, C), full2),                          # ffn LN gamma
        pl.BlockSpec((1, C), full2),                          # ffn LN beta
        pl.BlockSpec((C, C), full2),                          # ffn_1 weight (bf16)
        pl.BlockSpec((1, C), full2),                          # ffn_1 bias
        pl.BlockSpec((C, C), full2),                          # ffn_2 weight (bf16)
        pl.BlockSpec((1, C), full2),                          # ffn_2 bias
    ])

    inputs = ([x, pos, mask_f, params["conv_ln_g"], params["conv_ln_b"]]
              + conv_inputs
              + [params["pw_b"], params["attn_ln_g"], params["attn_ln_b"],
                 w_qkv, b_qkv, w_out, params["b_out"],
                 params["ffn_ln_g"], params["ffn_ln_b"],
                 w1, params["b1"], w2, params["b2"]])

    return pl.pallas_call(
        kernel,
        out_shape=jax.ShapeDtypeStruct((B, L, C), x.dtype),
        grid_spec=pltpu.PrefetchScalarGridSpec(
            num_scalar_prefetch=0,
            grid=(B // Bt,),
            in_specs=in_specs,
            out_specs=pl.BlockSpec((Bt, L, C), lambda b: (b, 0, 0)),
        ),
        compiler_params=pltpu.CompilerParams(
            dimension_semantics=("parallel",),
            # fits comfortably within v7x's 64 MiB per-TC VMEM (and v5e/v6e's 128 MiB)
            vmem_limit_bytes=32 * 1024 * 1024,
        ),
    )(*inputs)


def init_params(key, C=HIDDEN, conv_num=CONV_NUM, kernel_size=KERNEL_SIZE):
    """Deterministic synthetic weights with the same shapes as the PyTorch module
    (linear / pointwise weights stored pre-transposed as (in, out))."""
    keys = jax.random.split(key, 6)
    w = lambda k, shape, s=0.05: jax.random.normal(k, shape, jnp.float32) * s
    return dict(
        conv_ln_g=jnp.ones((conv_num, C), jnp.float32),
        conv_ln_b=jnp.zeros((conv_num, C), jnp.float32),
        dw_w=w(keys[0], (conv_num, kernel_size, C)),   # depthwise Conv1d (C,1,K) -> (K, C)
        pw_w=w(keys[1], (conv_num, C, C)),             # pointwise Conv1d (Cout,Cin,1) -> (Cin, Cout)
        pw_b=jnp.zeros((conv_num, C), jnp.float32),
        attn_ln_g=jnp.ones((1, C), jnp.float32),
        attn_ln_b=jnp.zeros((1, C), jnp.float32),
        w_in=w(keys[2], (3, C, C)),                    # MHA in_proj (3E,E) -> 3 x (E, E).T
        b_in=jnp.zeros((3, C), jnp.float32),
        w_out=w(keys[3], (C, C)),                      # MHA out_proj (E,E).T
        b_out=jnp.zeros((1, C), jnp.float32),
        ffn_ln_g=jnp.ones((1, C), jnp.float32),
        ffn_ln_b=jnp.zeros((1, C), jnp.float32),
        w1=w(keys[4], (C, C)),                         # ffn_1 (relu, bias)
        b1=jnp.zeros((1, C), jnp.float32),
        w2=w(keys[5], (C, C)),                         # ffn_2 (bias)
        b2=jnp.zeros((1, C), jnp.float32),
    )


def encoder_block_reference(x, key_padding_mask, params, *, conv_num=CONV_NUM,
                            kernel_size=KERNEL_SIZE, num_heads=NUM_HEADS):
    """Pure-JAX eval-mode reference (f32), mirroring the PyTorch module."""
    B, L, C = x.shape
    pad = kernel_size // 2
    d = C // num_heads
    h = x + get_timing_signal(L, C)[None]

    def ln(v, g, b):
        mu = jnp.mean(v, -1, keepdims=True)
        vc = v - mu
        var = jnp.mean(vc * vc, -1, keepdims=True)
        return vc / jnp.sqrt(var + LN_EPS) * g + b

    for i in range(conv_num):
        res = h
        hn = ln(h, params["conv_ln_g"][i], params["conv_ln_b"][i])
        hp = jnp.pad(hn, ((0, 0), (pad, pad), (0, 0)))
        acc = sum(hp[:, k:k + L, :] * params["dw_w"][i][k] for k in range(kernel_size))
        out = jnp.einsum('blc,cd->bld', acc, params["pw_w"][i]) + params["pw_b"][i]
        h = jax.nn.relu(out) + res

    res = h
    hn = ln(h, params["attn_ln_g"][0], params["attn_ln_b"][0])
    q = hn @ params["w_in"][0] + params["b_in"][0]
    k = hn @ params["w_in"][1] + params["b_in"][1]
    v = hn @ params["w_in"][2] + params["b_in"][2]
    q = q.reshape(B, L, num_heads, d).transpose(0, 2, 1, 3) / math.sqrt(d)
    k = k.reshape(B, L, num_heads, d).transpose(0, 2, 1, 3)
    v = v.reshape(B, L, num_heads, d).transpose(0, 2, 1, 3)
    s = jnp.einsum('bhld,bhmd->bhlm', q, k)
    s = s + jnp.where(key_padding_mask, -1e30, 0.0)[:, None, None, :]
    p = jax.nn.softmax(s, axis=-1)
    o = jnp.einsum('bhlm,bhmd->bhld', p, v).transpose(0, 2, 1, 3).reshape(B, L, C)
    attn = o @ params["w_out"] + params["b_out"][0]
    h = attn + res

    res = h
    hn = ln(h, params["ffn_ln_g"][0], params["ffn_ln_b"][0])
    h1 = jax.nn.relu(hn @ params["w1"] + params["b1"][0])
    h2 = h1 @ params["w2"] + params["b2"][0]
    return h2 + res


if __name__ == "__main__":
    key = jax.random.PRNGKey(0)
    kx, kp = jax.random.split(key)
    B, L, C = 2, 16, HIDDEN
    x = jax.random.normal(kx, (B, L, C), jnp.float32)
    # key_padding_mask: True = padding (ignored by attention), last 2 positions padded
    mask = jnp.zeros((B, L), dtype=jnp.bool_).at[:, L - 2:].set(True)
    params = init_params(kp)

    # MXU-folded depthwise path (v6e / v7x default)
    out = jax.block_until_ready(encoder_block(x, mask, params))
    assert out.shape == (B, L, C) and out.dtype == jnp.float32
    assert bool(jnp.all(jnp.isfinite(out)))

    # VPU tap path (v5e)
    out_vpu = jax.block_until_ready(
        encoder_block(x, mask, params, fold_depthwise_into_mxu=False))

    with jax.default_matmul_precision("highest"):
        ref = jax.block_until_ready(encoder_block_reference(x, mask, params))
    err = float(jnp.max(jnp.abs(out - ref)))
    assert err < 1e-1, f"fold kernel/reference mismatch: max abs err = {err}"
    err_vpu = float(jnp.max(jnp.abs(out_vpu - ref)))
    assert err_vpu < 1e-1, f"vpu kernel/reference mismatch: max abs err = {err_vpu}"
    print("KERNEL_OK")
</pallas_src>

<mosaic_0001>
module attributes {stable_mosaic.version = 11 : i64} {
  func.func @encoder_block_kernel(%arg0: i32, %arg1: memref<1x16x128xf32, #tpu.memory_space<vmem>>, %arg2: memref<16x128xf32, #tpu.memory_space<vmem>>, %arg3: memref<1x1x16xf32, #tpu.memory_space<vmem>>, %arg4: memref<4x128xf32, #tpu.memory_space<vmem>>, %arg5: memref<4x128xf32, #tpu.memory_space<vmem>>, %arg6: memref<4x7x128x128xbf16, #tpu.memory_space<vmem>>, %arg7: memref<4x128xf32, #tpu.memory_space<vmem>>, %arg8: memref<1x128xf32, #tpu.memory_space<vmem>>, %arg9: memref<1x128xf32, #tpu.memory_space<vmem>>, %arg10: memref<128x384xbf16, #tpu.memory_space<vmem>>, %arg11: memref<1x384xf32, #tpu.memory_space<vmem>>, %arg12: memref<128x128xbf16, #tpu.memory_space<vmem>>, %arg13: memref<1x128xf32, #tpu.memory_space<vmem>>, %arg14: memref<1x128xf32, #tpu.memory_space<vmem>>, %arg15: memref<1x128xf32, #tpu.memory_space<vmem>>, %arg16: memref<128x128xbf16, #tpu.memory_space<vmem>>, %arg17: memref<1x128xf32, #tpu.memory_space<vmem>>, %arg18: memref<128x128xbf16, #tpu.memory_space<vmem>>, %arg19: memref<1x128xf32, #tpu.memory_space<vmem>>, %arg20: memref<1x16x128xf32, #tpu.memory_space<vmem>>) attributes {dimension_semantics = [#tpu.dimension_semantics<parallel>], iteration_bounds = array<i64: 2>, scalar_prefetch = 0 : i64, scratch_operands = 0 : i64, tpu.core_type = #tpu.core_type<tc>, window_params = [{transform_indices = @transform_0, window_bounds = array<i64: 1, 16, 128>}, {pipeline_mode = #tpu.pipeline_mode<synchronous>, transform_indices = @transform_1, window_bounds = array<i64: 16, 128>}, {transform_indices = @transform_2, window_bounds = array<i64: 1, 1, 16>}, {pipeline_mode = #tpu.pipeline_mode<synchronous>, transform_indices = @transform_3, window_bounds = array<i64: 4, 128>}, {pipeline_mode = #tpu.pipeline_mode<synchronous>, transform_indices = @transform_4, window_bounds = array<i64: 4, 128>}, {pipeline_mode = #tpu.pipeline_mode<synchronous>, transform_indices = @transform_5, window_bounds = array<i64: 4, 7, 128, 128>}, {pipeline_mode = #tpu.pipeline_mode<synchronous>, transform_indices = @transform_6, window_bounds = array<i64: 4, 128>}, {pipeline_mode = #tpu.pipeline_mode<synchronous>, transform_indices = @transform_7, window_bounds = array<i64: 1, 128>}, {pipeline_mode = #tpu.pipeline_mode<synchronous>, transform_indices = @transform_8, window_bounds = array<i64: 1, 128>}, {pipeline_mode = #tpu.pipeline_mode<synchronous>, transform_indices = @transform_9, window_bounds = array<i64: 128, 384>}, {pipeline_mode = #tpu.pipeline_mode<synchronous>, transform_indices = @transform_10, window_bounds = array<i64: 1, 384>}, {pipeline_mode = #tpu.pipeline_mode<synchronous>, transform_indices = @transform_11, window_bounds = array<i64: 128, 128>}, {pipeline_mode = #tpu.pipeline_mode<synchronous>, transform_indices = @transform_12, window_bounds = array<i64: 1, 128>}, {pipeline_mode = #tpu.pipeline_mode<synchronous>, transform_indices = @transform_13, window_bounds = array<i64: 1, 128>}, {pipeline_mode = #tpu.pipeline_mode<synchronous>, transform_indices = @transform_14, window_bounds = array<i64: 1, 128>}, {pipeline_mode = #tpu.pipeline_mode<synchronous>, transform_indices = @transform_15, window_bounds = array<i64: 128, 128>}, {pipeline_mode = #tpu.pipeline_mode<synchronous>, transform_indices = @transform_16, window_bounds = array<i64: 1, 128>}, {pipeline_mode = #tpu.pipeline_mode<synchronous>, transform_indices = @transform_17, window_bounds = array<i64: 128, 128>}, {pipeline_mode = #tpu.pipeline_mode<synchronous>, transform_indices = @transform_18, window_bounds = array<i64: 1, 128>}, {transform_indices = @transform_19, window_bounds = array<i64: 1, 16, 128>}]} {
    %c0 = arith.constant 0 : index
    %c0_0 = arith.constant 0 : index
    %c0_1 = arith.constant 0 : index
    %0 = vector.load %arg1[%c0, %c0_0, %c0_1] : memref<1x16x128xf32, #tpu.memory_space<vmem>>, vector<1x16x128xf32>
    %c0_2 = arith.constant 0 : index
    %c0_3 = arith.constant 0 : index
    %1 = vector.load %arg2[%c0_2, %c0_3] : memref<16x128xf32, #tpu.memory_space<vmem>>, vector<16x128xf32>
    %2 = vector.shape_cast %1 : vector<16x128xf32> to vector<1x16x128xf32>
    %3 = arith.addf %0, %2 : vector<1x16x128xf32>
    %4 = vector.shape_cast %3 : vector<1x16x128xf32> to vector<16x128xf32>
    %5 = tpu.iota {dimensions = array<i32: 0>} : vector<16x1xi32>
    %c16_i32 = arith.constant 16 : i32
    %c0_i32 = arith.constant 0 : i32
    %6 = arith.cmpi eq, %c16_i32, %c0_i32 : i32
    %c1_i32 = arith.constant 1 : i32
    %7 = arith.select %6, %c1_i32, %c16_i32 : i32
    %8 = vector.broadcast %7 : i32 to vector<16x1xi32>
    %9 = arith.remsi %5, %8 : vector<16x1xi32>
    %c0_i32_4 = arith.constant 0 : i32
    %10 = vector.broadcast %c0_i32_4 : i32 to vector<16x1xi32>
    %11 = arith.cmpi ne, %9, %10 : vector<16x1xi32>
    %c0_i32_5 = arith.constant 0 : i32
    %12 = vector.broadcast %c0_i32_5 : i32 to vector<16x1xi32>
    %13 = arith.cmpi slt, %9, %12 : vector<16x1xi32>
    %c0_i32_6 = arith.constant 0 : i32
    %14 = arith.cmpi slt, %7, %c0_i32_6 : i32
    %15 = vector.broadcast %14 : i1 to vector<16x1xi1>
    %16 = vector.broadcast %15 : vector<16x1xi1> to vector<16x1xi1>
    %17 = arith.xori %13, %16 : vector<16x1xi1>
    %18 = arith.andi %17, %11 : vector<16x1xi1>
    %19 = vector.broadcast %7 : i32 to vector<16x1xi32>
    %20 = arith.addi %9, %19 : vector<16x1xi32>
    %21 = arith.select %18, %20, %9 : vector<16x1xi1>, vector<16x1xi32>
    %c-3_i32 = arith.constant -3 : i32
    %22 = vector.broadcast %c-3_i32 : i32 to vector<16x1xi32>
    %23 = arith.addi %21, %22 : vector<16x1xi32>
    %c0_i32_7 = arith.constant 0 : i32
    %24 = vector.broadcast %c0_i32_7 : i32 to vector<16x1xi32>
    %25 = arith.cmpi sge, %23, %24 : vector<16x1xi32>
    %c16_i32_8 = arith.constant 16 : i32
    %26 = vector.broadcast %c16_i32_8 : i32 to vector<16x1xi32>
    %27 = arith.cmpi slt, %23, %26 : vector<16x1xi32>
    %28 = arith.andi %25, %27 : vector<16x1xi1>
    %29 = arith.extui %28 : vector<16x1xi1> to vector<16x1xi32>
    %30 = arith.sitofp %29 : vector<16x1xi32> to vector<16x1xf32>
    %c-2_i32 = arith.constant -2 : i32
    %31 = vector.broadcast %c-2_i32 : i32 to vector<16x1xi32>
    %32 = arith.addi %21, %31 : vector<16x1xi32>
    %c0_i32_9 = arith.constant 0 : i32
    %33 = vector.broadcast %c0_i32_9 : i32 to vector<16x1xi32>
    %34 = arith.cmpi sge, %32, %33 : vector<16x1xi32>
    %c16_i32_10 = arith.constant 16 : i32
    %35 = vector.broadcast %c16_i32_10 : i32 to vector<16x1xi32>
    %36 = arith.cmpi slt, %32, %35 : vector<16x1xi32>
    %37 = arith.andi %34, %36 : vector<16x1xi1>
    %38 = arith.extui %37 : vector<16x1xi1> to vector<16x1xi32>
    %39 = arith.sitofp %38 : vector<16x1xi32> to vector<16x1xf32>
    %c-1_i32 = arith.constant -1 : i32
    %40 = vector.broadcast %c-1_i32 : i32 to vector<16x1xi32>
    %41 = arith.addi %21, %40 : vector<16x1xi32>
    %c0_i32_11 = arith.constant 0 : i32
    %42 = vector.broadcast %c0_i32_11 : i32 to vector<16x1xi32>
    %43 = arith.cmpi sge, %41, %42 : vector<16x1xi32>
    %c16_i32_12 = arith.constant 16 : i32
    %44 = vector.broadcast %c16_i32_12 : i32 to vector<16x1xi32>
    %45 = arith.cmpi slt, %41, %44 : vector<16x1xi32>
    %46 = arith.andi %43, %45 : vector<16x1xi1>
    %47 = arith.extui %46 : vector<16x1xi1> to vector<16x1xi32>
    %48 = arith.sitofp %47 : vector<16x1xi32> to vector<16x1xf32>
    %c1_i32_13 = arith.constant 1 : i32
    %49 = vector.broadcast %c1_i32_13 : i32 to vector<16x1xi32>
    %50 = arith.addi %21, %49 : vector<16x1xi32>
    %c0_i32_14 = arith.constant 0 : i32
    %51 = vector.broadcast %c0_i32_14 : i32 to vector<16x1xi32>
    %52 = arith.cmpi sge, %50, %51 : vector<16x1xi32>
    %c16_i32_15 = arith.constant 16 : i32
    %53 = vector.broadcast %c16_i32_15 : i32 to vector<16x1xi32>
    %54 = arith.cmpi slt, %50, %53 : vector<16x1xi32>
    %55 = arith.andi %52, %54 : vector<16x1xi1>
    %56 = arith.extui %55 : vector<16x1xi1> to vector<16x1xi32>
    %57 = arith.sitofp %56 : vector<16x1xi32> to vector<16x1xf32>
    %c2_i32 = arith.constant 2 : i32
    %58 = vector.broadcast %c2_i32 : i32 to vector<16x1xi32>
    %59 = arith.addi %21, %58 : vector<16x1xi32>
    %c0_i32_16 = arith.constant 0 : i32
    %60 = vector.broadcast %c0_i32_16 : i32 to vector<16x1xi32>
    %61 = arith.cmpi sge, %59, %60 : vector<16x1xi32>
    %c16_i32_17 = arith.constant 16 : i32
    %62 = vector.broadcast %c16_i32_17 : i32 to vector<16x1xi32>
    %63 = arith.cmpi slt, %59, %62 : vector<16x1xi32>
    %64 = arith.andi %61, %63 : vector<16x1xi1>
    %65 = arith.extui %64 : vector<16x1xi1> to vector<16x1xi32>
    %66 = arith.sitofp %65 : vector<16x1xi32> to vector<16x1xf32>
    %c3_i32 = arith.constant 3 : i32
    %67 = vector.broadcast %c3_i32 : i32 to vector<16x1xi32>
    %68 = arith.addi %21, %67 : vector<16x1xi32>
    %c0_i32_18 = arith.constant 0 : i32
    %69 = vector.broadcast %c0_i32_18 : i32 to vector<16x1xi32>
    %70 = arith.cmpi sge, %68, %69 : vector<16x1xi32>
    %c16_i32_19 = arith.constant 16 : i32
    %71 = vector.broadcast %c16_i32_19 : i32 to vector<16x1xi32>
    %72 = arith.cmpi slt, %68, %71 : vector<16x1xi32>
    %73 = arith.andi %70, %72 : vector<16x1xi1>
    %74 = arith.extui %73 : vector<16x1xi1> to vector<16x1xi32>
    %75 = arith.sitofp %74 : vector<16x1xi32> to vector<16x1xf32>
    %c0_20 = arith.constant 0 : index
    %c0_21 = arith.constant 0 : index
    %76 = vector.load %arg4[%c0_20, %c0_21] : memref<4x128xf32, #tpu.memory_space<vmem>>, vector<1x128xf32>
    %c0_22 = arith.constant 0 : index
    %c0_23 = arith.constant 0 : index
    %77 = vector.load %arg5[%c0_22, %c0_23] : memref<4x128xf32, #tpu.memory_space<vmem>>, vector<1x128xf32>
    %cst = arith.constant dense<0.000000e+00> : vector<16xf32>
    %78 = vector.multi_reduction <add>, %4, %cst [1] : vector<16x128xf32> to vector<16xf32>
    %79 = vector.shape_cast %78 : vector<16xf32> to vector<16x1xf32>
    %cst_24 = arith.constant 1.280000e+02 : f32
    %80 = vector.broadcast %cst_24 : f32 to vector<16x1xf32>
    %81 = arith.divf %79, %80 : vector<16x1xf32>
    %82 = vector.broadcast %81 : vector<16x1xf32> to vector<16x128xf32>
    %83 = arith.subf %4, %82 : vector<16x128xf32>
    %84 = arith.mulf %83, %83 : vector<16x128xf32>
    %cst_25 = arith.constant dense<0.000000e+00> : vector<16xf32>
    %85 = vector.multi_reduction <add>, %84, %cst_25 [1] : vector<16x128xf32> to vector<16xf32>
    %86 = vector.shape_cast %85 : vector<16xf32> to vector<16x1xf32>
    %cst_26 = arith.constant 1.280000e+02 : f32
    %87 = vector.broadcast %cst_26 : f32 to vector<16x1xf32>
    %88 = arith.divf %86, %87 : vector<16x1xf32>
    %cst_27 = arith.constant 9.99999974E-6 : f32
    %89 = vector.broadcast %cst_27 : f32 to vector<16x1xf32>
    %90 = arith.addf %88, %89 : vector<16x1xf32>
    %91 = math.rsqrt %90 : vector<16x1xf32>
    %92 = vector.broadcast %91 : vector<16x1xf32> to vector<16x128xf32>
    %93 = arith.mulf %83, %92 : vector<16x128xf32>
    %94 = vector.broadcast %76 : vector<1x128xf32> to vector<16x128xf32>
    %95 = arith.mulf %93, %94 : vector<16x128xf32>
    %96 = vector.broadcast %77 : vector<1x128xf32> to vector<16x128xf32>
    %97 = arith.addf %95, %96 : vector<16x128xf32>
    %c3_i32_28 = arith.constant 3 : i32
    %98 = tpu.dynamic_rotate %97 by %c3_i32_28 dim 0 : vector<16x128xf32>, i32 -> vector<16x128xf32>
    %99 = vector.broadcast %30 : vector<16x1xf32> to vector<16x128xf32>
    %100 = arith.mulf %98, %99 : vector<16x128xf32>
    %101 = arith.truncf %100 : vector<16x128xf32> to vector<16x128xbf16>
    %c0_29 = arith.constant 0 : index
    %c0_30 = arith.constant 0 : index
    %c0_31 = arith.constant 0 : index
    %c0_32 = arith.constant 0 : index
    %102 = vector.load %arg6[%c0_29, %c0_30, %c0_31, %c0_32] : memref<4x7x128x128xbf16, #tpu.memory_space<vmem>>, vector<1x1x128x128xbf16>
    %103 = vector.shape_cast %102 : vector<1x1x128x128xbf16> to vector<128x128xbf16>
    %cst_33 = arith.constant dense<0.000000e+00> : vector<16x128xf32>
    %104 = tpu.matmul %101, %103, %cst_33 {dimension_numbers = #tpu.dot_dimension_numbers<[1], [0], [0], [1], [0, 0, 1, 1], [], []>} : vector<16x128xbf16>, vector<128x128xbf16>, vector<16x128xf32> -> vector<16x128xf32>
    %c2_i32_34 = arith.constant 2 : i32
    %105 = tpu.dynamic_rotate %97 by %c2_i32_34 dim 0 : vector<16x128xf32>, i32 -> vector<16x128xf32>
    %106 = vector.broadcast %39 : vector<16x1xf32> to vector<16x128xf32>
    %107 = arith.mulf %105, %106 : vector<16x128xf32>
    %108 = arith.truncf %107 : vector<16x128xf32> to vector<16x128xbf16>
    %c0_35 = arith.constant 0 : index
    %c1 = arith.constant 1 : index
    %c0_36 = arith.constant 0 : index
    %c0_37 = arith.constant 0 : index
    %109 = vector.load %arg6[%c0_35, %c1, %c0_36, %c0_37] : memref<4x7x128x128xbf16, #tpu.memory_space<vmem>>, vector<1x1x128x128xbf16>
    %110 = vector.shape_cast %109 : vector<1x1x128x128xbf16> to vector<128x128xbf16>
    %cst_38 = arith.constant dense<0.000000e+00> : vector<16x128xf32>
    %111 = tpu.matmul %108, %110, %cst_38 {dimension_numbers = #tpu.dot_dimension_numbers<[1], [0], [0], [1], [0, 0, 1, 1], [], []>} : vector<16x128xbf16>, vector<128x128xbf16>, vector<16x128xf32> -> vector<16x128xf32>
    %112 = arith.addf %104, %111 : vector<16x128xf32>
    %c1_i32_39 = arith.constant 1 : i32
    %113 = tpu.dynamic_rotate %97 by %c1_i32_39 dim 0 : vector<16x128xf32>, i32 -> vector<16x128xf32>
    %114 = vector.broadcast %48 : vector<16x1xf32> to vector<16x128xf32>
    %115 = arith.mulf %113, %114 : vector<16x128xf32>
    %116 = arith.truncf %115 : vector<16x128xf32> to vector<16x128xbf16>
    %c0_40 = arith.constant 0 : index
    %c2 = arith.constant 2 : index
    %c0_41 = arith.constant 0 : index
    %c0_42 = arith.constant 0 : index
    %117 = vector.load %arg6[%c0_40, %c2, %c0_41, %c0_42] : memref<4x7x128x128xbf16, #tpu.memory_space<vmem>>, vector<1x1x128x128xbf16>
    %118 = vector.shape_cast %117 : vector<1x1x128x128xbf16> to vector<128x128xbf16>
    %cst_43 = arith.constant dense<0.000000e+00> : vector<16x128xf32>
    %119 = tpu.matmul %116, %118, %cst_43 {dimension_numbers = #tpu.dot_dimension_numbers<[1], [0], [0], [1], [0, 0, 1, 1], [], []>} : vector<16x128xbf16>, vector<128x128xbf16>, vector<16x128xf32> -> vector<16x128xf32>
    %120 = arith.addf %112, %119 : vector<16x128xf32>
    %121 = arith.truncf %97 : vector<16x128xf32> to vector<16x128xbf16>
    %c0_44 = arith.constant 0 : index
    %c3 = arith.constant 3 : index
    %c0_45 = arith.constant 0 : index
    %c0_46 = arith.constant 0 : index
    %122 = vector.load %arg6[%c0_44, %c3, %c0_45, %c0_46] : memref<4x7x128x128xbf16, #tpu.memory_space<vmem>>, vector<1x1x128x128xbf16>
    %123 = vector.shape_cast %122 : vector<1x1x128x128xbf16> to vector<128x128xbf16>
    %cst_47 = arith.constant dense<0.000000e+00> : vector<16x128xf32>
    %124 = tpu.matmul %121, %123, %cst_47 {dimension_numbers = #tpu.dot_dimension_numbers<[1], [0], [0], [1], [0, 0, 1, 1], [], []>} : vector<16x128xbf16>, vector<128x128xbf16>, vector<16x128xf32> -> vector<16x128xf32>
    %125 = arith.addf %120, %124 : vector<16x128xf32>
    %c15_i32 = arith.constant 15 : i32
    %126 = tpu.dynamic_rotate %97 by %c15_i32 dim 0 : vector<16x128xf32>, i32 -> vector<16x128xf32>
    %127 = vector.broadcast %57 : vector<16x1xf32> to vector<16x128xf32>
    %128 = arith.mulf %126, %127 : vector<16x128xf32>
    %129 = arith.truncf %128 : vector<16x128xf32> to vector<16x128xbf16>
    %c0_48 = arith.constant 0 : index
    %c4 = arith.constant 4 : index
    %c0_49 = arith.constant 0 : index
    %c0_50 = arith.constant 0 : index
    %130 = vector.load %arg6[%c0_48, %c4, %c0_49, %c0_50] : memref<4x7x128x128xbf16, #tpu.memory_space<vmem>>, vector<1x1x128x128xbf16>
    %131 = vector.shape_cast %130 : vector<1x1x128x128xbf16> to vector<128x128xbf16>
    %cst_51 = arith.constant dense<0.000000e+00> : vector<16x128xf32>
    %132 = tpu.matmul %129, %131, %cst_51 {dimension_numbers = #tpu.dot_dimension_numbers<[1], [0], [0], [1], [0, 0, 1, 1], [], []>} : vector<16x128xbf16>, vector<128x128xbf16>, vector<16x128xf32> -> vector<16x128xf32>
    %133 = arith.addf %125, %132 : vector<16x128xf32>
    %c14_i32 = arith.constant 14 : i32
    %134 = tpu.dynamic_rotate %97 by %c14_i32 dim 0 : vector<16x128xf32>, i32 -> vector<16x128xf32>
    %135 = vector.broadcast %66 : vector<16x1xf32> to vector<16x128xf32>
    %136 = arith.mulf %134, %135 : vector<16x128xf32>
    %137 = arith.truncf %136 : vector<16x128xf32> to vector<16x128xbf16>
    %c0_52 = arith.constant 0 : index
    %c5 = arith.constant 5 : index
    %c0_53 = arith.constant 0 : index
    %c0_54 = arith.constant 0 : index
    %138 = vector.load %arg6[%c0_52, %c5, %c0_53, %c0_54] : memref<4x7x128x128xbf16, #tpu.memory_space<vmem>>, vector<1x1x128x128xbf16>
    %139 = vector.shape_cast %138 : vector<1x1x128x128xbf16> to vector<128x128xbf16>
    %cst_55 = arith.constant dense<0.000000e+00> : vector<16x128xf32>
    %140 = tpu.matmul %137, %139, %cst_55 {dimension_numbers = #tpu.dot_dimension_numbers<[1], [0], [0], [1], [0, 0, 1, 1], [], []>} : vector<16x128xbf16>, vector<128x128xbf16>, vector<16x128xf32> -> vector<16x128xf32>
    %141 = arith.addf %133, %140 : vector<16x128xf32>
    %c13_i32 = arith.constant 13 : i32
    %142 = tpu.dynamic_rotate %97 by %c13_i32 dim 0 : vector<16x128xf32>, i32 -> vector<16x128xf32>
    %143 = vector.broadcast %75 : vector<16x1xf32> to vector<16x128xf32>
    %144 = arith.mulf %142, %143 : vector<16x128xf32>
    %145 = arith.truncf %144 : vector<16x128xf32> to vector<16x128xbf16>
    %c0_56 = arith.constant 0 : index
    %c6 = arith.constant 6 : index
    %c0_57 = arith.constant 0 : index
    %c0_58 = arith.constant 0 : index
    %146 = vector.load %arg6[%c0_56, %c6, %c0_57, %c0_58] : memref<4x7x128x128xbf16, #tpu.memory_space<vmem>>, vector<1x1x128x128xbf16>
    %147 = vector.shape_cast %146 : vector<1x1x128x128xbf16> to vector<128x128xbf16>
    %cst_59 = arith.constant dense<0.000000e+00> : vector<16x128xf32>
    %148 = tpu.matmul %145, %147, %cst_59 {dimension_numbers = #tpu.dot_dimension_numbers<[1], [0], [0], [1], [0, 0, 1, 1], [], []>} : vector<16x128xbf16>, vector<128x128xbf16>, vector<16x128xf32> -> vector<16x128xf32>
    %149 = arith.addf %141, %148 : vector<16x128xf32>
    %c0_60 = arith.constant 0 : index
    %c0_61 = arith.constant 0 : index
    %150 = vector.load %arg7[%c0_60, %c0_61] : memref<4x128xf32, #tpu.memory_space<vmem>>, vector<1x128xf32>
    %151 = vector.broadcast %150 : vector<1x128xf32> to vector<16x128xf32>
    %152 = arith.addf %149, %151 : vector<16x128xf32>
    %cst_62 = arith.constant 0.000000e+00 : f32
    %153 = vector.broadcast %cst_62 : f32 to vector<16x128xf32>
    %154 = arith.maximumf %152, %153 : vector<16x128xf32>
    %155 = arith.addf %154, %4 : vector<16x128xf32>
    %c1_63 = arith.constant 1 : index
    %c0_64 = arith.constant 0 : index
    %156 = vector.load %arg4[%c1_63, %c0_64] : memref<4x128xf32, #tpu.memory_space<vmem>>, vector<1x128xf32>
    %c1_65 = arith.constant 1 : index
    %c0_66 = arith.constant 0 : index
    %157 = vector.load %arg5[%c1_65, %c0_66] : memref<4x128xf32, #tpu.memory_space<vmem>>, vector<1x128xf32>
    %cst_67 = arith.constant dense<0.000000e+00> : vector<16xf32>
    %158 = vector.multi_reduction <add>, %155, %cst_67 [1] : vector<16x128xf32> to vector<16xf32>
    %159 = vector.shape_cast %158 : vector<16xf32> to vector<16x1xf32>
    %cst_68 = arith.constant 1.280000e+02 : f32
    %160 = vector.broadcast %cst_68 : f32 to vector<16x1xf32>
    %161 = arith.divf %159, %160 : vector<16x1xf32>
    %162 = vector.broadcast %161 : vector<16x1xf32> to vector<16x128xf32>
    %163 = arith.subf %155, %162 : vector<16x128xf32>
    %164 = arith.mulf %163, %163 : vector<16x128xf32>
    %cst_69 = arith.constant dense<0.000000e+00> : vector<16xf32>
    %165 = vector.multi_reduction <add>, %164, %cst_69 [1] : vector<16x128xf32> to vector<16xf32>
    %166 = vector.shape_cast %165 : vector<16xf32> to vector<16x1xf32>
    %cst_70 = arith.constant 1.280000e+02 : f32
    %167 = vector.broadcast %cst_70 : f32 to vector<16x1xf32>
    %168 = arith.divf %166, %167 : vector<16x1xf32>
    %cst_71 = arith.constant 9.99999974E-6 : f32
    %169 = vector.broadcast %cst_71 : f32 to vector<16x1xf32>
    %170 = arith.addf %168, %169 : vector<16x1xf32>
    %171 = math.rsqrt %170 : vector<16x1xf32>
    %172 = vector.broadcast %171 : vector<16x1xf32> to vector<16x128xf32>
    %173 = arith.mulf %163, %172 : vector<16x128xf32>
    %174 = vector.broadcast %156 : vector<1x128xf32> to vector<16x128xf32>
    %175 = arith.mulf %173, %174 : vector<16x128xf32>
    %176 = vector.broadcast %157 : vector<1x128xf32> to vector<16x128xf32>
    %177 = arith.addf %175, %176 : vector<16x128xf32>
    %c3_i32_72 = arith.constant 3 : i32
    %178 = tpu.dynamic_rotate %177 by %c3_i32_72 dim 0 : vector<16x128xf32>, i32 -> vector<16x128xf32>
    %179 = vector.broadcast %30 : vector<16x1xf32> to vector<16x128xf32>
    %180 = arith.mulf %178, %179 : vector<16x128xf32>
    %181 = arith.truncf %180 : vector<16x128xf32> to vector<16x128xbf16>
    %c1_73 = arith.constant 1 : index
    %c0_74 = arith.constant 0 : index
    %c0_75 = arith.constant 0 : index
    %c0_76 = arith.constant 0 : index
    %182 = vector.load %arg6[%c1_73, %c0_74, %c0_75, %c0_76] : memref<4x7x128x128xbf16, #tpu.memory_space<vmem>>, vector<1x1x128x128xbf16>
    %183 = vector.shape_cast %182 : vector<1x1x128x128xbf16> to vector<128x128xbf16>
    %cst_77 = arith.constant dense<0.000000e+00> : vector<16x128xf32>
    %184 = tpu.matmul %181, %183, %cst_77 {dimension_numbers = #tpu.dot_dimension_numbers<[1], [0], [0], [1], [0, 0, 1, 1], [], []>} : vector<16x128xbf16>, vector<128x128xbf16>, vector<16x128xf32> -> vector<16x128xf32>
    %c2_i32_78 = arith.constant 2 : i32
    %185 = tpu.dynamic_rotate %177 by %c2_i32_78 dim 0 : vector<16x128xf32>, i32 -> vector<16x128xf32>
    %186 = vector.broadcast %39 : vector<16x1xf32> to vector<16x128xf32>
    %187 = arith.mulf %185, %186 : vector<16x128xf32>
    %188 = arith.truncf %187 : vector<16x128xf32> to vector<16x128xbf16>
    %c1_79 = arith.constant 1 : index
    %c1_80 = arith.constant 1 : index
    %c0_81 = arith.constant 0 : index
    %c0_82 = arith.constant 0 : index
    %189 = vector.load %arg6[%c1_79, %c1_80, %c0_81, %c0_82] : memref<4x7x128x128xbf16, #tpu.memory_space<vmem>>, vector<1x1x128x128xbf16>
    %190 = vector.shape_cast %189 : vector<1x1x128x128xbf16> to vector<128x128xbf16>
    %cst_83 = arith.constant dense<0.000000e+00> : vector<16x128xf32>
    %191 = tpu.matmul %188, %190, %cst_83 {dimension_numbers = #tpu.dot_dimension_numbers<[1], [0], [0], [1], [0, 0, 1, 1], [], []>} : vector<16x128xbf16>, vector<128x128xbf16>, vector<16x128xf32> -> vector<16x128xf32>
    %192 = arith.addf %184, %191 : vector<16x128xf32>
    %c1_i32_84 = arith.constant 1 : i32
    %193 = tpu.dynamic_rotate %177 by %c1_i32_84 dim 0 : vector<16x128xf32>, i32 -> vector<16x128xf32>
    %194 = vector.broadcast %48 : vector<16x1xf32> to vector<16x128xf32>
    %195 = arith.mulf %193, %194 : vector<16x128xf32>
    %196 = arith.truncf %195 : vector<16x128xf32> to vector<16x128xbf16>
    %c1_85 = arith.constant 1 : index
    %c2_86 = arith.constant 2 : index
    %c0_87 = arith.constant 0 : index
    %c0_88 = arith.constant 0 : index
    %197 = vector.load %arg6[%c1_85, %c2_86, %c0_87, %c0_88] : memref<4x7x128x128xbf16, #tpu.memory_space<vmem>>, vector<1x1x128x128xbf16>
    %198 = vector.shape_cast %197 : vector<1x1x128x128xbf16> to vector<128x128xbf16>
    %cst_89 = arith.constant dense<0.000000e+00> : vector<16x128xf32>
    %199 = tpu.matmul %196, %198, %cst_89 {dimension_numbers = #tpu.dot_dimension_numbers<[1], [0], [0], [1], [0, 0, 1, 1], [], []>} : vector<16x128xbf16>, vector<128x128xbf16>, vector<16x128xf32> -> vector<16x128xf32>
    %200 = arith.addf %192, %199 : vector<16x128xf32>
    %201 = arith.truncf %177 : vector<16x128xf32> to vector<16x128xbf16>
    %c1_90 = arith.constant 1 : index
    %c3_91 = arith.constant 3 : index
    %c0_92 = arith.constant 0 : index
    %c0_93 = arith.constant 0 : index
    %202 = vector.load %arg6[%c1_90, %c3_91, %c0_92, %c0_93] : memref<4x7x128x128xbf16, #tpu.memory_space<vmem>>, vector<1x1x128x128xbf16>
    %203 = vector.shape_cast %202 : vector<1x1x128x128xbf16> to vector<128x128xbf16>
    %cst_94 = arith.constant dense<0.000000e+00> : vector<16x128xf32>
    %204 = tpu.matmul %201, %203, %cst_94 {dimension_numbers = #tpu.dot_dimension_numbers<[1], [0], [0], [1], [0, 0, 1, 1], [], []>} : vector<16x128xbf16>, vector<128x128xbf16>, vector<16x128xf32> -> vector<16x128xf32>
    %205 = arith.addf %200, %204 : vector<16x128xf32>
    %c15_i32_95 = arith.constant 15 : i32
    %206 = tpu.dynamic_rotate %177 by %c15_i32_95 dim 0 : vector<16x128xf32>, i32 -> vector<16x128xf32>
    %207 = vector.broadcast %57 : vector<16x1xf32> to vector<16x128xf32>
    %208 = arith.mulf %206, %207 : vector<16x128xf32>
    %209 = arith.truncf %208 : vector<16x128xf32> to vector<16x128xbf16>
    %c1_96 = arith.constant 1 : index
    %c4_97 = arith.constant 4 : index
    %c0_98 = arith.constant 0 : index
    %c0_99 = arith.constant 0 : index
    %210 = vector.load %arg6[%c1_96, %c4_97, %c0_98, %c0_99] : memref<4x7x128x128xbf16, #tpu.memory_space<vmem>>, vector<1x1x128x128xbf16>
    %211 = vector.shape_cast %210 : vector<1x1x128x128xbf16> to vector<128x128xbf16>
    %cst_100 = arith.constant dense<0.000000e+00> : vector<16x128xf32>
    %212 = tpu.matmul %209, %211, %cst_100 {dimension_numbers = #tpu.dot_dimension_numbers<[1], [0], [0], [1], [0, 0, 1, 1], [], []>} : vector<16x128xbf16>, vector<128x128xbf16>, vector<16x128xf32> -> vector<16x128xf32>
    %213 = arith.addf %205, %212 : vector<16x128xf32>
    %c14_i32_101 = arith.constant 14 : i32
    %214 = tpu.dynamic_rotate %177 by %c14_i32_101 dim 0 : vector<16x128xf32>, i32 -> vector<16x128xf32>
    %215 = vector.broadcast %66 : vector<16x1xf32> to vector<16x128xf32>
    %216 = arith.mulf %214, %215 : vector<16x128xf32>
    %217 = arith.truncf %216 : vector<16x128xf32> to vector<16x128xbf16>
    %c1_102 = arith.constant 1 : index
    %c5_103 = arith.constant 5 : index
    %c0_104 = arith.constant 0 : index
    %c0_105 = arith.constant 0 : index
    %218 = vector.load %arg6[%c1_102, %c5_103, %c0_104, %c0_105] : memref<4x7x128x128xbf16, #tpu.memory_space<vmem>>, vector<1x1x128x128xbf16>
    %219 = vector.shape_cast %218 : vector<1x1x128x128xbf16> to vector<128x128xbf16>
    %cst_106 = arith.constant dense<0.000000e+00> : vector<16x128xf32>
    %220 = tpu.matmul %217, %219, %cst_106 {dimension_numbers = #tpu.dot_dimension_numbers<[1], [0], [0], [1], [0, 0, 1, 1], [], []>} : vector<16x128xbf16>, vector<128x128xbf16>, vector<16x128xf32> -> vector<16x128xf32>
    %221 = arith.addf %213, %220 : vector<16x128xf32>
    %c13_i32_107 = arith.constant 13 : i32
    %222 = tpu.dynamic_rotate %177 by %c13_i32_107 dim 0 : vector<16x128xf32>, i32 -> vector<16x128xf32>
    %223 = vector.broadcast %75 : vector<16x1xf32> to vector<16x128xf32>
    %224 = arith.mulf %222, %223 : vector<16x128xf32>
    %225 = arith.truncf %224 : vector<16x128xf32> to vector<16x128xbf16>
    %c1_108 = arith.constant 1 : index
    %c6_109 = arith.constant 6 : index
    %c0_110 = arith.constant 0 : index
    %c0_111 = arith.constant 0 : index
    %226 = vector.load %arg6[%c1_108, %c6_109, %c0_110, %c0_111] : memref<4x7x128x128xbf16, #tpu.memory_space<vmem>>, vector<1x1x128x128xbf16>
    %227 = vector.shape_cast %226 : vector<1x1x128x128xbf16> to vector<128x128xbf16>
    %cst_112 = arith.constant dense<0.000000e+00> : vector<16x128xf32>
    %228 = tpu.matmul %225, %227, %cst_112 {dimension_numbers = #tpu.dot_dimension_numbers<[1], [0], [0], [1], [0, 0, 1, 1], [], []>} : vector<16x128xbf16>, vector<128x128xbf16>, vector<16x128xf32> -> vector<16x128xf32>
    %229 = arith.addf %221, %228 : vector<16x128xf32>
    %c1_113 = arith.constant 1 : index
    %c0_114 = arith.constant 0 : index
    %230 = vector.load %arg7[%c1_113, %c0_114] : memref<4x128xf32, #tpu.memory_space<vmem>>, vector<1x128xf32>
    %231 = vector.broadcast %230 : vector<1x128xf32> to vector<16x128xf32>
    %232 = arith.addf %229, %231 : vector<16x128xf32>
    %cst_115 = arith.constant 0.000000e+00 : f32
    %233 = vector.broadcast %cst_115 : f32 to vector<16x128xf32>
    %234 = arith.maximumf %232, %233 : vector<16x128xf32>
    %235 = arith.addf %234, %155 : vector<16x128xf32>
    %c2_116 = arith.constant 2 : index
    %c0_117 = arith.constant 0 : index
    %236 = vector.load %arg4[%c2_116, %c0_117] : memref<4x128xf32, #tpu.memory_space<vmem>>, vector<1x128xf32>
    %c2_118 = arith.constant 2 : index
    %c0_119 = arith.constant 0 : index
    %237 = vector.load %arg5[%c2_118, %c0_119] : memref<4x128xf32, #tpu.memory_space<vmem>>, vector<1x128xf32>
    %cst_120 = arith.constant dense<0.000000e+00> : vector<16xf32>
    %238 = vector.multi_reduction <add>, %235, %cst_120 [1] : vector<16x128xf32> to vector<16xf32>
    %239 = vector.shape_cast %238 : vector<16xf32> to vector<16x1xf32>
    %cst_121 = arith.constant 1.280000e+02 : f32
    %240 = vector.broadcast %cst_121 : f32 to vector<16x1xf32>
    %241 = arith.divf %239, %240 : vector<16x1xf32>
    %242 = vector.broadcast %241 : vector<16x1xf32> to vector<16x128xf32>
    %243 = arith.subf %235, %242 : vector<16x128xf32>
    %244 = arith.mulf %243, %243 : vector<16x128xf32>
    %cst_122 = arith.constant dense<0.000000e+00> : vector<16xf32>
    %245 = vector.multi_reduction <add>, %244, %cst_122 [1] : vector<16x128xf32> to vector<16xf32>
    %246 = vector.shape_cast %245 : vector<16xf32> to vector<16x1xf32>
    %cst_123 = arith.constant 1.280000e+02 : f32
    %247 = vector.broadcast %cst_123 : f32 to vector<16x1xf32>
    %248 = arith.divf %246, %247 : vector<16x1xf32>
    %cst_124 = arith.constant 9.99999974E-6 : f32
    %249 = vector.broadcast %cst_124 : f32 to vector<16x1xf32>
    %250 = arith.addf %248, %249 : vector<16x1xf32>
    %251 = math.rsqrt %250 : vector<16x1xf32>
    %252 = vector.broadcast %251 : vector<16x1xf32> to vector<16x128xf32>
    %253 = arith.mulf %243, %252 : vector<16x128xf32>
    %254 = vector.broadcast %236 : vector<1x128xf32> to vector<16x128xf32>
    %255 = arith.mulf %253, %254 : vector<16x128xf32>
    %256 = vector.broadcast %237 : vector<1x128xf32> to vector<16x128xf32>
    %257 = arith.addf %255, %256 : vector<16x128xf32>
    %c3_i32_125 = arith.constant 3 : i32
    %258 = tpu.dynamic_rotate %257 by %c3_i32_125 dim 0 : vector<16x128xf32>, i32 -> vector<16x128xf32>
    %259 = vector.broadcast %30 : vector<16x1xf32> to vector<16x128xf32>
    %260 = arith.mulf %258, %259 : vector<16x128xf32>
    %261 = arith.truncf %260 : vector<16x128xf32> to vector<16x128xbf16>
    %c2_126 = arith.constant 2 : index
    %c0_127 = arith.constant 0 : index
    %c0_128 = arith.constant 0 : index
    %c0_129 = arith.constant 0 : index
    %262 = vector.load %arg6[%c2_126, %c0_127, %c0_128, %c0_129] : memref<4x7x128x128xbf16, #tpu.memory_space<vmem>>, vector<1x1x128x128xbf16>
    %263 = vector.shape_cast %262 : vector<1x1x128x128xbf16> to vector<128x128xbf16>
    %cst_130 = arith.constant dense<0.000000e+00> : vector<16x128xf32>
    %264 = tpu.matmul %261, %263, %cst_130 {dimension_numbers = #tpu.dot_dimension_numbers<[1], [0], [0], [1], [0, 0, 1, 1], [], []>} : vector<16x128xbf16>, vector<128x128xbf16>, vector<16x128xf32> -> vector<16x128xf32>
    %c2_i32_131 = arith.constant 2 : i32
    %265 = tpu.dynamic_rotate %257 by %c2_i32_131 dim 0 : vector<16x128xf32>, i32 -> vector<16x128xf32>
    %266 = vector.broadcast %39 : vector<16x1xf32> to vector<16x128xf32>
    %267 = arith.mulf %265, %266 : vector<16x128xf32>
    %268 = arith.truncf %267 : vector<16x128xf32> to vector<16x128xbf16>
    %c2_132 = arith.constant 2 : index
    %c1_133 = arith.constant 1 : index
    %c0_134 = arith.constant 0 : index
    %c0_135 = arith.constant 0 : index
    %269 = vector.load %arg6[%c2_132, %c1_133, %c0_134, %c0_135] : memref<4x7x128x128xbf16, #tpu.memory_space<vmem>>, vector<1x1x128x128xbf16>
    %270 = vector.shape_cast %269 : vector<1x1x128x128xbf16> to vector<128x128xbf16>
    %cst_136 = arith.constant dense<0.000000e+00> : vector<16x128xf32>
    %271 = tpu.matmul %268, %270, %cst_136 {dimension_numbers = #tpu.dot_dimension_numbers<[1], [0], [0], [1], [0, 0, 1, 1], [], []>} : vector<16x128xbf16>, vector<128x128xbf16>, vector<16x128xf32> -> vector<16x128xf32>
    %272 = arith.addf %264, %271 : vector<16x128xf32>
    %c1_i32_137 = arith.constant 1 : i32
    %273 = tpu.dynamic_rotate %257 by %c1_i32_137 dim 0 : vector<16x128xf32>, i32 -> vector<16x128xf32>
    %274 = vector.broadcast %48 : vector<16x1xf32> to vector<16x128xf32>
    %275 = arith.mulf %273, %274 : vector<16x128xf32>
    %276 = arith.truncf %275 : vector<16x128xf32> to vector<16x128xbf16>
    %c2_138 = arith.constant 2 : index
    %c2_139 = arith.constant 2 : index
    %c0_140 = arith.constant 0 : index
    %c0_141 = arith.constant 0 : index
    %277 = vector.load %arg6[%c2_138, %c2_139, %c0_140, %c0_141] : memref<4x7x128x128xbf16, #tpu.memory_space<vmem>>, vector<1x1x128x128xbf16>
    %278 = vector.shape_cast %277 : vector<1x1x128x128xbf16> to vector<128x128xbf16>
    %cst_142 = arith.constant dense<0.000000e+00> : vector<16x128xf32>
    %279 = tpu.matmul %276, %278, %cst_142 {dimension_numbers = #tpu.dot_dimension_numbers<[1], [0], [0], [1], [0, 0, 1, 1], [], []>} : vector<16x128xbf16>, vector<128x128xbf16>, vector<16x128xf32> -> vector<16x128xf32>
    %280 = arith.addf %272, %279 : vector<16x128xf32>
    %281 = arith.truncf %257 : vector<16x128xf32> to vector<16x128xbf16>
    %c2_143 = arith.constant 2 : index
    %c3_144 = arith.constant 3 : index
    %c0_145 = arith.constant 0 : index
    %c0_146 = arith.constant 0 : index
    %282 = vector.load %arg6[%c2_143, %c3_144, %c0_145, %c0_146] : memref<4x7x128x128xbf16, #tpu.memory_space<vmem>>, vector<1x1x128x128xbf16>
    %283 = vector.shape_cast %282 : vector<1x1x128x128xbf16> to vector<128x128xbf16>
    %cst_147 = arith.constant dense<0.000000e+00> : vector<16x128xf32>
    %284 = tpu.matmul %281, %283, %cst_147 {dimension_numbers = #tpu.dot_dimension_numbers<[1], [0], [0], [1], [0, 0, 1, 1], [], []>} : vector<16x128xbf16>, vector<128x128xbf16>, vector<16x128xf32> -> vector<16x128xf32>
    %285 = arith.addf %280, %284 : vector<16x128xf32>
    %c15_i32_148 = arith.constant 15 : i32
    %286 = tpu.dynamic_rotate %257 by %c15_i32_148 dim 0 : vector<16x128xf32>, i32 -> vector<16x128xf32>
    %287 = vector.broadcast %57 : vector<16x1xf32> to vector<16x128xf32>
    %288 = arith.mulf %286, %287 : vector<16x128xf32>
    %289 = arith.truncf %288 : vector<16x128xf32> to vector<16x128xbf16>
    %c2_149 = arith.constant 2 : index
    %c4_150 = arith.constant 4 : index
    %c0_151 = arith.constant 0 : index
    %c0_152 = arith.constant 0 : index
    %290 = vector.load %arg6[%c2_149, %c4_150, %c0_151, %c0_152] : memref<4x7x128x128xbf16, #tpu.memory_space<vmem>>, vector<1x1x128x128xbf16>
    %291 = vector.shape_cast %290 : vector<1x1x128x128xbf16> to vector<128x128xbf16>
    %cst_153 = arith.constant dense<0.000000e+00> : vector<16x128xf32>
    %292 = tpu.matmul %289, %291, %cst_153 {dimension_numbers = #tpu.dot_dimension_numbers<[1], [0], [0], [1], [0, 0, 1, 1], [], []>} : vector<16x128xbf16>, vector<128x128xbf16>, vector<16x128xf32> -> vector<16x128xf32>
    %293 = arith.addf %285, %292 : vector<16x128xf32>
    %c14_i32_154 = arith.constant 14 : i32
    %294 = tpu.dynamic_rotate %257 by %c14_i32_154 dim 0 : vector<16x128xf32>, i32 -> vector<16x128xf32>
    %295 = vector.broadcast %66 : vector<16x1xf32> to vector<16x128xf32>
    %296 = arith.mulf %294, %295 : vector<16x128xf32>
    %297 = arith.truncf %296 : vector<16x128xf32> to vector<16x128xbf16>
    %c2_155 = arith.constant 2 : index
    %c5_156 = arith.constant 5 : index
    %c0_157 = arith.constant 0 : index
    %c0_158 = arith.constant 0 : index
    %298 = vector.load %arg6[%c2_155, %c5_156, %c0_157, %c0_158] : memref<4x7x128x128xbf16, #tpu.memory_space<vmem>>, vector<1x1x128x128xbf16>
    %299 = vector.shape_cast %298 : vector<1x1x128x128xbf16> to vector<128x128xbf16>
    %cst_159 = arith.constant dense<0.000000e+00> : vector<16x128xf32>
    %300 = tpu.matmul %297, %299, %cst_159 {dimension_numbers = #tpu.dot_dimension_numbers<[1], [0], [0], [1], [0, 0, 1, 1], [], []>} : vector<16x128xbf16>, vector<128x128xbf16>, vector<16x128xf32> -> vector<16x128xf32>
    %301 = arith.addf %293, %300 : vector<16x128xf32>
    %c13_i32_160 = arith.constant 13 : i32
    %302 = tpu.dynamic_rotate %257 by %c13_i32_160 dim 0 : vector<16x128xf32>, i32 -> vector<16x128xf32>
    %303 = vector.broadcast %75 : vector<16x1xf32> to vector<16x128xf32>
    %304 = arith.mulf %302, %303 : vector<16x128xf32>
    %305 = arith.truncf %304 : vector<16x128xf32> to vector<16x128xbf16>
    %c2_161 = arith.constant 2 : index
    %c6_162 = arith.constant 6 : index
    %c0_163 = arith.constant 0 : index
    %c0_164 = arith.constant 0 : index
    %306 = vector.load %arg6[%c2_161, %c6_162, %c0_163, %c0_164] : memref<4x7x128x128xbf16, #tpu.memory_space<vmem>>, vector<1x1x128x128xbf16>
    %307 = vector.shape_cast %306 : vector<1x1x128x128xbf16> to vector<128x128xbf16>
    %cst_165 = arith.constant dense<0.000000e+00> : vector<16x128xf32>
    %308 = tpu.matmul %305, %307, %cst_165 {dimension_numbers = #tpu.dot_dimension_numbers<[1], [0], [0], [1], [0, 0, 1, 1], [], []>} : vector<16x128xbf16>, vector<128x128xbf16>, vector<16x128xf32> -> vector<16x128xf32>
    %309 = arith.addf %301, %308 : vector<16x128xf32>
    %c2_166 = arith.constant 2 : index
    %c0_167 = arith.constant 0 : index
    %310 = vector.load %arg7[%c2_166, %c0_167] : memref<4x128xf32, #tpu.memory_space<vmem>>, vector<1x128xf32>
    %311 = vector.broadcast %310 : vector<1x128xf32> to vector<16x128xf32>
    %312 = arith.addf %309, %311 : vector<16x128xf32>
    %cst_168 = arith.constant 0.000000e+00 : f32
    %313 = vector.broadcast %cst_168 : f32 to vector<16x128xf32>
    %314 = arith.maximumf %312, %313 : vector<16x128xf32>
    %315 = arith.addf %314, %235 : vector<16x128xf32>
    %c3_169 = arith.constant 3 : index
    %c0_170 = arith.constant 0 : index
    %316 = vector.load %arg4[%c3_169, %c0_170] : memref<4x128xf32, #tpu.memory_space<vmem>>, vector<1x128xf32>
    %c3_171 = arith.constant 3 : index
    %c0_172 = arith.constant 0 : index
    %317 = vector.load %arg5[%c3_171, %c0_172] : memref<4x128xf32, #tpu.memory_space<vmem>>, vector<1x128xf32>
    %cst_173 = arith.constant dense<0.000000e+00> : vector<16xf32>
    %318 = vector.multi_reduction <add>, %315, %cst_173 [1] : vector<16x128xf32> to vector<16xf32>
    %319 = vector.shape_cast %318 : vector<16xf32> to vector<16x1xf32>
    %cst_174 = arith.constant 1.280000e+02 : f32
    %320 = vector.broadcast %cst_174 : f32 to vector<16x1xf32>
    %321 = arith.divf %319, %320 : vector<16x1xf32>
    %322 = vector.broadcast %321 : vector<16x1xf32> to vector<16x128xf32>
    %323 = arith.subf %315, %322 : vector<16x128xf32>
    %324 = arith.mulf %323, %323 : vector<16x128xf32>
    %cst_175 = arith.constant dense<0.000000e+00> : vector<16xf32>
    %325 = vector.multi_reduction <add>, %324, %cst_175 [1] : vector<16x128xf32> to vector<16xf32>
    %326 = vector.shape_cast %325 : vector<16xf32> to vector<16x1xf32>
    %cst_176 = arith.constant 1.280000e+02 : f32
    %327 = vector.broadcast %cst_176 : f32 to vector<16x1xf32>
    %328 = arith.divf %326, %327 : vector<16x1xf32>
    %cst_177 = arith.constant 9.99999974E-6 : f32
    %329 = vector.broadcast %cst_177 : f32 to vector<16x1xf32>
    %330 = arith.addf %328, %329 : vector<16x1xf32>
    %331 = math.rsqrt %330 : vector<16x1xf32>
    %332 = vector.broadcast %331 : vector<16x1xf32> to vector<16x128xf32>
    %333 = arith.mulf %323, %332 : vector<16x128xf32>
    %334 = vector.broadcast %316 : vector<1x128xf32> to vector<16x128xf32>
    %335 = arith.mulf %333, %334 : vector<16x128xf32>
    %336 = vector.broadcast %317 : vector<1x128xf32> to vector<16x128xf32>
    %337 = arith.addf %335, %336 : vector<16x128xf32>
    %c3_i32_178 = arith.constant 3 : i32
    %338 = tpu.dynamic_rotate %337 by %c3_i32_178 dim 0 : vector<16x128xf32>, i32 -> vector<16x128xf32>
    %339 = vector.broadcast %30 : vector<16x1xf32> to vector<16x128xf32>
    %340 = arith.mulf %338, %339 : vector<16x128xf32>
    %341 = arith.truncf %340 : vector<16x128xf32> to vector<16x128xbf16>
    %c3_179 = arith.constant 3 : index
    %c0_180 = arith.constant 0 : index
    %c0_181 = arith.constant 0 : index
    %c0_182 = arith.constant 0 : index
    %342 = vector.load %arg6[%c3_179, %c0_180, %c0_181, %c0_182] : memref<4x7x128x128xbf16, #tpu.memory_space<vmem>>, vector<1x1x128x128xbf16>
    %343 = vector.shape_cast %342 : vector<1x1x128x128xbf16> to vector<128x128xbf16>
    %cst_183 = arith.constant dense<0.000000e+00> : vector<16x128xf32>
    %344 = tpu.matmul %341, %343, %cst_183 {dimension_numbers = #tpu.dot_dimension_numbers<[1], [0], [0], [1], [0, 0, 1, 1], [], []>} : vector<16x128xbf16>, vector<128x128xbf16>, vector<16x128xf32> -> vector<16x128xf32>
    %c2_i32_184 = arith.constant 2 : i32
    %345 = tpu.dynamic_rotate %337 by %c2_i32_184 dim 0 : vector<16x128xf32>, i32 -> vector<16x128xf32>
    %346 = vector.broadcast %39 : vector<16x1xf32> to vector<16x128xf32>
    %347 = arith.mulf %345, %346 : vector<16x128xf32>
    %348 = arith.truncf %347 : vector<16x128xf32> to vector<16x128xbf16>
    %c3_185 = arith.constant 3 : index
    %c1_186 = arith.constant 1 : index
    %c0_187 = arith.constant 0 : index
    %c0_188 = arith.constant 0 : index
    %349 = vector.load %arg6[%c3_185, %c1_186, %c0_187, %c0_188] : memref<4x7x128x128xbf16, #tpu.memory_space<vmem>>, vector<1x1x128x128xbf16>
    %350 = vector.shape_cast %349 : vector<1x1x128x128xbf16> to vector<128x128xbf16>
    %cst_189 = arith.constant dense<0.000000e+00> : vector<16x128xf32>
    %351 = tpu.matmul %348, %350, %cst_189 {dimension_numbers = #tpu.dot_dimension_numbers<[1], [0], [0], [1], [0, 0, 1, 1], [], []>} : vector<16x128xbf16>, vector<128x128xbf16>, vector<16x128xf32> -> vector<16x128xf32>
    %352 = arith.addf %344, %351 : vector<16x128xf32>
    %c1_i32_190 = arith.constant 1 : i32
    %353 = tpu.dynamic_rotate %337 by %c1_i32_190 dim 0 : vector<16x128xf32>, i32 -> vector<16x128xf32>
    %354 = vector.broadcast %48 : vector<16x1xf32> to vector<16x128xf32>
    %355 = arith.mulf %353, %354 : vector<16x128xf32>
    %356 = arith.truncf %355 : vector<16x128xf32> to vector<16x128xbf16>
    %c3_191 = arith.constant 3 : index
    %c2_192 = arith.constant 2 : index
    %c0_193 = arith.constant 0 : index
    %c0_194 = arith.constant 0 : index
    %357 = vector.load %arg6[%c3_191, %c2_192, %c0_193, %c0_194] : memref<4x7x128x128xbf16, #tpu.memory_space<vmem>>, vector<1x1x128x128xbf16>
    %358 = vector.shape_cast %357 : vector<1x1x128x128xbf16> to vector<128x128xbf16>
    %cst_195 = arith.constant dense<0.000000e+00> : vector<16x128xf32>
    %359 = tpu.matmul %356, %358, %cst_195 {dimension_numbers = #tpu.dot_dimension_numbers<[1], [0], [0], [1], [0, 0, 1, 1], [], []>} : vector<16x128xbf16>, vector<128x128xbf16>, vector<16x128xf32> -> vector<16x128xf32>
    %360 = arith.addf %352, %359 : vector<16x128xf32>
    %361 = arith.truncf %337 : vector<16x128xf32> to vector<16x128xbf16>
    %c3_196 = arith.constant 3 : index
    %c3_197 = arith.constant 3 : index
    %c0_198 = arith.constant 0 : index
    %c0_199 = arith.constant 0 : index
    %362 = vector.load %arg6[%c3_196, %c3_197, %c0_198, %c0_199] : memref<4x7x128x128xbf16, #tpu.memory_space<vmem>>, vector<1x1x128x128xbf16>
    %363 = vector.shape_cast %362 : vector<1x1x128x128xbf16> to vector<128x128xbf16>
    %cst_200 = arith.constant dense<0.000000e+00> : vector<16x128xf32>
    %364 = tpu.matmul %361, %363, %cst_200 {dimension_numbers = #tpu.dot_dimension_numbers<[1], [0], [0], [1], [0, 0, 1, 1], [], []>} : vector<16x128xbf16>, vector<128x128xbf16>, vector<16x128xf32> -> vector<16x128xf32>
    %365 = arith.addf %360, %364 : vector<16x128xf32>
    %c15_i32_201 = arith.constant 15 : i32
    %366 = tpu.dynamic_rotate %337 by %c15_i32_201 dim 0 : vector<16x128xf32>, i32 -> vector<16x128xf32>
    %367 = vector.broadcast %57 : vector<16x1xf32> to vector<16x128xf32>
    %368 = arith.mulf %366, %367 : vector<16x128xf32>
    %369 = arith.truncf %368 : vector<16x128xf32> to vector<16x128xbf16>
    %c3_202 = arith.constant 3 : index
    %c4_203 = arith.constant 4 : index
    %c0_204 = arith.constant 0 : index
    %c0_205 = arith.constant 0 : index
    %370 = vector.load %arg6[%c3_202, %c4_203, %c0_204, %c0_205] : memref<4x7x128x128xbf16, #tpu.memory_space<vmem>>, vector<1x1x128x128xbf16>
    %371 = vector.shape_cast %370 : vector<1x1x128x128xbf16> to vector<128x128xbf16>
    %cst_206 = arith.constant dense<0.000000e+00> : vector<16x128xf32>
    %372 = tpu.matmul %369, %371, %cst_206 {dimension_numbers = #tpu.dot_dimension_numbers<[1], [0], [0], [1], [0, 0, 1, 1], [], []>} : vector<16x128xbf16>, vector<128x128xbf16>, vector<16x128xf32> -> vector<16x128xf32>
    %373 = arith.addf %365, %372 : vector<16x128xf32>
    %c14_i32_207 = arith.constant 14 : i32
    %374 = tpu.dynamic_rotate %337 by %c14_i32_207 dim 0 : vector<16x128xf32>, i32 -> vector<16x128xf32>
    %375 = vector.broadcast %66 : vector<16x1xf32> to vector<16x128xf32>
    %376 = arith.mulf %374, %375 : vector<16x128xf32>
    %377 = arith.truncf %376 : vector<16x128xf32> to vector<16x128xbf16>
    %c3_208 = arith.constant 3 : index
    %c5_209 = arith.constant 5 : index
    %c0_210 = arith.constant 0 : index
    %c0_211 = arith.constant 0 : index
    %378 = vector.load %arg6[%c3_208, %c5_209, %c0_210, %c0_211] : memref<4x7x128x128xbf16, #tpu.memory_space<vmem>>, vector<1x1x128x128xbf16>
    %379 = vector.shape_cast %378 : vector<1x1x128x128xbf16> to vector<128x128xbf16>
    %cst_212 = arith.constant dense<0.000000e+00> : vector<16x128xf32>
    %380 = tpu.matmul %377, %379, %cst_212 {dimension_numbers = #tpu.dot_dimension_numbers<[1], [0], [0], [1], [0, 0, 1, 1], [], []>} : vector<16x128xbf16>, vector<128x128xbf16>, vector<16x128xf32> -> vector<16x128xf32>
    %381 = arith.addf %373, %380 : vector<16x128xf32>
    %c13_i32_213 = arith.constant 13 : i32
    %382 = tpu.dynamic_rotate %337 by %c13_i32_213 dim 0 : vector<16x128xf32>, i32 -> vector<16x128xf32>
    %383 = vector.broadcast %75 : vector<16x1xf32> to vector<16x128xf32>
    %384 = arith.mulf %382, %383 : vector<16x128xf32>
    %385 = arith.truncf %384 : vector<16x128xf32> to vector<16x128xbf16>
    %c3_214 = arith.constant 3 : index
    %c6_215 = arith.constant 6 : index
    %c0_216 = arith.constant 0 : index
    %c0_217 = arith.constant 0 : index
    %386 = vector.load %arg6[%c3_214, %c6_215, %c0_216, %c0_217] : memref<4x7x128x128xbf16, #tpu.memory_space<vmem>>, vector<1x1x128x128xbf16>
    %387 = vector.shape_cast %386 : vector<1x1x128x128xbf16> to vector<128x128xbf16>
    %cst_218 = arith.constant dense<0.000000e+00> : vector<16x128xf32>
    %388 = tpu.matmul %385, %387, %cst_218 {dimension_numbers = #tpu.dot_dimension_numbers<[1], [0], [0], [1], [0, 0, 1, 1], [], []>} : vector<16x128xbf16>, vector<128x128xbf16>, vector<16x128xf32> -> vector<16x128xf32>
    %389 = arith.addf %381, %388 : vector<16x128xf32>
    %c3_219 = arith.constant 3 : index
    %c0_220 = arith.constant 0 : index
    %390 = vector.load %arg7[%c3_219, %c0_220] : memref<4x128xf32, #tpu.memory_space<vmem>>, vector<1x128xf32>
    %391 = vector.broadcast %390 : vector<1x128xf32> to vector<16x128xf32>
    %392 = arith.addf %389, %391 : vector<16x128xf32>
    %cst_221 = arith.constant 0.000000e+00 : f32
    %393 = vector.broadcast %cst_221 : f32 to vector<16x128xf32>
    %394 = arith.maximumf %392, %393 : vector<16x128xf32>
    %395 = arith.addf %394, %315 : vector<16x128xf32>
    %c0_222 = arith.constant 0 : index
    %c0_223 = arith.constant 0 : index
    %396 = vector.load %arg8[%c0_222, %c0_223] : memref<1x128xf32, #tpu.memory_space<vmem>>, vector<1x128xf32>
    %c0_224 = arith.constant 0 : index
    %c0_225 = arith.constant 0 : index
    %397 = vector.load %arg9[%c0_224, %c0_225] : memref<1x128xf32, #tpu.memory_space<vmem>>, vector<1x128xf32>
    %cst_226 = arith.constant dense<0.000000e+00> : vector<16xf32>
    %398 = vector.multi_reduction <add>, %395, %cst_226 [1] : vector<16x128xf32> to vector<16xf32>
    %399 = vector.shape_cast %398 : vector<16xf32> to vector<16x1xf32>
    %cst_227 = arith.constant 1.280000e+02 : f32
    %400 = vector.broadcast %cst_227 : f32 to vector<16x1xf32>
    %401 = arith.divf %399, %400 : vector<16x1xf32>
    %402 = vector.broadcast %401 : vector<16x1xf32> to vector<16x128xf32>
    %403 = arith.subf %395, %402 : vector<16x128xf32>
    %404 = arith.mulf %403, %403 : vector<16x128xf32>
    %cst_228 = arith.constant dense<0.000000e+00> : vector<16xf32>
    %405 = vector.multi_reduction <add>, %404, %cst_228 [1] : vector<16x128xf32> to vector<16xf32>
    %406 = vector.shape_cast %405 : vector<16xf32> to vector<16x1xf32>
    %cst_229 = arith.constant 1.280000e+02 : f32
    %407 = vector.broadcast %cst_229 : f32 to vector<16x1xf32>
    %408 = arith.divf %406, %407 : vector<16x1xf32>
    %cst_230 = arith.constant 9.99999974E-6 : f32
    %409 = vector.broadcast %cst_230 : f32 to vector<16x1xf32>
    %410 = arith.addf %408, %409 : vector<16x1xf32>
    %411 = math.rsqrt %410 : vector<16x1xf32>
    %412 = vector.broadcast %411 : vector<16x1xf32> to vector<16x128xf32>
    %413 = arith.mulf %403, %412 : vector<16x128xf32>
    %414 = vector.broadcast %396 : vector<1x128xf32> to vector<16x128xf32>
    %415 = arith.mulf %413, %414 : vector<16x128xf32>
    %416 = vector.broadcast %397 : vector<1x128xf32> to vector<16x128xf32>
    %417 = arith.addf %415, %416 : vector<16x128xf32>
    %418 = arith.truncf %417 : vector<16x128xf32> to vector<16x128xbf16>
    %c0_231 = arith.constant 0 : index
    %c0_232 = arith.constant 0 : index
    %419 = vector.load %arg10[%c0_231, %c0_232] : memref<128x384xbf16, #tpu.memory_space<vmem>>, vector<128x384xbf16>
    %cst_233 = arith.constant dense<0.000000e+00> : vector<16x384xf32>
    %420 = tpu.matmul %418, %419, %cst_233 {dimension_numbers = #tpu.dot_dimension_numbers<[1], [0], [0], [1], [0, 0, 1, 1], [], []>} : vector<16x128xbf16>, vector<128x384xbf16>, vector<16x384xf32> -> vector<16x384xf32>
    %c0_234 = arith.constant 0 : index
    %c0_235 = arith.constant 0 : index
    %421 = vector.load %arg11[%c0_234, %c0_235] : memref<1x384xf32, #tpu.memory_space<vmem>>, vector<1x384xf32>
    %422 = vector.broadcast %421 : vector<1x384xf32> to vector<16x384xf32>
    %423 = arith.addf %420, %422 : vector<16x384xf32>
    %c0_236 = arith.constant 0 : index
    %c0_237 = arith.constant 0 : index
    %c0_238 = arith.constant 0 : index
    %424 = vector.load %arg3[%c0_236, %c0_237, %c0_238] : memref<1x1x16xf32, #tpu.memory_space<vmem>>, vector<1x1x16xf32>
    %cst_239 = arith.constant -1.000000e+30 : f32
    %425 = vector.broadcast %cst_239 : f32 to vector<1x1x16xf32>
    %426 = arith.mulf %424, %425 : vector<1x1x16xf32>
    %427 = vector.extract_strided_slice %423 {offsets = [0, 0], sizes = [16, 16], strides = [1, 1]} : vector<16x384xf32> to vector<16x16xf32>
    %cst_240 = arith.constant 2.500000e-01 : f32
    %428 = vector.broadcast %cst_240 : f32 to vector<16x16xf32>
    %429 = arith.mulf %427, %428 : vector<16x16xf32>
    %430 = vector.shape_cast %429 : vector<16x16xf32> to vector<1x16x16xf32>
    %431 = vector.extract_strided_slice %423 {offsets = [0, 128], sizes = [16, 16], strides = [1, 1]} : vector<16x384xf32> to vector<16x16xf32>
    %432 = vector.shape_cast %431 : vector<16x16xf32> to vector<1x16x16xf32>
    %433 = vector.extract_strided_slice %423 {offsets = [0, 256], sizes = [16, 16], strides = [1, 1]} : vector<16x384xf32> to vector<16x16xf32>
    %434 = vector.shape_cast %433 : vector<16x16xf32> to vector<1x16x16xf32>
    %435 = arith.truncf %430 : vector<1x16x16xf32> to vector<1x16x16xbf16>
    %436 = arith.truncf %432 : vector<1x16x16xf32> to vector<1x16x16xbf16>
    "tpu.trace_start"() <{level = 10 : i32, message = "bld,bmd->blm"}> : () -> ()
    %cst_241 = arith.constant dense<0.000000e+00> : vector<1x16x16xf32>
    %437 = tpu.matmul %435, %436, %cst_241 {dimension_numbers = #tpu.dot_dimension_numbers<[2], [2], [1], [1], [0, 0, 0, 1, 1, 1], [0], [0]>} : vector<1x16x16xbf16>, vector<1x16x16xbf16>, vector<1x16x16xf32> -> vector<1x16x16xf32>
    "tpu.trace_stop"() : () -> ()
    %438 = vector.broadcast %426 : vector<1x1x16xf32> to vector<1x16x16xf32>
    %439 = arith.addf %437, %438 : vector<1x16x16xf32>
    %cst_242 = arith.constant dense<0xFF800000> : vector<1x16xf32>
    %440 = vector.multi_reduction <maximumf>, %439, %cst_242 [2] : vector<1x16x16xf32> to vector<1x16xf32>
    %441 = vector.shape_cast %440 : vector<1x16xf32> to vector<1x16x1xf32>
    %442 = vector.broadcast %441 : vector<1x16x1xf32> to vector<1x16x16xf32>
    %443 = arith.subf %439, %442 : vector<1x16x16xf32>
    %444 = math.exp %443 : vector<1x16x16xf32>
    %cst_243 = arith.constant dense<0.000000e+00> : vector<1x16xf32>
    %445 = vector.multi_reduction <add>, %444, %cst_243 [2] : vector<1x16x16xf32> to vector<1x16xf32>
    %446 = vector.shape_cast %445 : vector<1x16xf32> to vector<1x16x1xf32>
    %447 = arith.truncf %444 : vector<1x16x16xf32> to vector<1x16x16xbf16>
    %448 = arith.truncf %434 : vector<1x16x16xf32> to vector<1x16x16xbf16>
    "tpu.trace_start"() <{level = 10 : i32, message = "blm,bmd->bld"}> : () -> ()
    %cst_244 = arith.constant dense<0.000000e+00> : vector<1x16x16xf32>
    %449 = tpu.matmul %447, %448, %cst_244 {dimension_numbers = #tpu.dot_dimension_numbers<[2], [1], [1], [2], [0, 0, 0, 1, 1, 2], [0], [0]>} : vector<1x16x16xbf16>, vector<1x16x16xbf16>, vector<1x16x16xf32> -> vector<1x16x16xf32>
    "tpu.trace_stop"() : () -> ()
    %450 = tpu.reciprocal %446 {approx = true} : vector<1x16x1xf32> -> vector<1x16x1xf32>
    %451 = vector.broadcast %450 : vector<1x16x1xf32> to vector<1x16x16xf32>
    %452 = arith.mulf %449, %451 : vector<1x16x16xf32>
    %453 = vector.shape_cast %452 : vector<1x16x16xf32> to vector<16x16xf32>
    %454 = arith.truncf %453 : vector<16x16xf32> to vector<16x16xbf16>
    %c0_245 = arith.constant 0 : index
    %c0_246 = arith.constant 0 : index
    %455 = vector.load %arg12[%c0_245, %c0_246] : memref<128x128xbf16, #tpu.memory_space<vmem>>, vector<16x128xbf16>
    %cst_247 = arith.constant dense<0.000000e+00> : vector<16x128xf32>
    %456 = tpu.matmul %454, %455, %cst_247 {dimension_numbers = #tpu.dot_dimension_numbers<[1], [0], [0], [1], [0, 0, 1, 1], [], []>} : vector<16x16xbf16>, vector<16x128xbf16>, vector<16x128xf32> -> vector<16x128xf32>
    %457 = vector.extract_strided_slice %423 {offsets = [0, 16], sizes = [16, 16], strides = [1, 1]} : vector<16x384xf32> to vector<16x16xf32>
    %cst_248 = arith.constant 2.500000e-01 : f32
    %458 = vector.broadcast %cst_248 : f32 to vector<16x16xf32>
    %459 = arith.mulf %457, %458 : vector<16x16xf32>
    %460 = vector.shape_cast %459 : vector<16x16xf32> to vector<1x16x16xf32>
    %461 = vector.extract_strided_slice %423 {offsets = [0, 144], sizes = [16, 16], strides = [1, 1]} : vector<16x384xf32> to vector<16x16xf32>
    %462 = vector.shape_cast %461 : vector<16x16xf32> to vector<1x16x16xf32>
    %463 = vector.extract_strided_slice %423 {offsets = [0, 272], sizes = [16, 16], strides = [1, 1]} : vector<16x384xf32> to vector<16x16xf32>
    %464 = vector.shape_cast %463 : vector<16x16xf32> to vector<1x16x16xf32>
    %465 = arith.truncf %460 : vector<1x16x16xf32> to vector<1x16x16xbf16>
    %466 = arith.truncf %462 : vector<1x16x16xf32> to vector<1x16x16xbf16>
    "tpu.trace_start"() <{level = 10 : i32, message = "bld,bmd->blm"}> : () -> ()
    %cst_249 = arith.constant dense<0.000000e+00> : vector<1x16x16xf32>
    %467 = tpu.matmul %465, %466, %cst_249 {dimension_numbers = #tpu.dot_dimension_numbers<[2], [2], [1], [1], [0, 0, 0, 1, 1, 1], [0], [0]>} : vector<1x16x16xbf16>, vector<1x16x16xbf16>, vector<1x16x16xf32> -> vector<1x16x16xf32>
    "tpu.trace_stop"() : () -> ()
    %468 = vector.broadcast %426 : vector<1x1x16xf32> to vector<1x16x16xf32>
    %469 = arith.addf %467, %468 : vector<1x16x16xf32>
    %cst_250 = arith.constant dense<0xFF800000> : vector<1x16xf32>
    %470 = vector.multi_reduction <maximumf>, %469, %cst_250 [2] : vector<1x16x16xf32> to vector<1x16xf32>
    %471 = vector.shape_cast %470 : vector<1x16xf32> to vector<1x16x1xf32>
    %472 = vector.broadcast %471 : vector<1x16x1xf32> to vector<1x16x16xf32>
    %473 = arith.subf %469, %472 : vector<1x16x16xf32>
    %474 = math.exp %473 : vector<1x16x16xf32>
    %cst_251 = arith.constant dense<0.000000e+00> : vector<1x16xf32>
    %475 = vector.multi_reduction <add>, %474, %cst_251 [2] : vector<1x16x16xf32> to vector<1x16xf32>
    %476 = vector.shape_cast %475 : vector<1x16xf32> to vector<1x16x1xf32>
    %477 = arith.truncf %474 : vector<1x16x16xf32> to vector<1x16x16xbf16>
    %478 = arith.truncf %464 : vector<1x16x16xf32> to vector<1x16x16xbf16>
    "tpu.trace_start"() <{level = 10 : i32, message = "blm,bmd->bld"}> : () -> ()
    %cst_252 = arith.constant dense<0.000000e+00> : vector<1x16x16xf32>
    %479 = tpu.matmul %477, %478, %cst_252 {dimension_numbers = #tpu.dot_dimension_numbers<[2], [1], [1], [2], [0, 0, 0, 1, 1, 2], [0], [0]>} : vector<1x16x16xbf16>, vector<1x16x16xbf16>, vector<1x16x16xf32> -> vector<1x16x16xf32>
    "tpu.trace_stop"() : () -> ()
    %480 = tpu.reciprocal %476 {approx = true} : vector<1x16x1xf32> -> vector<1x16x1xf32>
    %481 = vector.broadcast %480 : vector<1x16x1xf32> to vector<1x16x16xf32>
    %482 = arith.mulf %479, %481 : vector<1x16x16xf32>
    %483 = vector.shape_cast %482 : vector<1x16x16xf32> to vector<16x16xf32>
    %484 = arith.truncf %483 : vector<16x16xf32> to vector<16x16xbf16>
    %c16 = arith.constant 16 : index
    %c0_253 = arith.constant 0 : index
    %485 = vector.load %arg12[%c16, %c0_253] : memref<128x128xbf16, #tpu.memory_space<vmem>>, vector<16x128xbf16>
    %cst_254 = arith.constant dense<0.000000e+00> : vector<16x128xf32>
    %486 = tpu.matmul %484, %485, %cst_254 {dimension_numbers = #tpu.dot_dimension_numbers<[1], [0], [0], [1], [0, 0, 1, 1], [], []>} : vector<16x16xbf16>, vector<16x128xbf16>, vector<16x128xf32> -> vector<16x128xf32>
    %487 = arith.addf %456, %486 : vector<16x128xf32>
    %488 = vector.extract_strided_slice %423 {offsets = [0, 32], sizes = [16, 16], strides = [1, 1]} : vector<16x384xf32> to vector<16x16xf32>
    %cst_255 = arith.constant 2.500000e-01 : f32
    %489 = vector.broadcast %cst_255 : f32 to vector<16x16xf32>
    %490 = arith.mulf %488, %489 : vector<16x16xf32>
    %491 = vector.shape_cast %490 : vector<16x16xf32> to vector<1x16x16xf32>
    %492 = vector.extract_strided_slice %423 {offsets = [0, 160], sizes = [16, 16], strides = [1, 1]} : vector<16x384xf32> to vector<16x16xf32>
    %493 = vector.shape_cast %492 : vector<16x16xf32> to vector<1x16x16xf32>
    %494 = vector.extract_strided_slice %423 {offsets = [0, 288], sizes = [16, 16], strides = [1, 1]} : vector<16x384xf32> to vector<16x16xf32>
    %495 = vector.shape_cast %494 : vector<16x16xf32> to vector<1x16x16xf32>
    %496 = arith.truncf %491 : vector<1x16x16xf32> to vector<1x16x16xbf16>
    %497 = arith.truncf %493 : vector<1x16x16xf32> to vector<1x16x16xbf16>
    "tpu.trace_start"() <{level = 10 : i32, message = "bld,bmd->blm"}> : () -> ()
    %cst_256 = arith.constant dense<0.000000e+00> : vector<1x16x16xf32>
    %498 = tpu.matmul %496, %497, %cst_256 {dimension_numbers = #tpu.dot_dimension_numbers<[2], [2], [1], [1], [0, 0, 0, 1, 1, 1], [0], [0]>} : vector<1x16x16xbf16>, vector<1x16x16xbf16>, vector<1x16x16xf32> -> vector<1x16x16xf32>
    "tpu.trace_stop"() : () -> ()
    %499 = vector.broadcast %426 : vector<1x1x16xf32> to vector<1x16x16xf32>
    %500 = arith.addf %498, %499 : vector<1x16x16xf32>
    %cst_257 = arith.constant dense<0xFF800000> : vector<1x16xf32>
    %501 = vector.multi_reduction <maximumf>, %500, %cst_257 [2] : vector<1x16x16xf32> to vector<1x16xf32>
    %502 = vector.shape_cast %501 : vector<1x16xf32> to vector<1x16x1xf32>
    %503 = vector.broadcast %502 : vector<1x16x1xf32> to vector<1x16x16xf32>
    %504 = arith.subf %500, %503 : vector<1x16x16xf32>
    %505 = math.exp %504 : vector<1x16x16xf32>
    %cst_258 = arith.constant dense<0.000000e+00> : vector<1x16xf32>
    %506 = vector.multi_reduction <add>, %505, %cst_258 [2] : vector<1x16x16xf32> to vector<1x16xf32>
    %507 = vector.shape_cast %506 : vector<1x16xf32> to vector<1x16x1xf32>
    %508 = arith.truncf %505 : vector<1x16x16xf32> to vector<1x16x16xbf16>
    %509 = arith.truncf %495 : vector<1x16x16xf32> to vector<1x16x16xbf16>
    "tpu.trace_start"() <{level = 10 : i32, message = "blm,bmd->bld"}> : () -> ()
    %cst_259 = arith.constant dense<0.000000e+00> : vector<1x16x16xf32>
    %510 = tpu.matmul %508, %509, %cst_259 {dimension_numbers = #tpu.dot_dimension_numbers<[2], [1], [1], [2], [0, 0, 0, 1, 1, 2], [0], [0]>} : vector<1x16x16xbf16>, vector<1x16x16xbf16>, vector<1x16x16xf32> -> vector<1x16x16xf32>
    "tpu.trace_stop"() : () -> ()
    %511 = tpu.reciprocal %507 {approx = true} : vector<1x16x1xf32> -> vector<1x16x1xf32>
    %512 = vector.broadcast %511 : vector<1x16x1xf32> to vector<1x16x16xf32>
    %513 = arith.mulf %510, %512 : vector<1x16x16xf32>
    %514 = vector.shape_cast %513 : vector<1x16x16xf32> to vector<16x16xf32>
    %515 = arith.truncf %514 : vector<16x16xf32> to vector<16x16xbf16>
    %c32 = arith.constant 32 : index
    %c0_260 = arith.constant 0 : index
    %516 = vector.load %arg12[%c32, %c0_260] : memref<128x128xbf16, #tpu.memory_space<vmem>>, vector<16x128xbf16>
    %cst_261 = arith.constant dense<0.000000e+00> : vector<16x128xf32>
    %517 = tpu.matmul %515, %516, %cst_261 {dimension_numbers = #tpu.dot_dimension_numbers<[1], [0], [0], [1], [0, 0, 1, 1], [], []>} : vector<16x16xbf16>, vector<16x128xbf16>, vector<16x128xf32> -> vector<16x128xf32>
    %518 = arith.addf %487, %517 : vector<16x128xf32>
    %519 = vector.extract_strided_slice %423 {offsets = [0, 48], sizes = [16, 16], strides = [1, 1]} : vector<16x384xf32> to vector<16x16xf32>
    %cst_262 = arith.constant 2.500000e-01 : f32
    %520 = vector.broadcast %cst_262 : f32 to vector<16x16xf32>
    %521 = arith.mulf %519, %520 : vector<16x16xf32>
    %522 = vector.shape_cast %521 : vector<16x16xf32> to vector<1x16x16xf32>
    %523 = vector.extract_strided_slice %423 {offsets = [0, 176], sizes = [16, 16], strides = [1, 1]} : vector<16x384xf32> to vector<16x16xf32>
    %524 = vector.shape_cast %523 : vector<16x16xf32> to vector<1x16x16xf32>
    %525 = vector.extract_strided_slice %423 {offsets = [0, 304], sizes = [16, 16], strides = [1, 1]} : vector<16x384xf32> to vector<16x16xf32>
    %526 = vector.shape_cast %525 : vector<16x16xf32> to vector<1x16x16xf32>
    %527 = arith.truncf %522 : vector<1x16x16xf32> to vector<1x16x16xbf16>
    %528 = arith.truncf %524 : vector<1x16x16xf32> to vector<1x16x16xbf16>
    "tpu.trace_start"() <{level = 10 : i32, message = "bld,bmd->blm"}> : () -> ()
    %cst_263 = arith.constant dense<0.000000e+00> : vector<1x16x16xf32>
    %529 = tpu.matmul %527, %528, %cst_263 {dimension_numbers = #tpu.dot_dimension_numbers<[2], [2], [1], [1], [0, 0, 0, 1, 1, 1], [0], [0]>} : vector<1x16x16xbf16>, vector<1x16x16xbf16>, vector<1x16x16xf32> -> vector<1x16x16xf32>
    "tpu.trace_stop"() : () -> ()
    %530 = vector.broadcast %426 : vector<1x1x16xf32> to vector<1x16x16xf32>
    %531 = arith.addf %529, %530 : vector<1x16x16xf32>
    %cst_264 = arith.constant dense<0xFF800000> : vector<1x16xf32>
    %532 = vector.multi_reduction <maximumf>, %531, %cst_264 [2] : vector<1x16x16xf32> to vector<1x16xf32>
    %533 = vector.shape_cast %532 : vector<1x16xf32> to vector<1x16x1xf32>
    %534 = vector.broadcast %533 : vector<1x16x1xf32> to vector<1x16x16xf32>
    %535 = arith.subf %531, %534 : vector<1x16x16xf32>
    %536 = math.exp %535 : vector<1x16x16xf32>
    %cst_265 = arith.constant dense<0.000000e+00> : vector<1x16xf32>
    %537 = vector.multi_reduction <add>, %536, %cst_265 [2] : vector<1x16x16xf32> to vector<1x16xf32>
    %538 = vector.shape_cast %537 : vector<1x16xf32> to vector<1x16x1xf32>
    %539 = arith.truncf %536 : vector<1x16x16xf32> to vector<1x16x16xbf16>
    %540 = arith.truncf %526 : vector<1x16x16xf32> to vector<1x16x16xbf16>
    "tpu.trace_start"() <{level = 10 : i32, message = "blm,bmd->bld"}> : () -> ()
    %cst_266 = arith.constant dense<0.000000e+00> : vector<1x16x16xf32>
    %541 = tpu.matmul %539, %540, %cst_266 {dimension_numbers = #tpu.dot_dimension_numbers<[2], [1], [1], [2], [0, 0, 0, 1, 1, 2], [0], [0]>} : vector<1x16x16xbf16>, vector<1x16x16xbf16>, vector<1x16x16xf32> -> vector<1x16x16xf32>
    "tpu.trace_stop"() : () -> ()
    %542 = tpu.reciprocal %538 {approx = true} : vector<1x16x1xf32> -> vector<1x16x1xf32>
    %543 = vector.broadcast %542 : vector<1x16x1xf32> to vector<1x16x16xf32>
    %544 = arith.mulf %541, %543 : vector<1x16x16xf32>
    %545 = vector.shape_cast %544 : vector<1x16x16xf32> to vector<16x16xf32>
    %546 = arith.truncf %545 : vector<16x16xf32> to vector<16x16xbf16>
    %c48 = arith.constant 48 : index
    %c0_267 = arith.constant 0 : index
    %547 = vector.load %arg12[%c48, %c0_267] : memref<128x128xbf16, #tpu.memory_space<vmem>>, vector<16x128xbf16>
    %cst_268 = arith.constant dense<0.000000e+00> : vector<16x128xf32>
    %548 = tpu.matmul %546, %547, %cst_268 {dimension_numbers = #tpu.dot_dimension_numbers<[1], [0], [0], [1], [0, 0, 1, 1], [], []>} : vector<16x16xbf16>, vector<16x128xbf16>, vector<16x128xf32> -> vector<16x128xf32>
    %549 = arith.addf %518, %548 : vector<16x128xf32>
    %550 = vector.extract_strided_slice %423 {offsets = [0, 64], sizes = [16, 16], strides = [1, 1]} : vector<16x384xf32> to vector<16x16xf32>
    %cst_269 = arith.constant 2.500000e-01 : f32
    %551 = vector.broadcast %cst_269 : f32 to vector<16x16xf32>
    %552 = arith.mulf %550, %551 : vector<16x16xf32>
    %553 = vector.shape_cast %552 : vector<16x16xf32> to vector<1x16x16xf32>
    %554 = vector.extract_strided_slice %423 {offsets = [0, 192], sizes = [16, 16], strides = [1, 1]} : vector<16x384xf32> to vector<16x16xf32>
    %555 = vector.shape_cast %554 : vector<16x16xf32> to vector<1x16x16xf32>
    %556 = vector.extract_strided_slice %423 {offsets = [0, 320], sizes = [16, 16], strides = [1, 1]} : vector<16x384xf32> to vector<16x16xf32>
    %557 = vector.shape_cast %556 : vector<16x16xf32> to vector<1x16x16xf32>
    %558 = arith.truncf %553 : vector<1x16x16xf32> to vector<1x16x16xbf16>
    %559 = arith.truncf %555 : vector<1x16x16xf32> to vector<1x16x16xbf16>
    "tpu.trace_start"() <{level = 10 : i32, message = "bld,bmd->blm"}> : () -> ()
    %cst_270 = arith.constant dense<0.000000e+00> : vector<1x16x16xf32>
    %560 = tpu.matmul %558, %559, %cst_270 {dimension_numbers = #tpu.dot_dimension_numbers<[2], [2], [1], [1], [0, 0, 0, 1, 1, 1], [0], [0]>} : vector<1x16x16xbf16>, vector<1x16x16xbf16>, vector<1x16x16xf32> -> vector<1x16x16xf32>
    "tpu.trace_stop"() : () -> ()
    %561 = vector.broadcast %426 : vector<1x1x16xf32> to vector<1x16x16xf32>
    %562 = arith.addf %560, %561 : vector<1x16x16xf32>
    %cst_271 = arith.constant dense<0xFF800000> : vector<1x16xf32>
    %563 = vector.multi_reduction <maximumf>, %562, %cst_271 [2] : vector<1x16x16xf32> to vector<1x16xf32>
    %564 = vector.shape_cast %563 : vector<1x16xf32> to vector<1x16x1xf32>
    %565 = vector.broadcast %564 : vector<1x16x1xf32> to vector<1x16x16xf32>
    %566 = arith.subf %562, %565 : vector<1x16x16xf32>
    %567 = math.exp %566 : vector<1x16x16xf32>
    %cst_272 = arith.constant dense<0.000000e+00> : vector<1x16xf32>
    %568 = vector.multi_reduction <add>, %567, %cst_272 [2] : vector<1x16x16xf32> to vector<1x16xf32>
    %569 = vector.shape_cast %568 : vector<1x16xf32> to vector<1x16x1xf32>
    %570 = arith.truncf %567 : vector<1x16x16xf32> to vector<1x16x16xbf16>
    %571 = arith.truncf %557 : vector<1x16x16xf32> to vector<1x16x16xbf16>
    "tpu.trace_start"() <{level = 10 : i32, message = "blm,bmd->bld"}> : () -> ()
    %cst_273 = arith.constant dense<0.000000e+00> : vector<1x16x16xf32>
    %572 = tpu.matmul %570, %571, %cst_273 {dimension_numbers = #tpu.dot_dimension_numbers<[2], [1], [1], [2], [0, 0, 0, 1, 1, 2], [0], [0]>} : vector<1x16x16xbf16>, vector<1x16x16xbf16>, vector<1x16x16xf32> -> vector<1x16x16xf32>
    "tpu.trace_stop"() : () -> ()
    %573 = tpu.reciprocal %569 {approx = true} : vector<1x16x1xf32> -> vector<1x16x1xf32>
    %574 = vector.broadcast %573 : vector<1x16x1xf32> to vector<1x16x16xf32>
    %575 = arith.mulf %572, %574 : vector<1x16x16xf32>
    %576 = vector.shape_cast %575 : vector<1x16x16xf32> to vector<16x16xf32>
    %577 = arith.truncf %576 : vector<16x16xf32> to vector<16x16xbf16>
    %c64 = arith.constant 64 : index
    %c0_274 = arith.constant 0 : index
    %578 = vector.load %arg12[%c64, %c0_274] : memref<128x128xbf16, #tpu.memory_space<vmem>>, vector<16x128xbf16>
    %cst_275 = arith.constant dense<0.000000e+00> : vector<16x128xf32>
    %579 = tpu.matmul %577, %578, %cst_275 {dimension_numbers = #tpu.dot_dimension_numbers<[1], [0], [0], [1], [0, 0, 1, 1], [], []>} : vector<16x16xbf16>, vector<16x128xbf16>, vector<16x128xf32> -> vector<16x128xf32>
    %580 = arith.addf %549, %579 : vector<16x128xf32>
    %581 = vector.extract_strided_slice %423 {offsets = [0, 80], sizes = [16, 16], strides = [1, 1]} : vector<16x384xf32> to vector<16x16xf32>
    %cst_276 = arith.constant 2.500000e-01 : f32
    %582 = vector.broadcast %cst_276 : f32 to vector<16x16xf32>
    %583 = arith.mulf %581, %582 : vector<16x16xf32>
    %584 = vector.shape_cast %583 : vector<16x16xf32> to vector<1x16x16xf32>
    %585 = vector.extract_strided_slice %423 {offsets = [0, 208], sizes = [16, 16], strides = [1, 1]} : vector<16x384xf32> to vector<16x16xf32>
    %586 = vector.shape_cast %585 : vector<16x16xf32> to vector<1x16x16xf32>
    %587 = vector.extract_strided_slice %423 {offsets = [0, 336], sizes = [16, 16], strides = [1, 1]} : vector<16x384xf32> to vector<16x16xf32>
    %588 = vector.shape_cast %587 : vector<16x16xf32> to vector<1x16x16xf32>
    %589 = arith.truncf %584 : vector<1x16x16xf32> to vector<1x16x16xbf16>
    %590 = arith.truncf %586 : vector<1x16x16xf32> to vector<1x16x16xbf16>
    "tpu.trace_start"() <{level = 10 : i32, message = "bld,bmd->blm"}> : () -> ()
    %cst_277 = arith.constant dense<0.000000e+00> : vector<1x16x16xf32>
    %591 = tpu.matmul %589, %590, %cst_277 {dimension_numbers = #tpu.dot_dimension_numbers<[2], [2], [1], [1], [0, 0, 0, 1, 1, 1], [0], [0]>} : vector<1x16x16xbf16>, vector<1x16x16xbf16>, vector<1x16x16xf32> -> vector<1x16x16xf32>
    "tpu.trace_stop"() : () -> ()
    %592 = vector.broadcast %426 : vector<1x1x16xf32> to vector<1x16x16xf32>
    %593 = arith.addf %591, %592 : vector<1x16x16xf32>
    %cst_278 = arith.constant dense<0xFF800000> : vector<1x16xf32>
    %594 = vector.multi_reduction <maximumf>, %593, %cst_278 [2] : vector<1x16x16xf32> to vector<1x16xf32>
    %595 = vector.shape_cast %594 : vector<1x16xf32> to vector<1x16x1xf32>
    %596 = vector.broadcast %595 : vector<1x16x1xf32> to vector<1x16x16xf32>
    %597 = arith.subf %593, %596 : vector<1x16x16xf32>
    %598 = math.exp %597 : vector<1x16x16xf32>
    %cst_279 = arith.constant dense<0.000000e+00> : vector<1x16xf32>
    %599 = vector.multi_reduction <add>, %598, %cst_279 [2] : vector<1x16x16xf32> to vector<1x16xf32>
    %600 = vector.shape_cast %599 : vector<1x16xf32> to vector<1x16x1xf32>
    %601 = arith.truncf %598 : vector<1x16x16xf32> to vector<1x16x16xbf16>
    %602 = arith.truncf %588 : vector<1x16x16xf32> to vector<1x16x16xbf16>
    "tpu.trace_start"() <{level = 10 : i32, message = "blm,bmd->bld"}> : () -> ()
    %cst_280 = arith.constant dense<0.000000e+00> : vector<1x16x16xf32>
    %603 = tpu.matmul %601, %602, %cst_280 {dimension_numbers = #tpu.dot_dimension_numbers<[2], [1], [1], [2], [0, 0, 0, 1, 1, 2], [0], [0]>} : vector<1x16x16xbf16>, vector<1x16x16xbf16>, vector<1x16x16xf32> -> vector<1x16x16xf32>
    "tpu.trace_stop"() : () -> ()
    %604 = tpu.reciprocal %600 {approx = true} : vector<1x16x1xf32> -> vector<1x16x1xf32>
    %605 = vector.broadcast %604 : vector<1x16x1xf32> to vector<1x16x16xf32>
    %606 = arith.mulf %603, %605 : vector<1x16x16xf32>
    %607 = vector.shape_cast %606 : vector<1x16x16xf32> to vector<16x16xf32>
    %608 = arith.truncf %607 : vector<16x16xf32> to vector<16x16xbf16>
    %c80 = arith.constant 80 : index
    %c0_281 = arith.constant 0 : index
    %609 = vector.load %arg12[%c80, %c0_281] : memref<128x128xbf16, #tpu.memory_space<vmem>>, vector<16x128xbf16>
    %cst_282 = arith.constant dense<0.000000e+00> : vector<16x128xf32>
    %610 = tpu.matmul %608, %609, %cst_282 {dimension_numbers = #tpu.dot_dimension_numbers<[1], [0], [0], [1], [0, 0, 1, 1], [], []>} : vector<16x16xbf16>, vector<16x128xbf16>, vector<16x128xf32> -> vector<16x128xf32>
    %611 = arith.addf %580, %610 : vector<16x128xf32>
    %612 = vector.extract_strided_slice %423 {offsets = [0, 96], sizes = [16, 16], strides = [1, 1]} : vector<16x384xf32> to vector<16x16xf32>
    %cst_283 = arith.constant 2.500000e-01 : f32
    %613 = vector.broadcast %cst_283 : f32 to vector<16x16xf32>
    %614 = arith.mulf %612, %613 : vector<16x16xf32>
    %615 = vector.shape_cast %614 : vector<16x16xf32> to vector<1x16x16xf32>
    %616 = vector.extract_strided_slice %423 {offsets = [0, 224], sizes = [16, 16], strides = [1, 1]} : vector<16x384xf32> to vector<16x16xf32>
    %617 = vector.shape_cast %616 : vector<16x16xf32> to vector<1x16x16xf32>
    %618 = vector.extract_strided_slice %423 {offsets = [0, 352], sizes = [16, 16], strides = [1, 1]} : vector<16x384xf32> to vector<16x16xf32>
    %619 = vector.shape_cast %618 : vector<16x16xf32> to vector<1x16x16xf32>
    %620 = arith.truncf %615 : vector<1x16x16xf32> to vector<1x16x16xbf16>
    %621 = arith.truncf %617 : vector<1x16x16xf32> to vector<1x16x16xbf16>
    "tpu.trace_start"() <{level = 10 : i32, message = "bld,bmd->blm"}> : () -> ()
    %cst_284 = arith.constant dense<0.000000e+00> : vector<1x16x16xf32>
    %622 = tpu.matmul %620, %621, %cst_284 {dimension_numbers = #tpu.dot_dimension_numbers<[2], [2], [1], [1], [0, 0, 0, 1, 1, 1], [0], [0]>} : vector<1x16x16xbf16>, vector<1x16x16xbf16>, vector<1x16x16xf32> -> vector<1x16x16xf32>
    "tpu.trace_stop"() : () -> ()
    %623 = vector.broadcast %426 : vector<1x1x16xf32> to vector<1x16x16xf32>
    %624 = arith.addf %622, %623 : vector<1x16x16xf32>
    %cst_285 = arith.constant dense<0xFF800000> : vector<1x16xf32>
    %625 = vector.multi_reduction <maximumf>, %624, %cst_285 [2] : vector<1x16x16xf32> to vector<1x16xf32>
    %626 = vector.shape_cast %625 : vector<1x16xf32> to vector<1x16x1xf32>
    %627 = vector.broadcast %626 : vector<1x16x1xf32> to vector<1x16x16xf32>
    %628 = arith.subf %624, %627 : vector<1x16x16xf32>
    %629 = math.exp %628 : vector<1x16x16xf32>
    %cst_286 = arith.constant dense<0.000000e+00> : vector<1x16xf32>
    %630 = vector.multi_reduction <add>, %629, %cst_286 [2] : vector<1x16x16xf32> to vector<1x16xf32>
    %631 = vector.shape_cast %630 : vector<1x16xf32> to vector<1x16x1xf32>
    %632 = arith.truncf %629 : vector<1x16x16xf32> to vector<1x16x16xbf16>
    %633 = arith.truncf %619 : vector<1x16x16xf32> to vector<1x16x16xbf16>
    "tpu.trace_start"() <{level = 10 : i32, message = "blm,bmd->bld"}> : () -> ()
    %cst_287 = arith.constant dense<0.000000e+00> : vector<1x16x16xf32>
    %634 = tpu.matmul %632, %633, %cst_287 {dimension_numbers = #tpu.dot_dimension_numbers<[2], [1], [1], [2], [0, 0, 0, 1, 1, 2], [0], [0]>} : vector<1x16x16xbf16>, vector<1x16x16xbf16>, vector<1x16x16xf32> -> vector<1x16x16xf32>
    "tpu.trace_stop"() : () -> ()
    %635 = tpu.reciprocal %631 {approx = true} : vector<1x16x1xf32> -> vector<1x16x1xf32>
    %636 = vector.broadcast %635 : vector<1x16x1xf32> to vector<1x16x16xf32>
    %637 = arith.mulf %634, %636 : vector<1x16x16xf32>
    %638 = vector.shape_cast %637 : vector<1x16x16xf32> to vector<16x16xf32>
    %639 = arith.truncf %638 : vector<16x16xf32> to vector<16x16xbf16>
    %c96 = arith.constant 96 : index
    %c0_288 = arith.constant 0 : index
    %640 = vector.load %arg12[%c96, %c0_288] : memref<128x128xbf16, #tpu.memory_space<vmem>>, vector<16x128xbf16>
    %cst_289 = arith.constant dense<0.000000e+00> : vector<16x128xf32>
    %641 = tpu.matmul %639, %640, %cst_289 {dimension_numbers = #tpu.dot_dimension_numbers<[1], [0], [0], [1], [0, 0, 1, 1], [], []>} : vector<16x16xbf16>, vector<16x128xbf16>, vector<16x128xf32> -> vector<16x128xf32>
    %642 = arith.addf %611, %641 : vector<16x128xf32>
    %643 = vector.extract_strided_slice %423 {offsets = [0, 112], sizes = [16, 16], strides = [1, 1]} : vector<16x384xf32> to vector<16x16xf32>
    %cst_290 = arith.constant 2.500000e-01 : f32
    %644 = vector.broadcast %cst_290 : f32 to vector<16x16xf32>
    %645 = arith.mulf %643, %644 : vector<16x16xf32>
    %646 = vector.shape_cast %645 : vector<16x16xf32> to vector<1x16x16xf32>
    %647 = vector.extract_strided_slice %423 {offsets = [0, 240], sizes = [16, 16], strides = [1, 1]} : vector<16x384xf32> to vector<16x16xf32>
    %648 = vector.shape_cast %647 : vector<16x16xf32> to vector<1x16x16xf32>
    %649 = vector.extract_strided_slice %423 {offsets = [0, 368], sizes = [16, 16], strides = [1, 1]} : vector<16x384xf32> to vector<16x16xf32>
    %650 = vector.shape_cast %649 : vector<16x16xf32> to vector<1x16x16xf32>
    %651 = arith.truncf %646 : vector<1x16x16xf32> to vector<1x16x16xbf16>
    %652 = arith.truncf %648 : vector<1x16x16xf32> to vector<1x16x16xbf16>
    "tpu.trace_start"() <{level = 10 : i32, message = "bld,bmd->blm"}> : () -> ()
    %cst_291 = arith.constant dense<0.000000e+00> : vector<1x16x16xf32>
    %653 = tpu.matmul %651, %652, %cst_291 {dimension_numbers = #tpu.dot_dimension_numbers<[2], [2], [1], [1], [0, 0, 0, 1, 1, 1], [0], [0]>} : vector<1x16x16xbf16>, vector<1x16x16xbf16>, vector<1x16x16xf32> -> vector<1x16x16xf32>
    "tpu.trace_stop"() : () -> ()
    %654 = vector.broadcast %426 : vector<1x1x16xf32> to vector<1x16x16xf32>
    %655 = arith.addf %653, %654 : vector<1x16x16xf32>
    %cst_292 = arith.constant dense<0xFF800000> : vector<1x16xf32>
    %656 = vector.multi_reduction <maximumf>, %655, %cst_292 [2] : vector<1x16x16xf32> to vector<1x16xf32>
    %657 = vector.shape_cast %656 : vector<1x16xf32> to vector<1x16x1xf32>
    %658 = vector.broadcast %657 : vector<1x16x1xf32> to vector<1x16x16xf32>
    %659 = arith.subf %655, %658 : vector<1x16x16xf32>
    %660 = math.exp %659 : vector<1x16x16xf32>
    %cst_293 = arith.constant dense<0.000000e+00> : vector<1x16xf32>
    %661 = vector.multi_reduction <add>, %660, %cst_293 [2] : vector<1x16x16xf32> to vector<1x16xf32>
    %662 = vector.shape_cast %661 : vector<1x16xf32> to vector<1x16x1xf32>
    %663 = arith.truncf %660 : vector<1x16x16xf32> to vector<1x16x16xbf16>
    %664 = arith.truncf %650 : vector<1x16x16xf32> to vector<1x16x16xbf16>
    "tpu.trace_start"() <{level = 10 : i32, message = "blm,bmd->bld"}> : () -> ()
    %cst_294 = arith.constant dense<0.000000e+00> : vector<1x16x16xf32>
    %665 = tpu.matmul %663, %664, %cst_294 {dimension_numbers = #tpu.dot_dimension_numbers<[2], [1], [1], [2], [0, 0, 0, 1, 1, 2], [0], [0]>} : vector<1x16x16xbf16>, vector<1x16x16xbf16>, vector<1x16x16xf32> -> vector<1x16x16xf32>
    "tpu.trace_stop"() : () -> ()
    %666 = tpu.reciprocal %662 {approx = true} : vector<1x16x1xf32> -> vector<1x16x1xf32>
    %667 = vector.broadcast %666 : vector<1x16x1xf32> to vector<1x16x16xf32>
    %668 = arith.mulf %665, %667 : vector<1x16x16xf32>
    %669 = vector.shape_cast %668 : vector<1x16x16xf32> to vector<16x16xf32>
    %670 = arith.truncf %669 : vector<16x16xf32> to vector<16x16xbf16>
    %c112 = arith.constant 112 : index
    %c0_295 = arith.constant 0 : index
    %671 = vector.load %arg12[%c112, %c0_295] : memref<128x128xbf16, #tpu.memory_space<vmem>>, vector<16x128xbf16>
    %cst_296 = arith.constant dense<0.000000e+00> : vector<16x128xf32>
    %672 = tpu.matmul %670, %671, %cst_296 {dimension_numbers = #tpu.dot_dimension_numbers<[1], [0], [0], [1], [0, 0, 1, 1], [], []>} : vector<16x16xbf16>, vector<16x128xbf16>, vector<16x128xf32> -> vector<16x128xf32>
    %673 = arith.addf %642, %672 : vector<16x128xf32>
    %c0_297 = arith.constant 0 : index
    %c0_298 = arith.constant 0 : index
    %674 = vector.load %arg13[%c0_297, %c0_298] : memref<1x128xf32, #tpu.memory_space<vmem>>, vector<1x128xf32>
    %675 = vector.broadcast %674 : vector<1x128xf32> to vector<16x128xf32>
    %676 = arith.addf %673, %675 : vector<16x128xf32>
    %677 = arith.addf %676, %395 : vector<16x128xf32>
    %c0_299 = arith.constant 0 : index
    %c0_300 = arith.constant 0 : index
    %678 = vector.load %arg14[%c0_299, %c0_300] : memref<1x128xf32, #tpu.memory_space<vmem>>, vector<1x128xf32>
    %c0_301 = arith.constant 0 : index
    %c0_302 = arith.constant 0 : index
    %679 = vector.load %arg15[%c0_301, %c0_302] : memref<1x128xf32, #tpu.memory_space<vmem>>, vector<1x128xf32>
    %cst_303 = arith.constant dense<0.000000e+00> : vector<16xf32>
    %680 = vector.multi_reduction <add>, %677, %cst_303 [1] : vector<16x128xf32> to vector<16xf32>
    %681 = vector.shape_cast %680 : vector<16xf32> to vector<16x1xf32>
    %cst_304 = arith.constant 1.280000e+02 : f32
    %682 = vector.broadcast %cst_304 : f32 to vector<16x1xf32>
    %683 = arith.divf %681, %682 : vector<16x1xf32>
    %684 = vector.broadcast %683 : vector<16x1xf32> to vector<16x128xf32>
    %685 = arith.subf %677, %684 : vector<16x128xf32>
    %686 = arith.mulf %685, %685 : vector<16x128xf32>
    %cst_305 = arith.constant dense<0.000000e+00> : vector<16xf32>
    %687 = vector.multi_reduction <add>, %686, %cst_305 [1] : vector<16x128xf32> to vector<16xf32>
    %688 = vector.shape_cast %687 : vector<16xf32> to vector<16x1xf32>
    %cst_306 = arith.constant 1.280000e+02 : f32
    %689 = vector.broadcast %cst_306 : f32 to vector<16x1xf32>
    %690 = arith.divf %688, %689 : vector<16x1xf32>
    %cst_307 = arith.constant 9.99999974E-6 : f32
    %691 = vector.broadcast %cst_307 : f32 to vector<16x1xf32>
    %692 = arith.addf %690, %691 : vector<16x1xf32>
    %693 = math.rsqrt %692 : vector<16x1xf32>
    %694 = vector.broadcast %693 : vector<16x1xf32> to vector<16x128xf32>
    %695 = arith.mulf %685, %694 : vector<16x128xf32>
    %696 = vector.broadcast %678 : vector<1x128xf32> to vector<16x128xf32>
    %697 = arith.mulf %695, %696 : vector<16x128xf32>
    %698 = vector.broadcast %679 : vector<1x128xf32> to vector<16x128xf32>
    %699 = arith.addf %697, %698 : vector<16x128xf32>
    %700 = arith.truncf %699 : vector<16x128xf32> to vector<16x128xbf16>
    %c0_308 = arith.constant 0 : index
    %c0_309 = arith.constant 0 : index
    %701 = vector.load %arg16[%c0_308, %c0_309] : memref<128x128xbf16, #tpu.memory_space<vmem>>, vector<128x128xbf16>
    %cst_310 = arith.constant dense<0.000000e+00> : vector<16x128xf32>
    %702 = tpu.matmul %700, %701, %cst_310 {dimension_numbers = #tpu.dot_dimension_numbers<[1], [0], [0], [1], [0, 0, 1, 1], [], []>} : vector<16x128xbf16>, vector<128x128xbf16>, vector<16x128xf32> -> vector<16x128xf32>
    %c0_311 = arith.constant 0 : index
    %c0_312 = arith.constant 0 : index
    %703 = vector.load %arg17[%c0_311, %c0_312] : memref<1x128xf32, #tpu.memory_space<vmem>>, vector<1x128xf32>
    %704 = vector.broadcast %703 : vector<1x128xf32> to vector<16x128xf32>
    %705 = arith.addf %702, %704 : vector<16x128xf32>
    %cst_313 = arith.constant 0.000000e+00 : f32
    %706 = vector.broadcast %cst_313 : f32 to vector<16x128xf32>
    %707 = arith.maximumf %705, %706 : vector<16x128xf32>
    %708 = arith.truncf %707 : vector<16x128xf32> to vector<16x128xbf16>
    %c0_314 = arith.constant 0 : index
    %c0_315 = arith.constant 0 : index
    %709 = vector.load %arg18[%c0_314, %c0_315] : memref<128x128xbf16, #tpu.memory_space<vmem>>, vector<128x128xbf16>
    %cst_316 = arith.constant dense<0.000000e+00> : vector<16x128xf32>
    %710 = tpu.matmul %708, %709, %cst_316 {dimension_numbers = #tpu.dot_dimension_numbers<[1], [0], [0], [1], [0, 0, 1, 1], [], []>} : vector<16x128xbf16>, vector<128x128xbf16>, vector<16x128xf32> -> vector<16x128xf32>
    %c0_317 = arith.constant 0 : index
    %c0_318 = arith.constant 0 : index
    %711 = vector.load %arg19[%c0_317, %c0_318] : memref<1x128xf32, #tpu.memory_space<vmem>>, vector<1x128xf32>
    %712 = vector.broadcast %711 : vector<1x128xf32> to vector<16x128xf32>
    %713 = arith.addf %710, %712 : vector<16x128xf32>
    %714 = arith.addf %713, %677 : vector<16x128xf32>
    %715 = vector.shape_cast %714 : vector<16x128xf32> to vector<1x16x128xf32>
    %c0_319 = arith.constant 0 : index
    %c0_320 = arith.constant 0 : index
    %c0_321 = arith.constant 0 : index
    %716 = vector.load %arg20[%c0_319, %c0_320, %c0_321] : memref<1x16x128xf32, #tpu.memory_space<vmem>>, vector<1x16x128xf32>
    tpu.vector_store %arg20[%c0_319, %c0_320, %c0_321], %715 {strides = array<i32>} : memref<1x16x128xf32, #tpu.memory_space<vmem>>, vector<1x16x128xf32>,
    return
  }
  func.func @transform_0(%arg0: i32) -> (i32, i32, i32) {
    %c0_i32 = arith.constant 0 : i32
    %c0_i32_0 = arith.constant 0 : i32
    %c0_i32_1 = arith.constant 0 : i32
    return %arg0, %c0_i32, %c0_i32_0 : i32, i32, i32
  }
  func.func @transform_1(%arg0: i32) -> (i32, i32) {
    %c0_i32 = arith.constant 0 : i32
    %c0_i32_0 = arith.constant 0 : i32
    %c0_i32_1 = arith.constant 0 : i32
    return %c0_i32, %c0_i32_0 : i32, i32
  }
  func.func @transform_2(%arg0: i32) -> (i32, i32, i32) {
    %c0_i32 = arith.constant 0 : i32
    %c0_i32_0 = arith.constant 0 : i32
    %c0_i32_1 = arith.constant 0 : i32
    return %arg0, %c0_i32, %c0_i32_0 : i32, i32, i32
  }
  func.func @transform_3(%arg0: i32) -> (i32, i32) {
    %c0_i32 = arith.constant 0 : i32
    %c0_i32_0 = arith.constant 0 : i32
    %c0_i32_1 = arith.constant 0 : i32
    return %c0_i32, %c0_i32_0 : i32, i32
  }
  func.func @transform_4(%arg0: i32) -> (i32, i32) {
    %c0_i32 = arith.constant 0 : i32
    %c0_i32_0 = arith.constant 0 : i32
    %c0_i32_1 = arith.constant 0 : i32
    return %c0_i32, %c0_i32_0 : i32, i32
  }
  func.func @transform_5(%arg0: i32) -> (i32, i32, i32, i32) {
    %c0_i32 = arith.constant 0 : i32
    %c0_i32_0 = arith.constant 0 : i32
    %c0_i32_1 = arith.constant 0 : i32
    %c0_i32_2 = arith.constant 0 : i32
    %c0_i32_3 = arith.constant 0 : i32
    return %c0_i32, %c0_i32_0, %c0_i32_1, %c0_i32_2 : i32, i32, i32, i32
  }
  func.func @transform_6(%arg0: i32) -> (i32, i32) {
    %c0_i32 = arith.constant 0 : i32
    %c0_i32_0 = arith.constant 0 : i32
    %c0_i32_1 = arith.constant 0 : i32
    return %c0_i32, %c0_i32_0 : i32, i32
  }
  func.func @transform_7(%arg0: i32) -> (i32, i32) {
    %c0_i32 = arith.constant 0 : i32
    %c0_i32_0 = arith.constant 0 : i32
    %c0_i32_1 = arith.constant 0 : i32
    return %c0_i32, %c0_i32_0 : i32, i32
  }
  func.func @transform_8(%arg0: i32) -> (i32, i32) {
    %c0_i32 = arith.constant 0 : i32
    %c0_i32_0 = arith.constant 0 : i32
    %c0_i32_1 = arith.constant 0 : i32
    return %c0_i32, %c0_i32_0 : i32, i32
  }
  func.func @transform_9(%arg0: i32) -> (i32, i32) {
    %c0_i32 = arith.constant 0 : i32
    %c0_i32_0 = arith.constant 0 : i32
    %c0_i32_1 = arith.constant 0 : i32
    return %c0_i32, %c0_i32_0 : i32, i32
  }
  func.func @transform_10(%arg0: i32) -> (i32, i32) {
    %c0_i32 = arith.constant 0 : i32
    %c0_i32_0 = arith.constant 0 : i32
    %c0_i32_1 = arith.constant 0 : i32
    return %c0_i32, %c0_i32_0 : i32, i32
  }
  func.func @transform_11(%arg0: i32) -> (i32, i32) {
    %c0_i32 = arith.constant 0 : i32
    %c0_i32_0 = arith.constant 0 : i32
    %c0_i32_1 = arith.constant 0 : i32
    return %c0_i32, %c0_i32_0 : i32, i32
  }
  func.func @transform_12(%arg0: i32) -> (i32, i32) {
    %c0_i32 = arith.constant 0 : i32
    %c0_i32_0 = arith.constant 0 : i32
    %c0_i32_1 = arith.constant 0 : i32
    return %c0_i32, %c0_i32_0 : i32, i32
  }
  func.func @transform_13(%arg0: i32) -> (i32, i32) {
    %c0_i32 = arith.constant 0 : i32
    %c0_i32_0 = arith.constant 0 : i32
    %c0_i32_1 = arith.constant 0 : i32
    return %c0_i32, %c0_i32_0 : i32, i32
  }
  func.func @transform_14(%arg0: i32) -> (i32, i32) {
    %c0_i32 = arith.constant 0 : i32
    %c0_i32_0 = arith.constant 0 : i32
    %c0_i32_1 = arith.constant 0 : i32
    return %c0_i32, %c0_i32_0 : i32, i32
  }
  func.func @transform_15(%arg0: i32) -> (i32, i32) {
    %c0_i32 = arith.constant 0 : i32
    %c0_i32_0 = arith.constant 0 : i32
    %c0_i32_1 = arith.constant 0 : i32
    return %c0_i32, %c0_i32_0 : i32, i32
  }
  func.func @transform_16(%arg0: i32) -> (i32, i32) {
    %c0_i32 = arith.constant 0 : i32
    %c0_i32_0 = arith.constant 0 : i32
    %c0_i32_1 = arith.constant 0 : i32
    return %c0_i32, %c0_i32_0 : i32, i32
  }
  func.func @transform_17(%arg0: i32) -> (i32, i32) {
    %c0_i32 = arith.constant 0 : i32
    %c0_i32_0 = arith.constant 0 : i32
    %c0_i32_1 = arith.constant 0 : i32
    return %c0_i32, %c0_i32_0 : i32, i32
  }
  func.func @transform_18(%arg0: i32) -> (i32, i32) {
    %c0_i32 = arith.constant 0 : i32
    %c0_i32_0 = arith.constant 0 : i32
    %c0_i32_1 = arith.constant 0 : i32
    return %c0_i32, %c0_i32_0 : i32, i32
  }
  func.func @transform_19(%arg0: i32) -> (i32, i32, i32) {
    %c0_i32 = arith.constant 0 : i32
    %c0_i32_0 = arith.constant 0 : i32
    %c0_i32_1 = arith.constant 0 : i32
    return %arg0, %c0_i32, %c0_i32_0 : i32, i32, i32
  }
}

</mosaic_0001>

<llo_original>
// kernel: tpu_custom_call.1
$region0: #{tpu_custom_call.1}
  #allocation0 [shape = 'u32[]', space=smem, size = 0x4, offset = 0x4, fixed_abs, tag = 'smem constant byte address 0x4 - core index']
  #allocation1 [shape = 'u32[72,128]{1,0:T(1,128)}', space=vmem, size = 0x9000, scoped, tag = 'internal scratch']
  %s0 = inlined_call_operand.hbm [shape: f32[2,16,128], index: 0, kind: input, shape index: {}]
  %s1 = inlined_call_operand.hbm [shape: f32[16,128], index: 1, kind: input, shape index: {}]
  %s2 = inlined_call_operand.hbm [shape: f32[2,1,16], index: 2, kind: input, shape index: {}]
  %s3 = inlined_call_operand.hbm [shape: f32[4,128], index: 3, kind: input, shape index: {}]
  %s4 = inlined_call_operand.hbm [shape: f32[4,128], index: 4, kind: input, shape index: {}]
  %s5 = inlined_call_operand.hbm [shape: bf16[4,7,128,128], index: 5, kind: input, shape index: {}]
  %s6 = inlined_call_operand.vmem [shape: f32[4,128], index: 6, kind: input, shape index: {}]
  %s7 = inlined_call_operand.hbm [shape: f32[1,128], index: 7, kind: input, shape index: {}]
  %s8 = inlined_call_operand.hbm [shape: f32[1,128], index: 8, kind: input, shape index: {}]
  %s9 = inlined_call_operand.hbm [shape: bf16[128,384], index: 9, kind: input, shape index: {}]
  %s10 = inlined_call_operand.vmem [shape: f32[1,384], index: 10, kind: input, shape index: {}]
  %s11 = inlined_call_operand.hbm [shape: bf16[128,128], index: 11, kind: input, shape index: {}]
  %s12 = inlined_call_operand.vmem [shape: f32[1,128], index: 12, kind: input, shape index: {}]
  %s13 = inlined_call_operand.vmem [shape: f32[1,128], index: 13, kind: input, shape index: {}]
  %s14 = inlined_call_operand.vmem [shape: f32[1,128], index: 14, kind: input, shape index: {}]
  %s15 = inlined_call_operand.hbm [shape: bf16[128,128], index: 15, kind: input, shape index: {}]
  %s16 = inlined_call_operand.vmem [shape: f32[1,128], index: 16, kind: input, shape index: {}]
  %s17 = inlined_call_operand.hbm [shape: bf16[128,128], index: 17, kind: input, shape index: {}]
  %s18 = inlined_call_operand.vmem [shape: f32[1,128], index: 18, kind: input, shape index: {}]
  %s19 = inlined_call_operand.hbm [shape: f32[2,16,128], index: 19, kind: output, shape index: {}]
  %s20 = sld [smem:[#allocation0]]
  $region157: #{tpu_custom_call.1} parent=0
    _
  %s22 = ssub.s32 1, %s20
  %s23 = scalar_select 0, %s22, %s20
  $region1: #{tpu_custom_call.1} parent=0
    #allocation2 [shape = 'u8[16384]{0}', space=vmem, size = 0x4000, scoped, tag = 'input window, operand 0']
    #allocation3 [shape = 's32[2]{0}', space=sflag, size = 0x8, scoped, tag = 'scoped memory for tpu_custom_call.1']
    #allocation4 [shape = 's32[2]{0}', space=sflag, size = 0x8, scoped, tag = 'scoped memory for tpu_custom_call.1']
    #allocation5 [shape = 'u8[8192]{0}', space=vmem, size = 0x2000, scoped, tag = 'input window, operand 1, single buffered']
    #allocation6 [shape = 's32[1]{0}', space=sflag, size = 0x4, scoped, tag = 'scoped memory for tpu_custom_call.1']
    #allocation7 [shape = 'u8[1024]{0}', space=vmem, size = 0x400, scoped, tag = 'input window, operand 2']
    #allocation8 [shape = 'u8[2048]{0}', space=vmem, size = 0x800, scoped, tag = 'input window, operand 3, single buffered']
    #allocation9 [shape = 'u8[2048]{0}', space=vmem, size = 0x800, scoped, tag = 'input window, operand 4, single buffered']
    #allocation10 [shape = 's32[1]{0}', space=sflag, size = 0x4, scoped, tag = 'scoped memory for tpu_custom_call.1']
    #allocation11 [shape = 'u8[917504]{0}', space=vmem, size = 0xe0000, scoped, tag = 'input window, operand 5, single buffered']
    #allocation12 [shape = 'u8[512]{0}', space=vmem, size = 0x400, scoped, tag = 'input window, operand 7, single buffered']
    #allocation13 [shape = 's32[1]{0}', space=sflag, size = 0x4, scoped, tag = 'scoped memory for tpu_custom_call.1']
    #allocation14 [shape = 'u8[512]{0}', space=vmem, size = 0x400, scoped, tag = 'input window, operand 8, single buffered']
    #allocation15 [shape = 'u8[98304]{0}', space=vmem, size = 0x18000, scoped, tag = 'input window, operand 9, single buffered']
    #allocation16 [shape = 's32[1]{0}', space=sflag, size = 0x4, scoped, tag = 'scoped memory for tpu_custom_call.1']
    #allocation17 [shape = 'u8[32768]{0}', space=vmem, size = 0x8000, scoped, tag = 'input window, operand 11, single buffered']
    #allocation18 [shape = 'u8[32768]{0}', space=vmem, size = 0x8000, scoped, tag = 'input window, operand 15, single buffered']
    #allocation19 [shape = 's32[1]{0}', space=sflag, size = 0x4, scoped, tag = 'scoped memory for tpu_custom_call.1']
    #allocation20 [shape = 'u8[32768]{0}', space=vmem, size = 0x8000, scoped, tag = 'input window, operand 17, single buffered']
    #allocation21 [shape = 'u8[16384]{0}', space=vmem, size = 0x4000, scoped, tag = 'output window, operand 0']
    %24 = vsyncpa [#allocation3], 0
    %s25 = scalar_lea.sflag [#allocation3], 1
    %26 = vsyncpa %s25, 0
    %27 = vsyncpa [#allocation6], 0
    %28 = vsyncpa [#allocation10], 0
    %29 = vsyncpa [#allocation13], 0
    %30 = vsyncpa [#allocation16], 0
    %31 = vsyncpa [#allocation19], 0
    %32 = vsyncpa [#allocation4], 0
    %s33 = scalar_lea.sflag [#allocation4], 1
    %34 = vsyncpa %s33, 0
    loop: start=0, step=1, limit=4
    $region2: #{tpu_custom_call.1} parent=1 // loop_pre_header
      _
    $region3: #{tpu_custom_call.1} parent=1 // loop_header
      %s36 = sphi 0, %s40
      %p37 = scmp.ge.s32.totalorder %s36, 4
      %s46 = sphi 0, %s48
      %s49 = sphi 0, %s46
      %s50 = sphi 0, %s49
      %s66 = sphi 0, %s50
      %s70 = sphi 0, %s70
      %s72 = sphi 0, %s70
      %s73 = sphi 0, %s72
      %s87 = sphi 0, %s73
      %s93 = sphi 0, %s95
      %s96 = sphi 0, %s93
      %s97 = sphi 0, %s96
      %s113 = sphi 0, %s97
      %s117 = sphi 0, %s117
      %s119 = sphi 0, %s117
      %s120 = sphi 0, %s119
      %s134 = sphi 0, %s120
      %s138 = sphi 0, %s138
      %s140 = sphi 0, %s138
      %s141 = sphi 0, %s140
      %s155 = sphi 0, %s141
      %s159 = sphi 0, %s159
      %s161 = sphi 0, %s159
      %s162 = sphi 0, %s161
      %s176 = sphi 0, %s162
      %s180 = sphi 0, %s180
      %s182 = sphi 0, %s180
      %s183 = sphi 0, %s182
      %s197 = sphi 0, %s183
      %s201 = sphi 0, %s201
      %s203 = sphi 0, %s201
      %s204 = sphi 0, %s203
      %s218 = sphi 0, %s204
      %s222 = sphi 0, %s222
      %s224 = sphi 0, %s222
      %s225 = sphi 0, %s224
      %s239 = sphi 0, %s225
      %s243 = sphi 0, %s243
      %s245 = sphi 0, %s243
      %s246 = sphi 0, %s245
      %s260 = sphi 0, %s246
      %s264 = sphi 0, %s264
      %s266 = sphi 0, %s264
      %s267 = sphi 0, %s266
      %s281 = sphi 0, %s267
      %s285 = sphi 0, %s285
      %s287 = sphi 0, %s285
      %s288 = sphi 0, %s287
      %s302 = sphi 0, %s288
      %s306 = sphi 0, %s306
      %s308 = sphi 0, %s306
      %s309 = sphi 0, %s308
      %s323 = sphi 0, %s309
      %s327 = sphi 0, %s327
      %s329 = sphi 0, %s327
      %s330 = sphi 0, %s329
      %s344 = sphi 0, %s330
      %s348 = sphi 0, %s348
      %s350 = sphi 0, %s348
      %s351 = sphi 0, %s350
      %s365 = sphi 0, %s351
      %s369 = sphi 0, %s369
      %s371 = sphi 0, %s369
      %s372 = sphi 0, %s371
      %s386 = sphi 0, %s372
      %s390 = sphi 0, %s390
      %s392 = sphi 0, %s390
      %s393 = sphi 0, %s392
      %s407 = sphi 0, %s393
      %s411 = sphi 0, %s411
      %s413 = sphi 0, %s411
      %s414 = sphi 0, %s413
      %s428 = sphi 0, %s414
      %s432 = sphi 0, %s432
      %s434 = sphi 0, %s432
      %s435 = sphi 0, %s434
      %s449 = sphi 0, %s435
      %s455 = sphi 0, %s457
      %s458 = sphi 0, %s455
      %s459 = sphi 0, %s458
      %s475 = sphi 0, %s459
    $region4: #{tpu_custom_call.1} parent=1 // loop_header_branch
      %39 = sbr.rel (%p37) target = $region8
    $region5: #{tpu_custom_call.1} parent=1 // loop_body
      %s41 = ssub.s32 %s36, 1
      %s42 = ssub.s32 %s36, 2
      %s43 = sadd.s32 %s36, 1
      %s44 = ssub.s32 %s36, %s43
      %p45 = scmp.eq.s32.totalorder %s44, 0
      %s47 = sadd.s32 %s46, 1
      %s48 = scalar_select %p45, %s46, %s47
      %p51 = pneg %p45
      %p52 = scmp.eq.s32.totalorder %s36, 1
      %p53 = por %p51, %p52
      %p54 = scmp.ne.s32.totalorder %s46, %s49
      %p55 = scmp.eq.s32.totalorder %s36, 0
      %p56 = por %p54, %p55
      %p57 = scmp.ne.s32.totalorder %s46, %s49
      %p58 = scmp.eq.s32.totalorder %s41, 1
      %p59 = por %p57, %p58
      %p60 = scmp.ne.s32.totalorder %s49, %s50
      %p61 = scmp.eq.s32.totalorder %s41, 0
      %p62 = por %p60, %p61
      %p63 = scmp.ne.s32.totalorder %s49, %s50
      %p64 = scmp.eq.s32.totalorder %s42, 1
      %p65 = por %p63, %p64
      %p67 = scmp.ne.s32.totalorder %s50, %s66
      %p68 = scmp.eq.s32.totalorder %s42, 0
      %p69 = por %p67, %p68
      %s71 = sadd.s32 %s70, 1
      %p74 = scmp.eq.s32.totalorder %s36, 1
      %p75 = scmp.ne.s32.totalorder %s70, %s72
      %p76 = scmp.eq.s32.totalorder %s36, 0
      %p77 = por %p75, %p76
      %p78 = scmp.ne.s32.totalorder %s70, %s72
      %p79 = scmp.eq.s32.totalorder %s41, 1
      %p80 = por %p78, %p79
      %p81 = scmp.ne.s32.totalorder %s72, %s73
      %p82 = scmp.eq.s32.totalorder %s41, 0
      %p83 = por %p81, %p82
      %p84 = scmp.ne.s32.totalorder %s72, %s73
      %p85 = scmp.eq.s32.totalorder %s42, 1
      %p86 = por %p84, %p85
      %p88 = scmp.ne.s32.totalorder %s73, %s87
      %p89 = scmp.eq.s32.totalorder %s42, 0
      %p90 = por %p88, %p89
      %s91 = ssub.s32 %s36, %s43
      %p92 = scmp.eq.s32.totalorder %s91, 0
      %s94 = sadd.s32 %s93, 1
      %s95 = scalar_select %p92, %s93, %s94
      %p98 = pneg %p92
      %p99 = scmp.eq.s32.totalorder %s36, 1
      %p100 = por %p98, %p99
      %p101 = scmp.ne.s32.totalorder %s93, %s96
      %p102 = scmp.eq.s32.totalorder %s36, 0
      %p103 = por %p101, %p102
      %p104 = scmp.ne.s32.totalorder %s93, %s96
      %p105 = scmp.eq.s32.totalorder %s41, 1
      %p106 = por %p104, %p105
      %p107 = scmp.ne.s32.totalorder %s96, %s97
      %p108 = scmp.eq.s32.totalorder %s41, 0
      %p109 = por %p107, %p108
      %p110 = scmp.ne.s32.totalorder %s96, %s97
      %p111 = scmp.eq.s32.totalorder %s42, 1
      %p112 = por %p110, %p111
      %p114 = scmp.ne.s32.totalorder %s97, %s113
      %p115 = scmp.eq.s32.totalorder %s42, 0
      %p116 = por %p114, %p115
      %s118 = sadd.s32 %s117, 1
      %p121 = scmp.eq.s32.totalorder %s36, 1
      %p122 = scmp.ne.s32.totalorder %s117, %s119
      %p123 = scmp.eq.s32.totalorder %s36, 0
      %p124 = por %p122, %p123
      %p125 = scmp.ne.s32.totalorder %s117, %s119
      %p126 = scmp.eq.s32.totalorder %s41, 1
      %p127 = por %p125, %p126
      %p128 = scmp.ne.s32.totalorder %s119, %s120
      %p129 = scmp.eq.s32.totalorder %s41, 0
      %p130 = por %p128, %p129
      %p131 = scmp.ne.s32.totalorder %s119, %s120
      %p132 = scmp.eq.s32.totalorder %s42, 1
      %p133 = por %p131, %p132
      %p135 = scmp.ne.s32.totalorder %s120, %s134
      %p136 = scmp.eq.s32.totalorder %s42, 0
      %p137 = por %p135, %p136
      %s139 = sadd.s32 %s138, 1
      %p142 = scmp.eq.s32.totalorder %s36, 1
      %p143 = scmp.ne.s32.totalorder %s138, %s140
      %p144 = scmp.eq.s32.totalorder %s36, 0
      %p145 = por %p143, %p144
      %p146 = scmp.ne.s32.totalorder %s138, %s140
      %p147 = scmp.eq.s32.totalorder %s41, 1
      %p148 = por %p146, %p147
      %p149 = scmp.ne.s32.totalorder %s140, %s141
      %p150 = scmp.eq.s32.totalorder %s41, 0
      %p151 = por %p149, %p150
      %p152 = scmp.ne.s32.totalorder %s140, %s141
      %p153 = scmp.eq.s32.totalorder %s42, 1
      %p154 = por %p152, %p153
      %p156 = scmp.ne.s32.totalorder %s141, %s155
      %p157 = scmp.eq.s32.totalorder %s42, 0
      %p158 = por %p156, %p157
      %s160 = sadd.s32 %s159, 1
      %p163 = scmp.eq.s32.totalorder %s36, 1
      %p164 = scmp.ne.s32.totalorder %s159, %s161
      %p165 = scmp.eq.s32.totalorder %s36, 0
      %p166 = por %p164, %p165
      %p167 = scmp.ne.s32.totalorder %s159, %s161
      %p168 = scmp.eq.s32.totalorder %s41, 1
      %p169 = por %p167, %p168
      %p170 = scmp.ne.s32.totalorder %s161, %s162
      %p171 = scmp.eq.s32.totalorder %s41, 0
      %p172 = por %p170, %p171
      %p173 = scmp.ne.s32.totalorder %s161, %s162
      %p174 = scmp.eq.s32.totalorder %s42, 1
      %p175 = por %p173, %p174
      %p177 = scmp.ne.s32.totalorder %s162, %s176
      %p178 = scmp.eq.s32.totalorder %s42, 0
      %p179 = por %p177, %p178
      %s181 = sadd.s32 %s180, 1
      %p184 = scmp.eq.s32.totalorder %s36, 1
      %p185 = scmp.ne.s32.totalorder %s180, %s182
      %p186 = scmp.eq.s32.totalorder %s36, 0
      %p187 = por %p185, %p186
      %p188 = scmp.ne.s32.totalorder %s180, %s182
      %p189 = scmp.eq.s32.totalorder %s41, 1
      %p190 = por %p188, %p189
      %p191 = scmp.ne.s32.totalorder %s182, %s183
      %p192 = scmp.eq.s32.totalorder %s41, 0
      %p193 = por %p191, %p192
      %p194 = scmp.ne.s32.totalorder %s182, %s183
      %p195 = scmp.eq.s32.totalorder %s42, 1
      %p196 = por %p194, %p195
      %p198 = scmp.ne.s32.totalorder %s183, %s197
      %p199 = scmp.eq.s32.totalorder %s42, 0
      %p200 = por %p198, %p199
      %s202 = sadd.s32 %s201, 1
      %p205 = scmp.eq.s32.totalorder %s36, 1
      %p206 = scmp.ne.s32.totalorder %s201, %s203
      %p207 = scmp.eq.s32.totalorder %s36, 0
      %p208 = por %p206, %p207
      %p209 = scmp.ne.s32.totalorder %s201, %s203
      %p210 = scmp.eq.s32.totalorder %s41, 1
      %p211 = por %p209, %p210
      %p212 = scmp.ne.s32.totalorder %s203, %s204
      %p213 = scmp.eq.s32.totalorder %s41, 0
      %p214 = por %p212, %p213
      %p215 = scmp.ne.s32.totalorder %s203, %s204
      %p216 = scmp.eq.s32.totalorder %s42, 1
      %p217 = por %p215, %p216
      %p219 = scmp.ne.s32.totalorder %s204, %s218
      %p220 = scmp.eq.s32.totalorder %s42, 0
      %p221 = por %p219, %p220
      %s223 = sadd.s32 %s222, 1
      %p226 = scmp.eq.s32.totalorder %s36, 1
      %p227 = scmp.ne.s32.totalorder %s222, %s224
      %p228 = scmp.eq.s32.totalorder %s36, 0
      %p229 = por %p227, %p228
      %p230 = scmp.ne.s32.totalorder %s222, %s224
      %p231 = scmp.eq.s32.totalorder %s41, 1
      %p232 = por %p230, %p231
      %p233 = scmp.ne.s32.totalorder %s224, %s225
      %p234 = scmp.eq.s32.totalorder %s41, 0
      %p235 = por %p233, %p234
      %p236 = scmp.ne.s32.totalorder %s224, %s225
      %p237 = scmp.eq.s32.totalorder %s42, 1
      %p238 = por %p236, %p237
      %p240 = scmp.ne.s32.totalorder %s225, %s239
      %p241 = scmp.eq.s32.totalorder %s42, 0
      %p242 = por %p240, %p241
      %s244 = sadd.s32 %s243, 1
      %p247 = scmp.eq.s32.totalorder %s36, 1
      %p248 = scmp.ne.s32.totalorder %s243, %s245
      %p249 = scmp.eq.s32.totalorder %s36, 0
      %p250 = por %p248, %p249
      %p251 = scmp.ne.s32.totalorder %s243, %s245
      %p252 = scmp.eq.s32.totalorder %s41, 1
      %p253 = por %p251, %p252
      %p254 = scmp.ne.s32.totalorder %s245, %s246
      %p255 = scmp.eq.s32.totalorder %s41, 0
      %p256 = por %p254, %p255
      %p257 = scmp.ne.s32.totalorder %s245, %s246
      %p258 = scmp.eq.s32.totalorder %s42, 1
      %p259 = por %p257, %p258
      %p261 = scmp.ne.s32.totalorder %s246, %s260
      %p262 = scmp.eq.s32.totalorder %s42, 0
      %p263 = por %p261, %p262
      %s265 = sadd.s32 %s264, 1
      %p268 = scmp.eq.s32.totalorder %s36, 1
      %p269 = scmp.ne.s32.totalorder %s264, %s266
      %p270 = scmp.eq.s32.totalorder %s36, 0
      %p271 = por %p269, %p270
      %p272 = scmp.ne.s32.totalorder %s264, %s266
      %p273 = scmp.eq.s32.totalorder %s41, 1
      %p274 = por %p272, %p273
      %p275 = scmp.ne.s32.totalorder %s266, %s267
      %p276 = scmp.eq.s32.totalorder %s41, 0
      %p277 = por %p275, %p276
      %p278 = scmp.ne.s32.totalorder %s266, %s267
      %p279 = scmp.eq.s32.totalorder %s42, 1
      %p280 = por %p278, %p279
      %p282 = scmp.ne.s32.totalorder %s267, %s281
      %p283 = scmp.eq.s32.totalorder %s42, 0
      %p284 = por %p282, %p283
      %s286 = sadd.s32 %s285, 1
      %p289 = scmp.eq.s32.totalorder %s36, 1
      %p290 = scmp.ne.s32.totalorder %s285, %s287
      %p291 = scmp.eq.s32.totalorder %s36, 0
      %p292 = por %p290, %p291
      %p293 = scmp.ne.s32.totalorder %s285, %s287
      %p294 = scmp.eq.s32.totalorder %s41, 1
      %p295 = por %p293, %p294
      %p296 = scmp.ne.s32.totalorder %s287, %s288
      %p297 = scmp.eq.s32.totalorder %s41, 0
      %p298 = por %p296, %p297
      %p299 = scmp.ne.s32.totalorder %s287, %s288
      %p300 = scmp.eq.s32.totalorder %s42, 1
      %p301 = por %p299, %p300
      %p303 = scmp.ne.s32.totalorder %s288, %s302
      %p304 = scmp.eq.s32.totalorder %s42, 0
      %p305 = por %p303, %p304
      %s307 = sadd.s32 %s306, 1
      %p310 = scmp.eq.s32.totalorder %s36, 1
      %p311 = scmp.ne.s32.totalorder %s306, %s308
      %p312 = scmp.eq.s32.totalorder %s36, 0
      %p313 = por %p311, %p312
      %p314 = scmp.ne.s32.totalorder %s306, %s308
      %p315 = scmp.eq.s32.totalorder %s41, 1
      %p316 = por %p314, %p315
      %p317 = scmp.ne.s32.totalorder %s308, %s309
      %p318 = scmp.eq.s32.totalorder %s41, 0
      %p319 = por %p317, %p318
      %p320 = scmp.ne.s32.totalorder %s308, %s309
      %p321 = scmp.eq.s32.totalorder %s42, 1
      %p322 = por %p320, %p321
      %p324 = scmp.ne.s32.totalorder %s309, %s323
      %p325 = scmp.eq.s32.totalorder %s42, 0
      %p326 = por %p324, %p325
      %s328 = sadd.s32 %s327, 1
      %p331 = scmp.eq.s32.totalorder %s36, 1
      %p332 = scmp.ne.s32.totalorder %s327, %s329
      %p333 = scmp.eq.s32.totalorder %s36, 0
      %p334 = por %p332, %p333
      %p335 = scmp.ne.s32.totalorder %s327, %s329
      %p336 = scmp.eq.s32.totalorder %s41, 1
      %p337 = por %p335, %p336
      %p338 = scmp.ne.s32.totalorder %s329, %s330
      %p339 = scmp.eq.s32.totalorder %s41, 0
      %p340 = por %p338, %p339
      %p341 = scmp.ne.s32.totalorder %s329, %s330
      %p342 = scmp.eq.s32.totalorder %s42, 1
      %p343 = por %p341, %p342
      %p345 = scmp.ne.s32.totalorder %s330, %s344
      %p346 = scmp.eq.s32.totalorder %s42, 0
      %p347 = por %p345, %p346
      %s349 = sadd.s32 %s348, 1
      %p352 = scmp.eq.s32.totalorder %s36, 1
      %p353 = scmp.ne.s32.totalorder %s348, %s350
      %p354 = scmp.eq.s32.totalorder %s36, 0
      %p355 = por %p353, %p354
      %p356 = scmp.ne.s32.totalorder %s348, %s350
      %p357 = scmp.eq.s32.totalorder %s41, 1
      %p358 = por %p356, %p357
      %p359 = scmp.ne.s32.totalorder %s350, %s351
      %p360 = scmp.eq.s32.totalorder %s41, 0
      %p361 = por %p359, %p360
      %p362 = scmp.ne.s32.totalorder %s350, %s351
      %p363 = scmp.eq.s32.totalorder %s42, 1
      %p364 = por %p362, %p363
      %p366 = scmp.ne.s32.totalorder %s351, %s365
      %p367 = scmp.eq.s32.totalorder %s42, 0
      %p368 = por %p366, %p367
      %s370 = sadd.s32 %s369, 1
      %p373 = scmp.eq.s32.totalorder %s36, 1
      %p374 = scmp.ne.s32.totalorder %s369, %s371
      %p375 = scmp.eq.s32.totalorder %s36, 0
      %p376 = por %p374, %p375
      %p377 = scmp.ne.s32.totalorder %s369, %s371
      %p378 = scmp.eq.s32.totalorder %s41, 1
      %p379 = por %p377, %p378
      %p380 = scmp.ne.s32.totalorder %s371, %s372
      %p381 = scmp.eq.s32.totalorder %s41, 0
      %p382 = por %p380, %p381
      %p383 = scmp.ne.s32.totalorder %s371, %s372
      %p384 = scmp.eq.s32.totalorder %s42, 1
      %p385 = por %p383, %p384
      %p387 = scmp.ne.s32.totalorder %s372, %s386
      %p388 = scmp.eq.s32.totalorder %s42, 0
      %p389 = por %p387, %p388
      %s391 = sadd.s32 %s390, 1
      %p394 = scmp.eq.s32.totalorder %s36, 1
      %p395 = scmp.ne.s32.totalorder %s390, %s392
      %p396 = scmp.eq.s32.totalorder %s36, 0
      %p397 = por %p395, %p396
      %p398 = scmp.ne.s32.totalorder %s390, %s392
      %p399 = scmp.eq.s32.totalorder %s41, 1
      %p400 = por %p398, %p399
      %p401 = scmp.ne.s32.totalorder %s392, %s393
      %p402 = scmp.eq.s32.totalorder %s41, 0
      %p403 = por %p401, %p402
      %p404 = scmp.ne.s32.totalorder %s392, %s393
      %p405 = scmp.eq.s32.totalorder %s42, 1
      %p406 = por %p404, %p405
      %p408 = scmp.ne.s32.totalorder %s393, %s407
      %p409 = scmp.eq.s32.totalorder %s42, 0
      %p410 = por %p408, %p409
      %s412 = sadd.s32 %s411, 1
      %p415 = scmp.eq.s32.totalorder %s36, 1
      %p416 = scmp.ne.s32.totalorder %s411, %s413
      %p417 = scmp.eq.s32.totalorder %s36, 0
      %p418 = por %p416, %p417
      %p419 = scmp.ne.s32.totalorder %s411, %s413
      %p420 = scmp.eq.s32.totalorder %s41, 1
      %p421 = por %p419, %p420
      %p422 = scmp.ne.s32.totalorder %s413, %s414
      %p423 = scmp.eq.s32.totalorder %s41, 0
      %p424 = por %p422, %p423
      %p425 = scmp.ne.s32.totalorder %s413, %s414
      %p426 = scmp.eq.s32.totalorder %s42, 1
      %p427 = por %p425, %p426
      %p429 = scmp.ne.s32.totalorder %s414, %s428
      %p430 = scmp.eq.s32.totalorder %s42, 0
      %p431 = por %p429, %p430
      %s433 = sadd.s32 %s432, 1
      %p436 = scmp.eq.s32.totalorder %s36, 1
      %p437 = scmp.ne.s32.totalorder %s432, %s434
      %p438 = scmp.eq.s32.totalorder %s36, 0
      %p439 = por %p437, %p438
      %p440 = scmp.ne.s32.totalorder %s432, %s434
      %p441 = scmp.eq.s32.totalorder %s41, 1
      %p442 = por %p440, %p441
      %p443 = scmp.ne.s32.totalorder %s434, %s435
      %p444 = scmp.eq.s32.totalorder %s41, 0
      %p445 = por %p443, %p444
      %p446 = scmp.ne.s32.totalorder %s434, %s435
      %p447 = scmp.eq.s32.totalorder %s42, 1
      %p448 = por %p446, %p447
      %p450 = scmp.ne.s32.totalorder %s435, %s449
      %p451 = scmp.eq.s32.totalorder %s42, 0
      %p452 = por %p450, %p451
      %s453 = ssub.s32 %s36, %s43
      %p454 = scmp.eq.s32.totalorder %s453, 0
      %s456 = sadd.s32 %s455, 1
      %s457 = scalar_select %p454, %s455, %s456
      %p460 = pneg %p454
      %p461 = scmp.eq.s32.totalorder %s36, 1
      %p462 = por %p460, %p461
      %p463 = scmp.ne.s32.totalorder %s455, %s458
      %p464 = scmp.eq.s32.totalorder %s36, 0
      %p465 = por %p463, %p464
      %p466 = scmp.ne.s32.totalorder %s455, %s458
      %p467 = scmp.eq.s32.totalorder %s41, 1
      %p468 = por %p466, %p467
      %p469 = scmp.ne.s32.totalorder %s458, %s459
      %p470 = scmp.eq.s32.totalorder %s41, 0
      %p471 = por %p469, %p470
      %p472 = scmp.ne.s32.totalorder %s458, %s459
      %p473 = scmp.eq.s32.totalorder %s42, 1
      %p474 = por %p472, %p473
      %p476 = scmp.ne.s32.totalorder %s459, %s475
      %p477 = scmp.eq.s32.totalorder %s42, 0
      %p478 = por %p476, %p477
      %p479 = scmp.le.s32.totalorder 1, %s36
      %p480 = scmp.lt.s32.totalorder %s36, 3
      %p481 = pnand %p479, %p480
      %p482 = pneg %p481
      // Predicated region
      $region9: #{tpu_custom_call.1} parent=5 // pred_check
        _
      $region10: #{tpu_custom_call.1} parent=5 // pred_check_branch
        %484 = sbr.rel (%p481) target = $region12
      $region11: #{tpu_custom_call.1} parent=5 // pred_region
        %s485 = ssub.s32 %s36, 1
        // Predicated region
        $region13: #{tpu_custom_call.1} parent=11 // pred_check
          %p486 = pneg %p83
        $region14: #{tpu_custom_call.1} parent=11 // pred_check_branch
          %488 = sbr.rel (%p486) target = $region16
        $region15: #{tpu_custom_call.1} parent=11 // pred_region
          %490 = vsyncadd [#allocation6], 0
          %s491 = sshll.u32 %s1, 4
          %s492 = int_to_ptr.hbm [resolvable:$true] %s491
          %s493 = sshll.u32 [#allocation5], 4
          %s494 = int_to_ptr.vmem [resolvable:$true] %s493
          %499 = dma.hbm_to_vmem [thread:$0]  %s492, 256, %s494, [#allocation6], 128, 128, 8
        $region16: #{tpu_custom_call.1} parent=11 // pred_fallthru
          _
        // Predicated region
        $region17: #{tpu_custom_call.1} parent=11 // pred_check
          %p500 = pneg %p130
        $region18: #{tpu_custom_call.1} parent=11 // pred_check_branch
          %502 = sbr.rel (%p500) target = $region20
        $region19: #{tpu_custom_call.1} parent=11 // pred_region
          %504 = vsyncadd [#allocation6], 0
          %s506 = sshll.u32 %s3, 4
          %s507 = int_to_ptr.hbm [resolvable:$true] %s506
          %s508 = sshll.u32 [#allocation8], 4
          %s509 = int_to_ptr.vmem [resolvable:$true] %s508
          %511 = dma.hbm_to_vmem [thread:$0]  %s507, 64, %s509, [#allocation6]
        $region20: #{tpu_custom_call.1} parent=11 // pred_fallthru
          _
        // Predicated region
        $region21: #{tpu_custom_call.1} parent=11 // pred_check
          %p512 = pneg %p151
        $region22: #{tpu_custom_call.1} parent=11 // pred_check_branch
          %514 = sbr.rel (%p512) target = $region24
        $region23: #{tpu_custom_call.1} parent=11 // pred_region
          %516 = vsyncadd [#allocation10], 0
          %s518 = sshll.u32 %s4, 4
          %s519 = int_to_ptr.hbm [resolvable:$true] %s518
          %s520 = sshll.u32 [#allocation9], 4
          %s521 = int_to_ptr.vmem [resolvable:$true] %s520
          %523 = dma.hbm_to_vmem [thread:$0]  %s519, 64, %s521, [#allocation10]
        $region24: #{tpu_custom_call.1} parent=11 // pred_fallthru
          _
        // Predicated region
        $region25: #{tpu_custom_call.1} parent=11 // pred_check
          %p524 = pneg %p172
        $region26: #{tpu_custom_call.1} parent=11 // pred_check_branch
          %526 = sbr.rel (%p524) target = $region28
        $region27: #{tpu_custom_call.1} parent=11 // pred_region
          %528 = vsyncadd [#allocation10], 0
          %s529 = sshll.u32 %s5, 4
          %s530 = int_to_ptr.hbm [resolvable:$true] %s529
          %s531 = sshll.u32 [#allocation11], 4
          %s532 = int_to_ptr.vmem [resolvable:$true] %s531
          %537 = dma.hbm_to_vmem [thread:$0]  %s530, 28672, %s532, [#allocation10], 64, 64, 4
        $region28: #{tpu_custom_call.1} parent=11 // pred_fallthru
          _
        // Predicated region
        $region29: #{tpu_custom_call.1} parent=11 // pred_check
          %p538 = pneg %p193
        $region30: #{tpu_custom_call.1} parent=11 // pred_check_branch
          %540 = sbr.rel (%p538) target = $region32
        $region31: #{tpu_custom_call.1} parent=11 // pred_region
          _
        $region32: #{tpu_custom_call.1} parent=11 // pred_fallthru
          _
        // Predicated region
        $region33: #{tpu_custom_call.1} parent=11 // pred_check
          %p541 = pneg %p214
        $region34: #{tpu_custom_call.1} parent=11 // pred_check_branch
          %543 = sbr.rel (%p541) target = $region36
        $region35: #{tpu_custom_call.1} parent=11 // pred_region
          %545 = vsyncadd [#allocation13], 0
          %s547 = sshll.u32 %s7, 4
          %s548 = int_to_ptr.hbm [resolvable:$true] %s547
          %s549 = sshll.u32 [#allocation12], 4
          %s550 = int_to_ptr.vmem [resolvable:$true] %s549
          %552 = dma.hbm_to_vmem [thread:$0]  %s548, 16, %s550, [#allocation13]
        $region36: #{tpu_custom_call.1} parent=11 // pred_fallthru
          _
        // Predicated region
        $region37: #{tpu_custom_call.1} parent=11 // pred_check
          %p553 = pneg %p235
        $region38: #{tpu_custom_call.1} parent=11 // pred_check_branch
          %555 = sbr.rel (%p553) target = $region40
        $region39: #{tpu_custom_call.1} parent=11 // pred_region
          %557 = vsyncadd [#allocation13], 0
          %s559 = sshll.u32 %s8, 4
          %s560 = int_to_ptr.hbm [resolvable:$true] %s559
          %s561 = sshll.u32 [#allocation14], 4
          %s562 = int_to_ptr.vmem [resolvable:$true] %s561
          %564 = dma.hbm_to_vmem [thread:$0]  %s560, 16, %s562, [#allocation13]
        $region40: #{tpu_custom_call.1} parent=11 // pred_fallthru
          _
        // Predicated region
        $region41: #{tpu_custom_call.1} parent=11 // pred_check
          %p565 = pneg %p256
        $region42: #{tpu_custom_call.1} parent=11 // pred_check_branch
          %567 = sbr.rel (%p565) target = $region44
        $region43: #{tpu_custom_call.1} parent=11 // pred_region
          %569 = vsyncadd [#allocation16], 0
          %s570 = sshll.u32 %s9, 4
          %s571 = int_to_ptr.hbm [resolvable:$true] %s570
          %s572 = sshll.u32 [#allocation15], 4
          %s573 = int_to_ptr.vmem [resolvable:$true] %s572
          %578 = dma.hbm_to_vmem [thread:$0]  %s571, 3072, %s573, [#allocation16], 192, 192, 12
        $region44: #{tpu_custom_call.1} parent=11 // pred_fallthru
          _
        // Predicated region
        $region45: #{tpu_custom_call.1} parent=11 // pred_check
          %p579 = pneg %p277
        $region46: #{tpu_custom_call.1} parent=11 // pred_check_branch
          %581 = sbr.rel (%p579) target = $region48
        $region47: #{tpu_custom_call.1} parent=11 // pred_region
          _
        $region48: #{tpu_custom_call.1} parent=11 // pred_fallthru
          _
        // Predicated region
        $region49: #{tpu_custom_call.1} parent=11 // pred_check
          %p582 = pneg %p298
        $region50: #{tpu_custom_call.1} parent=11 // pred_check_branch
          %584 = sbr.rel (%p582) target = $region52
        $region51: #{tpu_custom_call.1} parent=11 // pred_region
          %586 = vsyncadd [#allocation16], 0
          %s587 = sshll.u32 %s11, 4
          %s588 = int_to_ptr.hbm [resolvable:$true] %s587
          %s589 = sshll.u32 [#allocation17], 4
          %s590 = int_to_ptr.vmem [resolvable:$true] %s589
          %595 = dma.hbm_to_vmem [thread:$0]  %s588, 1024, %s590, [#allocation16], 64, 64, 4
        $region52: #{tpu_custom_call.1} parent=11 // pred_fallthru
          _
        // Predicated region
        $region53: #{tpu_custom_call.1} parent=11 // pred_check
          %p596 = pneg %p319
        $region54: #{tpu_custom_call.1} parent=11 // pred_check_branch
          %598 = sbr.rel (%p596) target = $region56
        $region55: #{tpu_custom_call.1} parent=11 // pred_region
          _
        $region56: #{tpu_custom_call.1} parent=11 // pred_fallthru
          _
        // Predicated region
        $region57: #{tpu_custom_call.1} parent=11 // pred_check
          %p599 = pneg %p340
        $region58: #{tpu_custom_call.1} parent=11 // pred_check_branch
          %601 = sbr.rel (%p599) target = $region60
        $region59: #{tpu_custom_call.1} parent=11 // pred_region
          _
        $region60: #{tpu_custom_call.1} parent=11 // pred_fallthru
          _
        // Predicated region
        $region61: #{tpu_custom_call.1} parent=11 // pred_check
          %p602 = pneg %p361
        $region62: #{tpu_custom_call.1} parent=11 // pred_check_branch
          %604 = sbr.rel (%p602) target = $region64
        $region63: #{tpu_custom_call.1} parent=11 // pred_region
          _
        $region64: #{tpu_custom_call.1} parent=11 // pred_fallthru
          _
        // Predicated region
        $region65: #{tpu_custom_call.1} parent=11 // pred_check
          %p605 = pneg %p382
        $region66: #{tpu_custom_call.1} parent=11 // pred_check_branch
          %607 = sbr.rel (%p605) target = $region68
        $region67: #{tpu_custom_call.1} parent=11 // pred_region
          %609 = vsyncadd [#allocation19], 0
          %s610 = sshll.u32 %s15, 4
          %s611 = int_to_ptr.hbm [resolvable:$true] %s610
          %s612 = sshll.u32 [#allocation18], 4
          %s613 = int_to_ptr.vmem [resolvable:$true] %s612
          %618 = dma.hbm_to_vmem [thread:$0]  %s611, 1024, %s613, [#allocation19], 64, 64, 4
        $region68: #{tpu_custom_call.1} parent=11 // pred_fallthru
          _
        // Predicated region
        $region69: #{tpu_custom_call.1} parent=11 // pred_check
          %p619 = pneg %p403
        $region70: #{tpu_custom_call.1} parent=11 // pred_check_branch
          %621 = sbr.rel (%p619) target = $region72
        $region71: #{tpu_custom_call.1} parent=11 // pred_region
          _
        $region72: #{tpu_custom_call.1} parent=11 // pred_fallthru
          _
        // Predicated region
        $region73: #{tpu_custom_call.1} parent=11 // pred_check
          %p622 = pneg %p424
        $region74: #{tpu_custom_call.1} parent=11 // pred_check_branch
          %624 = sbr.rel (%p622) target = $region76
        $region75: #{tpu_custom_call.1} parent=11 // pred_region
          %626 = vsyncadd [#allocation19], 0
          %s627 = sshll.u32 %s17, 4
          %s628 = int_to_ptr.hbm [resolvable:$true] %s627
          %s629 = sshll.u32 [#allocation20], 4
          %s630 = int_to_ptr.vmem [resolvable:$true] %s629
          %635 = dma.hbm_to_vmem [thread:$0]  %s628, 1024, %s630, [#allocation19], 64, 64, 4
        $region76: #{tpu_custom_call.1} parent=11 // pred_fallthru
          _
        // Predicated region
        $region77: #{tpu_custom_call.1} parent=11 // pred_check
          %p636 = pneg %p445
        $region78: #{tpu_custom_call.1} parent=11 // pred_check_branch
          %638 = sbr.rel (%p636) target = $region80
        $region79: #{tpu_custom_call.1} parent=11 // pred_region
          _
        $region80: #{tpu_custom_call.1} parent=11 // pred_fallthru
          _
      $region12: #{tpu_custom_call.1} parent=5 // pred_fallthru
        _
      %p639 = scmp.lt.s32.totalorder %s36, 2
      // Predicated region
      $region81: #{tpu_custom_call.1} parent=5 // pred_check
        %p640 = pneg %p639
      $region82: #{tpu_custom_call.1} parent=5 // pred_check_branch
        %642 = sbr.rel (%p640) target = $region84
      $region83: #{tpu_custom_call.1} parent=5 // pred_region
        // Predicated region
        $region85: #{tpu_custom_call.1} parent=83 // pred_check
          %p643 = pneg %p56
        $region86: #{tpu_custom_call.1} parent=83 // pred_check_branch
          %645 = sbr.rel (%p643) target = $region88
        $region87: #{tpu_custom_call.1} parent=83 // pred_region
          %s646 = sand.u32 %s36, 1
          %s647 = scalar_lea.sflag [#allocation3], %s646
          %s648 = sand.u32 %s46, 1
          %s649 = smul.addr %s648, 16
          %s650 = scalar_lea.vmem [#allocation2], %s649
          %652 = vsyncadd %s647, 0
          %s653 = smul.addr %s36, 2
          %s654 = smul.addr %s653, 8
          %s655 = scalar_lea.hbm %s0, %s654
          %s656 = sshll.u32 %s655, 4
          %s657 = int_to_ptr.hbm [resolvable:$true] %s656
          %s658 = sshll.u32 %s650, 4
          %s659 = int_to_ptr.vmem [resolvable:$true] %s658
          %664 = dma.hbm_to_vmem [thread:$0]  %s657, 256, %s659, %s647, 128, 128, 8
        $region88: #{tpu_custom_call.1} parent=83 // pred_fallthru
          _
        // Predicated region
        $region89: #{tpu_custom_call.1} parent=83 // pred_check
          %p665 = pneg %p103
        $region90: #{tpu_custom_call.1} parent=83 // pred_check_branch
          %667 = sbr.rel (%p665) target = $region92
        $region91: #{tpu_custom_call.1} parent=83 // pred_region
          %s668 = sand.u32 %s36, 1
          %s669 = scalar_lea.sflag [#allocation3], %s668
          %s670 = sand.u32 %s93, 1
          %s671 = scalar_lea.vmem [#allocation7], %s670
          %673 = vsyncadd %s669, 0
          %s674 = scalar_lea.hbm %s2, %s36
          %s676 = sshll.u32 %s674, 4
          %s677 = int_to_ptr.hbm [resolvable:$true] %s676
          %s678 = sshll.u32 %s671, 4
          %s679 = int_to_ptr.vmem [resolvable:$true] %s678
          %681 = dma.hbm_to_vmem [thread:$0]  %s677, 16, %s679, %s669
        $region92: #{tpu_custom_call.1} parent=83 // pred_fallthru
          _
      $region84: #{tpu_custom_call.1} parent=5 // pred_fallthru
        _
      %p682 = scmp.le.s32.totalorder 1, %s36
      %p683 = scmp.lt.s32.totalorder %s36, 3
      %p684 = pnand %p682, %p683
      %p685 = pneg %p684
      // Predicated region
      $region93: #{tpu_custom_call.1} parent=5 // pred_check
        _
      $region94: #{tpu_custom_call.1} parent=5 // pred_check_branch
        %687 = sbr.rel (%p684) target = $region96
      $region95: #{tpu_custom_call.1} parent=5 // pred_region
        %s688 = ssub.s32 %s36, 1
        %s689 = sand.u32 %s41, 1
        %s690 = scalar_lea.sflag [#allocation3], %s689
        %s691 = sand.u32 %s49, 1
        %s692 = smul.addr %s691, 16
        %s693 = scalar_lea.vmem [#allocation2], %s692
        // Predicated region
        $region97: #{tpu_custom_call.1} parent=95 // pred_check
          %p694 = pneg %p62
        $region98: #{tpu_custom_call.1} parent=95 // pred_check_branch
          %696 = sbr.rel (%p694) target = $region100
        $region99: #{tpu_custom_call.1} parent=95 // pred_region
          %698 = dma.done %s690, 256
        $region100: #{tpu_custom_call.1} parent=95 // pred_fallthru
          _
        // Predicated region
        $region101: #{tpu_custom_call.1} parent=95 // pred_check
          %p699 = pneg %p83
        $region102: #{tpu_custom_call.1} parent=95 // pred_check_branch
          %701 = sbr.rel (%p699) target = $region104
        $region103: #{tpu_custom_call.1} parent=95 // pred_region
          %703 = dma.done [#allocation6], 256
        $region104: #{tpu_custom_call.1} parent=95 // pred_fallthru
          _
        %s704 = sand.u32 %s41, 1
        %s705 = scalar_lea.sflag [#allocation3], %s704
        %s706 = sand.u32 %s96, 1
        %s707 = scalar_lea.vmem [#allocation7], %s706
        // Predicated region
        $region105: #{tpu_custom_call.1} parent=95 // pred_check
          %p708 = pneg %p109
        $region106: #{tpu_custom_call.1} parent=95 // pred_check_branch
          %710 = sbr.rel (%p708) target = $region108
        $region107: #{tpu_custom_call.1} parent=95 // pred_region
          %712 = dma.done %s705, 16
        $region108: #{tpu_custom_call.1} parent=95 // pred_fallthru
          _
        // Predicated region
        $region109: #{tpu_custom_call.1} parent=95 // pred_check
          %p713 = pneg %p130
        $region110: #{tpu_custom_call.1} parent=95 // pred_check_branch
          %715 = sbr.rel (%p713) target = $region112
        $region111: #{tpu_custom_call.1} parent=95 // pred_region
          %717 = dma.done [#allocation6], 64
        $region112: #{tpu_custom_call.1} parent=95 // pred_fallthru
          _
        // Predicated region
        $region113: #{tpu_custom_call.1} parent=95 // pred_check
          %p718 = pneg %p151
        $region114: #{tpu_custom_call.1} parent=95 // pred_check_branch
          %720 = sbr.rel (%p718) target = $region116
        $region115: #{tpu_custom_call.1} parent=95 // pred_region
          %722 = dma.done [#allocation10], 64
        $region116: #{tpu_custom_call.1} parent=95 // pred_fallthru
          _
        // Predicated region
        $region117: #{tpu_custom_call.1} parent=95 // pred_check
          %p723 = pneg %p172
        $region118: #{tpu_custom_call.1} parent=95 // pred_check_branch
          %725 = sbr.rel (%p723) target = $region120
        $region119: #{tpu_custom_call.1} parent=95 // pred_region
          %727 = dma.done [#allocation10], 28672
        $region120: #{tpu_custom_call.1} parent=95 // pred_fallthru
          _
        // Predicated region
        $region121: #{tpu_custom_call.1} parent=95 // pred_check
          %p728 = pneg %p214
        $region122: #{tpu_custom_call.1} parent=95 // pred_check_branch
          %730 = sbr.rel (%p728) target = $region124
        $region123: #{tpu_custom_call.1} parent=95 // pred_region
          %732 = dma.done [#allocation13], 16
        $region124: #{tpu_custom_call.1} parent=95 // pred_fallthru
          _
        // Predicated region
        $region125: #{tpu_custom_call.1} parent=95 // pred_check
          %p733 = pneg %p235
        $region126: #{tpu_custom_call.1} parent=95 // pred_check_branch
          %735 = sbr.rel (%p733) target = $region128
        $region127: #{tpu_custom_call.1} parent=95 // pred_region
          %737 = dma.done [#allocation13], 16
        $region128: #{tpu_custom_call.1} parent=95 // pred_fallthru
          _
        // Predicated region
        $region129: #{tpu_custom_call.1} parent=95 // pred_check
          %p738 = pneg %p256
        $region130: #{tpu_custom_call.1} parent=95 // pred_check_branch
          %740 = sbr.rel (%p738) target = $region132
        $region131: #{tpu_custom_call.1} parent=95 // pred_region
          %742 = dma.done [#allocation16], 3072
        $region132: #{tpu_custom_call.1} parent=95 // pred_fallthru
          _
        // Predicated region
        $region133: #{tpu_custom_call.1} parent=95 // pred_check
          %p743 = pneg %p298
        $region134: #{tpu_custom_call.1} parent=95 // pred_check_branch
          %745 = sbr.rel (%p743) target = $region136
        $region135: #{tpu_custom_call.1} parent=95 // pred_region
          %747 = dma.done [#allocation16], 1024
        $region136: #{tpu_custom_call.1} parent=95 // pred_fallthru
          _
        // Predicated region
        $region137: #{tpu_custom_call.1} parent=95 // pred_check
          %p748 = pneg %p382
        $region138: #{tpu_custom_call.1} parent=95 // pred_check_branch
          %750 = sbr.rel (%p748) target = $region140
        $region139: #{tpu_custom_call.1} parent=95 // pred_region
          %752 = dma.done [#allocation19], 1024
        $region140: #{tpu_custom_call.1} parent=95 // pred_fallthru
          _
        // Predicated region
        $region141: #{tpu_custom_call.1} parent=95 // pred_check
          %p753 = pneg %p424
        $region142: #{tpu_custom_call.1} parent=95 // pred_check_branch
          %755 = sbr.rel (%p753) target = $region144
        $region143: #{tpu_custom_call.1} parent=95 // pred_region
          %757 = dma.done [#allocation19], 1024
        $region144: #{tpu_custom_call.1} parent=95 // pred_fallthru
          _
        %s758 = sand.u32 %s41, 1
        %s759 = scalar_lea.sflag [#allocation3], %s758
        %s760 = sand.u32 %s49, 1
        %s761 = smul.addr %s760, 16
        %s762 = scalar_lea.vmem [#allocation2], %s761
        %p763 = pneg %p62
        %p764 = pneg %p59
        %p765 = pneg %p83
        %p766 = pneg %p80
        %s767 = sand.u32 %s41, 1
        %s768 = scalar_lea.sflag [#allocation3], %s767
        %s769 = sand.u32 %s96, 1
        %s770 = scalar_lea.vmem [#allocation7], %s769
        %p771 = pneg %p109
        %p772 = pneg %p106
        %p773 = pneg %p130
        %p774 = pneg %p127
        %p775 = pneg %p151
        %p776 = pneg %p148
        %p777 = pneg %p172
        %p778 = pneg %p169
        %p779 = pneg %p193
        %p780 = pneg %p190
        %p781 = pneg %p214
        %p782 = pneg %p211
        %p783 = pneg %p235
        %p784 = pneg %p232
        %p785 = pneg %p256
        %p786 = pneg %p253
        %p787 = pneg %p277
        %p788 = pneg %p274
        %p789 = pneg %p298
        %p790 = pneg %p295
        %p791 = pneg %p319
        %p792 = pneg %p316
        %p793 = pneg %p340
        %p794 = pneg %p337
        %p795 = pneg %p361
        %p796 = pneg %p358
        %p797 = pneg %p382
        %p798 = pneg %p379
        %p799 = pneg %p403
        %p800 = pneg %p400
        %p801 = pneg %p424
        %p802 = pneg %p421
        %p803 = pneg %p445
        %p804 = pneg %p442
        %p805 = pneg %p471
        %p806 = pneg %p468
        %s807 = sand.u32 %s458, 1
        %s808 = scalar_lea.sflag [#allocation4], %s807
        %s809 = sand.u32 %s458, 1
        %s810 = smul.addr %s809, 16
        %s811 = scalar_lea.vmem [#allocation21], %s810
        %v813 = vld [vmem:[%s693] sm:$0xff]
        %v814 = vld [vmem:[%s693 + $0x8] sm:$0xff]
        %v815 = vld [vmem:[#allocation5] sm:$0xff]
        %v816 = vld [vmem:[#allocation5 + $0x8] sm:$0xff]
        %v817 = vadd.f32 %v813, %v815
        %v818 = vadd.f32 %v814, %v816
        %v819 = vlaneseq
        %v820 = vshrl.u32 %v819, 7
        %v821 = vadd.s32 %v820, 8
        %vm822 = vcmp.lt.s32.totalorder %v820, 0
        %v823 = vsub.s32 0, %v820
        %v824 = vsel %vm822, %v823, %v820
        %v825 = vshrl.u32 %v824, 4
        %v826 = vand.u32 %v824, 15
        %v827 = vsub.s32 0, %v826
        %v828 = vsel %vm822, %v827, %v826
        %vm829 = vcmp.lt.s32.totalorder %v821, 0
        %v830 = vsub.s32 0, %v821
        %v831 = vsel %vm829, %v830, %v821
        %v832 = vshrl.u32 %v831, 4
        %v833 = vand.u32 %v831, 15
        %v834 = vsub.s32 0, %v833
        %v835 = vsel %vm829, %v834, %v833
        %vm836 = vcmp.ne.s32.totalorder %v828, 0
        %vm837 = vcmp.ne.s32.totalorder %v835, 0
        %vm838 = vcmp.lt.s32.totalorder %v828, 0
        %vm839 = vcmp.lt.s32.totalorder %v835, 0
        %vm840 = vmand %vm838, %vm836
        %vm841 = vmand %vm839, %vm837
        %v842 = vadd.s32 %v828, 16
        %v843 = vadd.s32 %v835, 16
        %v844 = vsel %vm840, %v842, %v828
        %v845 = vsel %vm841, %v843, %v835
        %v846 = vadd.s32 %v844, 4294967293
        %v847 = vadd.s32 %v845, 4294967293
        %vm848 = vcmp.ge.s32.totalorder %v846, 0
        %vm849 = vcmp.ge.s32.totalorder %v847, 0
        %vm850 = vcmp.lt.s32.totalorder %v846, 16
        %vm851 = vcmp.lt.s32.totalorder %v847, 16
        %vm852 = vmand %vm848, %vm850
        %vm853 = vmand %vm849, %vm851
        %v854 = vsel %vm852, 1, 0
        %v855 = vsel %vm853, 1, 0
        %v856 = vcvt.s32.f32 %v854
        %v857 = vcvt.s32.f32 %v855
        %v858 = vadd.s32 %v844, 4294967294
        %v859 = vadd.s32 %v845, 4294967294
        %vm860 = vcmp.ge.s32.totalorder %v858, 0
        %vm861 = vcmp.ge.s32.totalorder %v859, 0
        %vm862 = vcmp.lt.s32.totalorder %v858, 16
        %vm863 = vcmp.lt.s32.totalorder %v859, 16
        %vm864 = vmand %vm860, %vm862
        %vm865 = vmand %vm861, %vm863
        %v866 = vsel %vm864, 1, 0
        %v867 = vsel %vm865, 1, 0
        %v868 = vcvt.s32.f32 %v866
        %v869 = vcvt.s32.f32 %v867
        %v870 = vadd.s32 %v844, 4294967295
        %v871 = vadd.s32 %v845, 4294967295
        %vm872 = vcmp.ge.s32.totalorder %v870, 0
        %vm873 = vcmp.ge.s32.totalorder %v871, 0
        %vm874 = vcmp.lt.s32.totalorder %v870, 16
        %vm875 = vcmp.lt.s32.totalorder %v871, 16
        %vm876 = vmand %vm872, %vm874
        %vm877 = vmand %vm873, %vm875
        %v878 = vsel %vm876, 1, 0
        %v879 = vsel %vm877, 1, 0
        %v880 = vcvt.s32.f32 %v878
        %v881 = vcvt.s32.f32 %v879
        %v882 = vadd.s32 %v844, 1
        %v883 = vadd.s32 %v845, 1
        %vm884 = vcmp.ge.s32.totalorder %v882, 0
        %vm885 = vcmp.ge.s32.totalorder %v883, 0
        %vm886 = vcmp.lt.s32.totalorder %v882, 16
        %vm887 = vcmp.lt.s32.totalorder %v883, 16
        %vm888 = vmand %vm884, %vm886
        %vm889 = vmand %vm885, %vm887
        %v890 = vsel %vm888, 1, 0
        %v891 = vsel %vm889, 1, 0
        %v892 = vcvt.s32.f32 %v890
        %v893 = vcvt.s32.f32 %v891
        %v894 = vadd.s32 %v844, 2
        %v895 = vadd.s32 %v845, 2
        %vm896 = vcmp.ge.s32.totalorder %v894, 0
        %vm897 = vcmp.ge.s32.totalorder %v895, 0
        %vm898 = vcmp.lt.s32.totalorder %v894, 16
        %vm899 = vcmp.lt.s32.totalorder %v895, 16
        %vm900 = vmand %vm896, %vm898
        %vm901 = vmand %vm897, %vm899
        %v902 = vsel %vm900, 1, 0
        %v903 = vsel %vm901, 1, 0
        %v904 = vcvt.s32.f32 %v902
        %v905 = vcvt.s32.f32 %v903
        %v906 = vadd.s32 %v844, 3
        %v907 = vadd.s32 %v845, 3
        %vm908 = vcmp.ge.s32.totalorder %v906, 0
        %vm909 = vcmp.ge.s32.totalorder %v907, 0
        %vm910 = vcmp.lt.s32.totalorder %v906, 16
        %vm911 = vcmp.lt.s32.totalorder %v907, 16
        %vm912 = vmand %vm908, %vm910
        %vm913 = vmand %vm909, %vm911
        %v914 = vsel %vm912, 1, 0
        %v915 = vsel %vm913, 1, 0
        %v916 = vcvt.s32.f32 %v914
        %v917 = vcvt.s32.f32 %v915
        %v918 = vld [vmem:[#allocation8] sm:$0x1]
        %v919 = vld [vmem:[#allocation9] sm:$0x1]
        %920 = vadd.xlane.f32.xlu0 %v817
        %v921 = vpop.xlane.xlu0 %920
        %922 = vadd.xlane.f32.xlu0 %v818
        %v923 = vpop.xlane.xlu0 %922
        %v924 = vrcp.pop 128.0
        %v925 = vmul.f32 128.0, %v924
        %v926 = vsub.f32 1.0, %v925
        %v927 = vmul.f32 %v924, %v926
        %v928 = vadd.f32 %v924, %v927
        %vm929 = vweird.f32 %v924
        %v930 = vsel %vm929, %v924, %v928
        %v931 = vmul.f32 %v921, %v930
        %v932 = vmul.f32 %v923, %v930
        %v933 = vsub.f32 %v817, %v931
        %v934 = vsub.f32 %v818, %v932
        %v935 = vmul.f32 %v933, %v933
        %v936 = vmul.f32 %v934, %v934
        %937 = vadd.xlane.f32.xlu0 %v935
        %v938 = vpop.xlane.xlu0 %937
        %939 = vadd.xlane.f32.xlu0 %v936
        %v940 = vpop.xlane.xlu0 %939
        %v941 = vmul.f32 %v938, %v930
        %v942 = vmul.f32 %v940, %v930
        %v943 = vadd.f32 %v941, 1e-05
        %v944 = vadd.f32 %v942, 1e-05
        %v945 = vrsqrt.pop %v943
        %v946 = vmul.f32 %v945, %v943
        %v947 = vmul.f32 %v946, %v945
        %v948 = vmul.f32 0.5, %v947
        %v949 = vsub.f32 1.5, %v948
        %v950 = vmul.f32 %v945, %v949
        %vm951 = vweird.f32 %v943
        %vm952 = vweird.f32 %v945
        %vm953 = vmor %vm951, %vm952
        %v954 = vsel %vm953, %v945, %v950
        %v955 = vrsqrt.pop %v944
        %v956 = vmul.f32 %v955, %v944
        %v957 = vmul.f32 %v956, %v955
        %v958 = vmul.f32 0.5, %v957
        %v959 = vsub.f32 1.5, %v958
        %v960 = vmul.f32 %v955, %v959
        %vm961 = vweird.f32 %v944
        %vm962 = vweird.f32 %v955
        %vm963 = vmor %vm961, %vm962
        %v964 = vsel %vm963, %v955, %v960
        %v965 = vmul.f32 %v933, %v954
        %v966 = vmul.f32 %v934, %v964
        %v967 = vperm.slane %v918, 0
        %v968 = vmul.f32 %v965, %v967
        %v969 = vmul.f32 %v966, %v967
        %v970 = vperm.slane %v919, 0
        %v971 = vadd.f32 %v968, %v970
        %v972 = vadd.f32 %v969, %v970
        %v973 = vrot.slane %v971, 5
        %v974 = vrot.slane %v972, 5
        %vm975 = vcmp.lt.s32.totalorder %v820, 3
        %v976 = vsel %vm975, %v973, %v974
        %v977 = vsel %vm975, %v974, %v973
        %v978 = vmul.f32 %v977, %v856
        %v979 = vmul.f32 %v976, %v857
        %v980 = vpack.c.bf16 %v979, %v978
        %v981 = vld [vmem:[#allocation11] sm:$0xf]
        %v982 = vld [vmem:[#allocation11 + $0x4] sm:$0xf]
        %v983 = vld [vmem:[#allocation11 + $0x8] sm:$0xf]
        %v984 = vld [vmem:[#allocation11 + $0xc] sm:$0xf]
        %v985 = vld [vmem:[#allocation11 + $0x10] sm:$0xf]
        %v986 = vld [vmem:[#allocation11 + $0x14] sm:$0xf]
        %v987 = vld [vmem:[#allocation11 + $0x18] sm:$0xf]
        %v988 = vld [vmem:[#allocation11 + $0x1c] sm:$0xf]
        %v989 = vld [vmem:[#allocation11 + $0x20] sm:$0xf]
        %v990 = vld [vmem:[#allocation11 + $0x24] sm:$0xf]
        %v991 = vld [vmem:[#allocation11 + $0x28] sm:$0xf]
        %v992 = vld [vmem:[#allocation11 + $0x2c] sm:$0xf]
        %v993 = vld [vmem:[#allocation11 + $0x30] sm:$0xf]
        %v994 = vld [vmem:[#allocation11 + $0x34] sm:$0xf]
        %v995 = vld [vmem:[#allocation11 + $0x38] sm:$0xf]
        %v996 = vld [vmem:[#allocation11 + $0x3c] sm:$0xf]
        %v997 = vrot.slane %v971, 6
        %v998 = vrot.slane %v972, 6
        %vm999 = vcmp.lt.s32.totalorder %v820, 2
        %v1000 = vsel %vm999, %v997, %v998
        %v1001 = vsel %vm999, %v998, %v997
        %v1002 = vmul.f32 %v1001, %v868
        %v1003 = vmul.f32 %v1000, %v869
        %v1004 = vpack.c.bf16 %v1003, %v1002
        %s1005 = scalar_lea.vmem [#allocation11], 64
        %v1006 = vld [vmem:[%s1005] sm:$0xf]
        %v1007 = vld [vmem:[%s1005 + $0x4] sm:$0xf]
        %v1008 = vld [vmem:[%s1005 + $0x8] sm:$0xf]
        %v1009 = vld [vmem:[%s1005 + $0xc] sm:$0xf]
        %v1010 = vld [vmem:[%s1005 + $0x10] sm:$0xf]
        %v1011 = vld [vmem:[%s1005 + $0x14] sm:$0xf]
        %v1012 = vld [vmem:[%s1005 + $0x18] sm:$0xf]
        %v1013 = vld [vmem:[%s1005 + $0x1c] sm:$0xf]
        %v1014 = vld [vmem:[%s1005 + $0x20] sm:$0xf]
        %v1015 = vld [vmem:[%s1005 + $0x24] sm:$0xf]
        %v1016 = vld [vmem:[%s1005 + $0x28] sm:$0xf]
        %v1017 = vld [vmem:[%s1005 + $0x2c] sm:$0xf]
        %v1018 = vld [vmem:[%s1005 + $0x30] sm:$0xf]
        %v1019 = vld [vmem:[%s1005 + $0x34] sm:$0xf]
        %v1020 = vld [vmem:[%s1005 + $0x38] sm:$0xf]
        %v1021 = vld [vmem:[%s1005 + $0x3c] sm:$0xf]
        %v1038 = vunpack.c.l.b16 %v1006
        %v1039 = vunpack.c.l.b16 %v1007
        %v1040 = vunpack.c.l.b16 %v1008
        %v1041 = vunpack.c.l.b16 %v1009
        %v1042 = vunpack.c.l.b16 %v1010
        %v1043 = vunpack.c.l.b16 %v1011
        %v1044 = vunpack.c.l.b16 %v1012
        %v1045 = vunpack.c.l.b16 %v1013
        %v1046 = vunpack.c.l.b16 %v1014
        %v1047 = vunpack.c.l.b16 %v1015
        %v1048 = vunpack.c.l.b16 %v1016
        %v1049 = vunpack.c.l.b16 %v1017
        %v1050 = vunpack.c.l.b16 %v1018
        %v1051 = vunpack.c.l.b16 %v1019
        %v1052 = vunpack.c.l.b16 %v1020
        %v1053 = vunpack.c.l.b16 %v1021
        %v1054 = vpack.c.b16 %v1039, %v1038
        %v1055 = vpack.c.b16 %v1041, %v1040
        %v1056 = vpack.c.b16 %v1043, %v1042
        %v1057 = vpack.c.b16 %v1045, %v1044
        %v1058 = vpack.c.b16 %v1047, %v1046
        %v1059 = vpack.c.b16 %v1049, %v1048
        %v1060 = vpack.c.b16 %v1051, %v1050
        %v1061 = vpack.c.b16 %v1053, %v1052
        %1070 = vmatpush.bf16.msra.mxu0 %v1061
        %1071 = vmatpush.bf16.msra.mxu0 %v1060
        %1072 = vmatpush.bf16.msra.mxu0 %v1059
        %1073 = vmatpush.bf16.msra.mxu0 %v1058
        %1074 = vmatpush.bf16.msra.mxu0 %v1057
        %1075 = vmatpush.bf16.msra.mxu0 %v1056
        %1076 = vmatpush.bf16.msra.mxu0 %v1055
        %1077 = vmatpush.bf16.msra.mxu0 %v1054
        %1078 = vmatmul.bf16.gmra.mxu0 %v1004
        %v1079 = vpop.f32.mrf.mxu0
        %v1080 = vadd.f32 0.0, %v1079
        %v1081 = vpop.f32.mrf.mxu0
        %v1082 = vadd.f32 0.0, %v1081
        %1083 = vdwg.mxu0
        %v1100 = vunpack.c.l.b16 %v981
        %v1101 = vunpack.c.l.b16 %v982
        %v1102 = vunpack.c.l.b16 %v983
        %v1103 = vunpack.c.l.b16 %v984
        %v1104 = vunpack.c.l.b16 %v985
        %v1105 = vunpack.c.l.b16 %v986
        %v1106 = vunpack.c.l.b16 %v987
        %v1107 = vunpack.c.l.b16 %v988
        %v1108 = vunpack.c.l.b16 %v989
        %v1109 = vunpack.c.l.b16 %v990
        %v1110 = vunpack.c.l.b16 %v991
        %v1111 = vunpack.c.l.b16 %v992
        %v1112 = vunpack.c.l.b16 %v993
        %v1113 = vunpack.c.l.b16 %v994
        %v1114 = vunpack.c.l.b16 %v995
        %v1115 = vunpack.c.l.b16 %v996
        %v1116 = vpack.c.b16 %v1101, %v1100
        %v1117 = vpack.c.b16 %v1103, %v1102
        %v1118 = vpack.c.b16 %v1105, %v1104
        %v1119 = vpack.c.b16 %v1107, %v1106
        %v1120 = vpack.c.b16 %v1109, %v1108
        %v1121 = vpack.c.b16 %v1111, %v1110
        %v1122 = vpack.c.b16 %v1113, %v1112
        %v1123 = vpack.c.b16 %v1115, %v1114
        %1132 = vmatpush.bf16.msra.mxu0 %v1123
        %1133 = vmatpush.bf16.msra.mxu0 %v1122
        %1134 = vmatpush.bf16.msra.mxu0 %v1121
        %1135 = vmatpush.bf16.msra.mxu0 %v1120
        %1136 = vmatpush.bf16.msra.mxu0 %v1119
        %1137 = vmatpush.bf16.msra.mxu0 %v1118
        %1138 = vmatpush.bf16.msra.mxu0 %v1117
        %1139 = vmatpush.bf16.msra.mxu0 %v1116
        %1140 = vmatmul.bf16.gmra.mxu0 %v980
        %v1141 = vpop.f32.mrf.mxu0
        %v1142 = vadd.f32 %v1080, %v1141
        %v1143 = vpop.f32.mrf.mxu0
        %v1144 = vadd.f32 %v1082, %v1143
        %1145 = vdwg.mxu0
        %v1146 = vrot.slane %v971, 7
        %v1147 = vrot.slane %v972, 7
        %vm1148 = vcmp.lt.s32.totalorder %v820, 1
        %v1149 = vsel %vm1148, %v1146, %v1147
        %v1150 = vsel %vm1148, %v1147, %v1146
        %v1151 = vmul.f32 %v1150, %v880
        %v1152 = vmul.f32 %v1149, %v881
        %v1153 = vpack.c.bf16 %v1152, %v1151
        %s1154 = scalar_lea.vmem [#allocation11], 128
        %v1155 = vld [vmem:[%s1154] sm:$0xf]
        %v1156 = vld [vmem:[%s1154 + $0x4] sm:$0xf]
        %v1157 = vld [vmem:[%s1154 + $0x8] sm:$0xf]
        %v1158 = vld [vmem:[%s1154 + $0xc] sm:$0xf]
        %v1159 = vld [vmem:[%s1154 + $0x10] sm:$0xf]
        %v1160 = vld [vmem:[%s1154 + $0x14] sm:$0xf]
        %v1161 = vld [vmem:[%s1154 + $0x18] sm:$0xf]
        %v1162 = vld [vmem:[%s1154 + $0x1c] sm:$0xf]
        %v1163 = vld [vmem:[%s1154 + $0x20] sm:$0xf]
        %v1164 = vld [vmem:[%s1154 + $0x24] sm:$0xf]
        %v1165 = vld [vmem:[%s1154 + $0x28] sm:$0xf]
        %v1166 = vld [vmem:[%s1154 + $0x2c] sm:$0xf]
        %v1167 = vld [vmem:[%s1154 + $0x30] sm:$0xf]
        %v1168 = vld [vmem:[%s1154 + $0x34] sm:$0xf]
        %v1169 = vld [vmem:[%s1154 + $0x38] sm:$0xf]
        %v1170 = vld [vmem:[%s1154 + $0x3c] sm:$0xf]
        %v1187 = vunpack.c.l.b16 %v1155
        %v1188 = vunpack.c.l.b16 %v1156
        %v1189 = vunpack.c.l.b16 %v1157
        %v1190 = vunpack.c.l.b16 %v1158
        %v1191 = vunpack.c.l.b16 %v1159
        %v1192 = vunpack.c.l.b16 %v1160
        %v1193 = vunpack.c.l.b16 %v1161
        %v1194 = vunpack.c.l.b16 %v1162
        %v1195 = vunpack.c.l.b16 %v1163
        %v1196 = vunpack.c.l.b16 %v1164
        %v1197 = vunpack.c.l.b16 %v1165
        %v1198 = vunpack.c.l.b16 %v1166
        %v1199 = vunpack.c.l.b16 %v1167
        %v1200 = vunpack.c.l.b16 %v1168
        %v1201 = vunpack.c.l.b16 %v1169
        %v1202 = vunpack.c.l.b16 %v1170
        %v1203 = vpack.c.b16 %v1188, %v1187
        %v1204 = vpack.c.b16 %v1190, %v1189
        %v1205 = vpack.c.b16 %v1192, %v1191
        %v1206 = vpack.c.b16 %v1194, %v1193
        %v1207 = vpack.c.b16 %v1196, %v1195
        %v1208 = vpack.c.b16 %v1198, %v1197
        %v1209 = vpack.c.b16 %v1200, %v1199
        %v1210 = vpack.c.b16 %v1202, %v1201
        %1219 = vmatpush.bf16.msra.mxu0 %v1210
        %1220 = vmatpush.bf16.msra.mxu0 %v1209
        %1221 = vmatpush.bf16.msra.mxu0 %v1208
        %1222 = vmatpush.bf16.msra.mxu0 %v1207
        %1223 = vmatpush.bf16.msra.mxu0 %v1206
        %1224 = vmatpush.bf16.msra.mxu0 %v1205
        %1225 = vmatpush.bf16.msra.mxu0 %v1204
        %1226 = vmatpush.bf16.msra.mxu0 %v1203
        %1227 = vmatmul.bf16.gmra.mxu0 %v1153
        %v1228 = vpop.f32.mrf.mxu0
        %v1229 = vadd.f32 0.0, %v1228
        %v1230 = vpop.f32.mrf.mxu0
        %v1231 = vadd.f32 0.0, %v1230
        %1232 = vdwg.mxu0
        %v1233 = vadd.f32 %v1142, %v1229
        %v1234 = vadd.f32 %v1144, %v1231
        %v1235 = vpack.c.bf16 %v972, %v971
        %s1236 = scalar_lea.vmem [#allocation11], 192
        %v1237 = vld [vmem:[%s1236] sm:$0xf]
        %v1238 = vld [vmem:[%s1236 + $0x4] sm:$0xf]
        %v1239 = vld [vmem:[%s1236 + $0x8] sm:$0xf]
        %v1240 = vld [vmem:[%s1236 + $0xc] sm:$0xf]
        %v1241 = vld [vmem:[%s1236 + $0x10] sm:$0xf]
        %v1242 = vld [vmem:[%s1236 + $0x14] sm:$0xf]
        %v1243 = vld [vmem:[%s1236 + $0x18] sm:$0xf]
        %v1244 = vld [vmem:[%s1236 + $0x1c] sm:$0xf]
        %v1245 = vld [vmem:[%s1236 + $0x20] sm:$0xf]
        %v1246 = vld [vmem:[%s1236 + $0x24] sm:$0xf]
        %v1247 = vld [vmem:[%s1236 + $0x28] sm:$0xf]
        %v1248 = vld [vmem:[%s1236 + $0x2c] sm:$0xf]
        %v1249 = vld [vmem:[%s1236 + $0x30] sm:$0xf]
        %v1250 = vld [vmem:[%s1236 + $0x34] sm:$0xf]
        %v1251 = vld [vmem:[%s1236 + $0x38] sm:$0xf]
        %v1252 = vld [vmem:[%s1236 + $0x3c] sm:$0xf]
        %v1269 = vunpack.c.l.b16 %v1237
        %v1270 = vunpack.c.l.b16 %v1238
        %v1271 = vunpack.c.l.b16 %v1239
        %v1272 = vunpack.c.l.b16 %v1240
        %v1273 = vunpack.c.l.b16 %v1241
        %v1274 = vunpack.c.l.b16 %v1242
        %v1275 = vunpack.c.l.b16 %v1243
        %v1276 = vunpack.c.l.b16 %v1244
        %v1277 = vunpack.c.l.b16 %v1245
        %v1278 = vunpack.c.l.b16 %v1246
        %v1279 = vunpack.c.l.b16 %v1247
        %v1280 = vunpack.c.l.b16 %v1248
        %v1281 = vunpack.c.l.b16 %v1249
        %v1282 = vunpack.c.l.b16 %v1250
        %v1283 = vunpack.c.l.b16 %v1251
        %v1284 = vunpack.c.l.b16 %v1252
        %v1285 = vpack.c.b16 %v1270, %v1269
        %v1286 = vpack.c.b16 %v1272, %v1271
        %v1287 = vpack.c.b16 %v1274, %v1273
        %v1288 = vpack.c.b16 %v1276, %v1275
        %v1289 = vpack.c.b16 %v1278, %v1277
        %v1290 = vpack.c.b16 %v1280, %v1279
        %v1291 = vpack.c.b16 %v1282, %v1281
        %v1292 = vpack.c.b16 %v1284, %v1283
        %1301 = vmatpush.bf16.msra.mxu0 %v1292
        %1302 = vmatpush.bf16.msra.mxu0 %v1291
        %1303 = vmatpush.bf16.msra.mxu0 %v1290
        %1304 = vmatpush.bf16.msra.mxu0 %v1289
        %1305 = vmatpush.bf16.msra.mxu0 %v1288
        %1306 = vmatpush.bf16.msra.mxu0 %v1287
        %1307 = vmatpush.bf16.msra.mxu0 %v1286
        %1308 = vmatpush.bf16.msra.mxu0 %v1285
        %1309 = vmatmul.bf16.gmra.mxu0 %v1235
        %v1310 = vpop.f32.mrf.mxu0
        %v1311 = vadd.f32 0.0, %v1310
        %v1312 = vpop.f32.mrf.mxu0
        %v1313 = vadd.f32 0.0, %v1312
        %1314 = vdwg.mxu0
        %v1315 = vadd.f32 %v1233, %v1311
        %v1316 = vadd.f32 %v1234, %v1313
        %v1317 = vrot.slane %v971, 1
        %v1318 = vrot.slane %v972, 1
        %vm1319 = vcmp.lt.s32.totalorder %v820, 7
        %v1320 = vsel %vm1319, %v1317, %v1318
        %v1321 = vsel %vm1319, %v1318, %v1317
        %v1322 = vmul.f32 %v1320, %v892
        %v1323 = vmul.f32 %v1321, %v893
        %v1324 = vpack.c.bf16 %v1323, %v1322
        %s1325 = scalar_lea.vmem [#allocation11], 256
        %v1326 = vld [vmem:[%s1325] sm:$0xf]
        %v1327 = vld [vmem:[%s1325 + $0x4] sm:$0xf]
        %v1328 = vld [vmem:[%s1325 + $0x8] sm:$0xf]
        %v1329 = vld [vmem:[%s1325 + $0xc] sm:$0xf]
        %v1330 = vld [vmem:[%s1325 + $0x10] sm:$0xf]
        %v1331 = vld [vmem:[%s1325 + $0x14] sm:$0xf]
        %v1332 = vld [vmem:[%s1325 + $0x18] sm:$0xf]
        %v1333 = vld [vmem:[%s1325 + $0x1c] sm:$0xf]
        %v1334 = vld [vmem:[%s1325 + $0x20] sm:$0xf]
        %v1335 = vld [vmem:[%s1325 + $0x24] sm:$0xf]
        %v1336 = vld [vmem:[%s1325 + $0x28] sm:$0xf]
        %v1337 = vld [vmem:[%s1325 + $0x2c] sm:$0xf]
        %v1338 = vld [vmem:[%s1325 + $0x30] sm:$0xf]
        %v1339 = vld [vmem:[%s1325 + $0x34] sm:$0xf]
        %v1340 = vld [vmem:[%s1325 + $0x38] sm:$0xf]
        %v1341 = vld [vmem:[%s1325 + $0x3c] sm:$0xf]
        %v1358 = vunpack.c.l.b16 %v1326
        %v1359 = vunpack.c.l.b16 %v1327
        %v1360 = vunpack.c.l.b16 %v1328
        %v1361 = vunpack.c.l.b16 %v1329
        %v1362 = vunpack.c.l.b16 %v1330
        %v1363 = vunpack.c.l.b16 %v1331
        %v1364 = vunpack.c.l.b16 %v1332
        %v1365 = vunpack.c.l.b16 %v1333
        %v1366 = vunpack.c.l.b16 %v1334
        %v1367 = vunpack.c.l.b16 %v1335
        %v1368 = vunpack.c.l.b16 %v1336
        %v1369 = vunpack.c.l.b16 %v1337
        %v1370 = vunpack.c.l.b16 %v1338
        %v1371 = vunpack.c.l.b16 %v1339
        %v1372 = vunpack.c.l.b16 %v1340
        %v1373 = vunpack.c.l.b16 %v1341
        %v1374 = vpack.c.b16 %v1359, %v1358
        %v1375 = vpack.c.b16 %v1361, %v1360
        %v1376 = vpack.c.b16 %v1363, %v1362
        %v1377 = vpack.c.b16 %v1365, %v1364
        %v1378 = vpack.c.b16 %v1367, %v1366
        %v1379 = vpack.c.b16 %v1369, %v1368
        %v1380 = vpack.c.b16 %v1371, %v1370
        %v1381 = vpack.c.b16 %v1373, %v1372
        %1390 = vmatpush.bf16.msra.mxu0 %v1381
        %1391 = vmatpush.bf16.msra.mxu0 %v1380
        %1392 = vmatpush.bf16.msra.mxu0 %v1379
        %1393 = vmatpush.bf16.msra.mxu0 %v1378
        %1394 = vmatpush.bf16.msra.mxu0 %v1377
        %1395 = vmatpush.bf16.msra.mxu0 %v1376
        %1396 = vmatpush.bf16.msra.mxu0 %v1375
        %1397 = vmatpush.bf16.msra.mxu0 %v1374
        %1398 = vmatmul.bf16.gmra.mxu0 %v1324
        %v1399 = vpop.f32.mrf.mxu0
        %v1400 = vadd.f32 0.0, %v1399
        %v1401 = vpop.f32.mrf.mxu0
        %v1402 = vadd.f32 0.0, %v1401
        %1403 = vdwg.mxu0
        %v1404 = vadd.f32 %v1315, %v1400
        %v1405 = vadd.f32 %v1316, %v1402
        %v1406 = vrot.slane %v971, 2
        %v1407 = vrot.slane %v972, 2
        %vm1408 = vcmp.lt.s32.totalorder %v820, 6
        %v1409 = vsel %vm1408, %v1406, %v1407
        %v1410 = vsel %vm1408, %v1407, %v1406
        %v1411 = vmul.f32 %v1409, %v904
        %v1412 = vmul.f32 %v1410, %v905
        %v1413 = vpack.c.bf16 %v1412, %v1411
        %s1414 = scalar_lea.vmem [#allocation11], 320
        %v1415 = vld [vmem:[%s1414] sm:$0xf]
        %v1416 = vld [vmem:[%s1414 + $0x4] sm:$0xf]
        %v1417 = vld [vmem:[%s1414 + $0x8] sm:$0xf]
        %v1418 = vld [vmem:[%s1414 + $0xc] sm:$0xf]
        %v1419 = vld [vmem:[%s1414 + $0x10] sm:$0xf]
        %v1420 = vld [vmem:[%s1414 + $0x14] sm:$0xf]
        %v1421 = vld [vmem:[%s1414 + $0x18] sm:$0xf]
        %v1422 = vld [vmem:[%s1414 + $0x1c] sm:$0xf]
        %v1423 = vld [vmem:[%s1414 + $0x20] sm:$0xf]
        %v1424 = vld [vmem:[%s1414 + $0x24] sm:$0xf]
        %v1425 = vld [vmem:[%s1414 + $0x28] sm:$0xf]
        %v1426 = vld [vmem:[%s1414 + $0x2c] sm:$0xf]
        %v1427 = vld [vmem:[%s1414 + $0x30] sm:$0xf]
        %v1428 = vld [vmem:[%s1414 + $0x34] sm:$0xf]
        %v1429 = vld [vmem:[%s1414 + $0x38] sm:$0xf]
        %v1430 = vld [vmem:[%s1414 + $0x3c] sm:$0xf]
        %v1447 = vunpack.c.l.b16 %v1415
        %v1448 = vunpack.c.l.b16 %v1416
        %v1449 = vunpack.c.l.b16 %v1417
        %v1450 = vunpack.c.l.b16 %v1418
        %v1451 = vunpack.c.l.b16 %v1419
        %v1452 = vunpack.c.l.b16 %v1420
        %v1453 = vunpack.c.l.b16 %v1421
        %v1454 = vunpack.c.l.b16 %v1422
        %v1455 = vunpack.c.l.b16 %v1423
        %v1456 = vunpack.c.l.b16 %v1424
        %v1457 = vunpack.c.l.b16 %v1425
        %v1458 = vunpack.c.l.b16 %v1426
        %v1459 = vunpack.c.l.b16 %v1427
        %v1460 = vunpack.c.l.b16 %v1428
        %v1461 = vunpack.c.l.b16 %v1429
        %v1462 = vunpack.c.l.b16 %v1430
        %v1463 = vpack.c.b16 %v1448, %v1447
        %v1464 = vpack.c.b16 %v1450, %v1449
        %v1465 = vpack.c.b16 %v1452, %v1451
        %v1466 = vpack.c.b16 %v1454, %v1453
        %v1467 = vpack.c.b16 %v1456, %v1455
        %v1468 = vpack.c.b16 %v1458, %v1457
        %v1469 = vpack.c.b16 %v1460, %v1459
        %v1470 = vpack.c.b16 %v1462, %v1461
        %1479 = vmatpush.bf16.msra.mxu0 %v1470
        %1480 = vmatpush.bf16.msra.mxu0 %v1469
        %1481 = vmatpush.bf16.msra.mxu0 %v1468
        %1482 = vmatpush.bf16.msra.mxu0 %v1467
        %1483 = vmatpush.bf16.msra.mxu0 %v1466
        %1484 = vmatpush.bf16.msra.mxu0 %v1465
        %1485 = vmatpush.bf16.msra.mxu0 %v1464
        %1486 = vmatpush.bf16.msra.mxu0 %v1463
        %1487 = vmatmul.bf16.gmra.mxu0 %v1413
        %v1488 = vpop.f32.mrf.mxu0
        %v1489 = vadd.f32 0.0, %v1488
        %v1490 = vpop.f32.mrf.mxu0
        %v1491 = vadd.f32 0.0, %v1490
        %1492 = vdwg.mxu0
        %v1493 = vadd.f32 %v1404, %v1489
        %v1494 = vadd.f32 %v1405, %v1491
        %v1495 = vrot.slane %v971, 3
        %v1496 = vrot.slane %v972, 3
        %vm1497 = vcmp.lt.s32.totalorder %v820, 5
        %v1498 = vsel %vm1497, %v1495, %v1496
        %v1499 = vsel %vm1497, %v1496, %v1495
        %v1500 = vmul.f32 %v1498, %v916
        %v1501 = vmul.f32 %v1499, %v917
        %v1502 = vpack.c.bf16 %v1501, %v1500
        %s1503 = scalar_lea.vmem [#allocation11], 384
        %v1504 = vld [vmem:[%s1503] sm:$0xf]
        %v1505 = vld [vmem:[%s1503 + $0x4] sm:$0xf]
        %v1506 = vld [vmem:[%s1503 + $0x8] sm:$0xf]
        %v1507 = vld [vmem:[%s1503 + $0xc] sm:$0xf]
        %v1508 = vld [vmem:[%s1503 + $0x10] sm:$0xf]
        %v1509 = vld [vmem:[%s1503 + $0x14] sm:$0xf]
        %v1510 = vld [vmem:[%s1503 + $0x18] sm:$0xf]
        %v1511 = vld [vmem:[%s1503 + $0x1c] sm:$0xf]
        %v1512 = vld [vmem:[%s1503 + $0x20] sm:$0xf]
        %v1513 = vld [vmem:[%s1503 + $0x24] sm:$0xf]
        %v1514 = vld [vmem:[%s1503 + $0x28] sm:$0xf]
        %v1515 = vld [vmem:[%s1503 + $0x2c] sm:$0xf]
        %v1516 = vld [vmem:[%s1503 + $0x30] sm:$0xf]
        %v1517 = vld [vmem:[%s1503 + $0x34] sm:$0xf]
        %v1518 = vld [vmem:[%s1503 + $0x38] sm:$0xf]
        %v1519 = vld [vmem:[%s1503 + $0x3c] sm:$0xf]
        %v1536 = vunpack.c.l.b16 %v1504
        %v1537 = vunpack.c.l.b16 %v1505
        %v1538 = vunpack.c.l.b16 %v1506
        %v1539 = vunpack.c.l.b16 %v1507
        %v1540 = vunpack.c.l.b16 %v1508
        %v1541 = vunpack.c.l.b16 %v1509
        %v1542 = vunpack.c.l.b16 %v1510
        %v1543 = vunpack.c.l.b16 %v1511
        %v1544 = vunpack.c.l.b16 %v1512
        %v1545 = vunpack.c.l.b16 %v1513
        %v1546 = vunpack.c.l.b16 %v1514
        %v1547 = vunpack.c.l.b16 %v1515
        %v1548 = vunpack.c.l.b16 %v1516
        %v1549 = vunpack.c.l.b16 %v1517
        %v1550 = vunpack.c.l.b16 %v1518
        %v1551 = vunpack.c.l.b16 %v1519
        %v1552 = vpack.c.b16 %v1537, %v1536
        %v1553 = vpack.c.b16 %v1539, %v1538
        %v1554 = vpack.c.b16 %v1541, %v1540
        %v1555 = vpack.c.b16 %v1543, %v1542
        %v1556 = vpack.c.b16 %v1545, %v1544
        %v1557 = vpack.c.b16 %v1547, %v1546
        %v1558 = vpack.c.b16 %v1549, %v1548
        %v1559 = vpack.c.b16 %v1551, %v1550
        %1568 = vmatpush.bf16.msra.mxu0 %v1559
        %1569 = vmatpush.bf16.msra.mxu0 %v1558
        %1570 = vmatpush.bf16.msra.mxu0 %v1557
        %1571 = vmatpush.bf16.msra.mxu0 %v1556
        %1572 = vmatpush.bf16.msra.mxu0 %v1555
        %1573 = vmatpush.bf16.msra.mxu0 %v1554
        %1574 = vmatpush.bf16.msra.mxu0 %v1553
        %1575 = vmatpush.bf16.msra.mxu0 %v1552
        %1576 = vmatmul.bf16.gmra.mxu0 %v1502
        %v1577 = vpop.f32.mrf.mxu0
        %v1578 = vadd.f32 0.0, %v1577
        %v1579 = vpop.f32.mrf.mxu0
        %v1580 = vadd.f32 0.0, %v1579
        %1581 = vdwg.mxu0
        %v1582 = vadd.f32 %v1493, %v1578
        %v1583 = vadd.f32 %v1494, %v1580
        %v1584 = vld [vmem:[%s6] sm:$0x1]
        %v1585 = vperm.slane %v1584, 0
        %v1586 = vadd.f32 %v1582, %v1585
        %v1587 = vadd.f32 %v1583, %v1585
        %v1588 = vmax.f32 %v1586, 0.0
        %v1589 = vmax.f32 %v1587, 0.0
        %v1590 = vadd.f32 %v1588, %v817
        %v1591 = vadd.f32 %v1589, %v818
        %v1592 = vld [vmem:[#allocation8 + $0x1] sm:$0x1]
        %v1593 = vld [vmem:[#allocation9 + $0x1] sm:$0x1]
        %1594 = vadd.xlane.f32.xlu0 %v1590
        %v1595 = vpop.xlane.xlu0 %1594
        %1596 = vadd.xlane.f32.xlu0 %v1591
        %v1597 = vpop.xlane.xlu0 %1596
        %v1598 = vmul.f32 %v1595, %v930
        %v1599 = vmul.f32 %v1597, %v930
        %v1600 = vsub.f32 %v1590, %v1598
        %v1601 = vsub.f32 %v1591, %v1599
        %v1602 = vmul.f32 %v1600, %v1600
        %v1603 = vmul.f32 %v1601, %v1601
        %1604 = vadd.xlane.f32.xlu0 %v1602
        %v1605 = vpop.xlane.xlu0 %1604
        %1606 = vadd.xlane.f32.xlu0 %v1603
        %v1607 = vpop.xlane.xlu0 %1606
        %v1608 = vmul.f32 %v1605, %v930
        %v1609 = vmul.f32 %v1607, %v930
        %v1610 = vadd.f32 %v1608, 1e-05
        %v1611 = vadd.f32 %v1609, 1e-05
        %v1612 = vrsqrt.pop %v1610
        %v1613 = vmul.f32 %v1612, %v1610
        %v1614 = vmul.f32 %v1613, %v1612
        %v1615 = vmul.f32 0.5, %v1614
        %v1616 = vsub.f32 1.5, %v1615
        %v1617 = vmul.f32 %v1612, %v1616
        %vm1618 = vweird.f32 %v1610
        %vm1619 = vweird.f32 %v1612
        %vm1620 = vmor %vm1618, %vm1619
        %v1621 = vsel %vm1620, %v1612, %v1617
        %v1622 = vrsqrt.pop %v1611
        %v1623 = vmul.f32 %v1622, %v1611
        %v1624 = vmul.f32 %v1623, %v1622
        %v1625 = vmul.f32 0.5, %v1624
        %v1626 = vsub.f32 1.5, %v1625
        %v1627 = vmul.f32 %v1622, %v1626
        %vm1628 = vweird.f32 %v1611
        %vm1629 = vweird.f32 %v1622
        %vm1630 = vmor %vm1628, %vm1629
        %v1631 = vsel %vm1630, %v1622, %v1627
        %v1632 = vmul.f32 %v1600, %v1621
        %v1633 = vmul.f32 %v1601, %v1631
        %v1634 = vperm.slane %v1592, 0
        %v1635 = vmul.f32 %v1632, %v1634
        %v1636 = vmul.f32 %v1633, %v1634
        %v1637 = vperm.slane %v1593, 0
        %v1638 = vadd.f32 %v1635, %v1637
        %v1639 = vadd.f32 %v1636, %v1637
        %v1640 = vrot.slane %v1638, 5
        %v1641 = vrot.slane %v1639, 5
        %v1642 = vsel %vm975, %v1640, %v1641
        %v1643 = vsel %vm975, %v1641, %v1640
        %v1644 = vmul.f32 %v1643, %v856
        %v1645 = vmul.f32 %v1642, %v857
        %v1646 = vpack.c.bf16 %v1645, %v1644
        %s1647 = scalar_lea.vmem [#allocation11], 448
        %v1648 = vld [vmem:[%s1647] sm:$0xf]
        %v1649 = vld [vmem:[%s1647 + $0x4] sm:$0xf]
        %v1650 = vld [vmem:[%s1647 + $0x8] sm:$0xf]
        %v1651 = vld [vmem:[%s1647 + $0xc] sm:$0xf]
        %v1652 = vld [vmem:[%s1647 + $0x10] sm:$0xf]
        %v1653 = vld [vmem:[%s1647 + $0x14] sm:$0xf]
        %v1654 = vld [vmem:[%s1647 + $0x18] sm:$0xf]
        %v1655 = vld [vmem:[%s1647 + $0x1c] sm:$0xf]
        %v1656 = vld [vmem:[%s1647 + $0x20] sm:$0xf]
        %v1657 = vld [vmem:[%s1647 + $0x24] sm:$0xf]
        %v1658 = vld [vmem:[%s1647 + $0x28] sm:$0xf]
        %v1659 = vld [vmem:[%s1647 + $0x2c] sm:$0xf]
        %v1660 = vld [vmem:[%s1647 + $0x30] sm:$0xf]
        %v1661 = vld [vmem:[%s1647 + $0x34] sm:$0xf]
        %v1662 = vld [vmem:[%s1647 + $0x38] sm:$0xf]
        %v1663 = vld [vmem:[%s1647 + $0x3c] sm:$0xf]
        %v1664 = vrot.slane %v1638, 6
        %v1665 = vrot.slane %v1639, 6
        %v1666 = vsel %vm999, %v1664, %v1665
        %v1667 = vsel %vm999, %v1665, %v1664
        %v1668 = vmul.f32 %v1667, %v868
        %v1669 = vmul.f32 %v1666, %v869
        %v1670 = vpack.c.bf16 %v1669, %v1668
        %s1671 = scalar_lea.vmem [#allocation11], 512
        %v1672 = vld [vmem:[%s1671] sm:$0xf]
        %v1673 = vld [vmem:[%s1671 + $0x4] sm:$0xf]
        %v1674 = vld [vmem:[%s1671 + $0x8] sm:$0xf]
        %v1675 = vld [vmem:[%s1671 + $0xc] sm:$0xf]
        %v1676 = vld [vmem:[%s1671 + $0x10] sm:$0xf]
        %v1677 = vld [vmem:[%s1671 + $0x14] sm:$0xf]
        %v1678 = vld [vmem:[%s1671 + $0x18] sm:$0xf]
        %v1679 = vld [vmem:[%s1671 + $0x1c] sm:$0xf]
        %v1680 = vld [vmem:[%s1671 + $0x20] sm:$0xf]
        %v1681 = vld [vmem:[%s1671 + $0x24] sm:$0xf]
        %v1682 = vld [vmem:[%s1671 + $0x28] sm:$0xf]
        %v1683 = vld [vmem:[%s1671 + $0x2c] sm:$0xf]
        %v1684 = vld [vmem:[%s1671 + $0x30] sm:$0xf]
        %v1685 = vld [vmem:[%s1671 + $0x34] sm:$0xf]
        %v1686 = vld [vmem:[%s1671 + $0x38] sm:$0xf]
        %v1687 = vld [vmem:[%s1671 + $0x3c] sm:$0xf]
        %v1704 = vunpack.c.l.b16 %v1672
        %v1705 = vunpack.c.l.b16 %v1673
        %v1706 = vunpack.c.l.b16 %v1674
        %v1707 = vunpack.c.l.b16 %v1675
        %v1708 = vunpack.c.l.b16 %v1676
        %v1709 = vunpack.c.l.b16 %v1677
        %v1710 = vunpack.c.l.b16 %v1678
        %v1711 = vunpack.c.l.b16 %v1679
        %v1712 = vunpack.c.l.b16 %v1680
        %v1713 = vunpack.c.l.b16 %v1681
        %v1714 = vunpack.c.l.b16 %v1682
        %v1715 = vunpack.c.l.b16 %v1683
        %v1716 = vunpack.c.l.b16 %v1684
        %v1717 = vunpack.c.l.b16 %v1685
        %v1718 = vunpack.c.l.b16 %v1686
        %v1719 = vunpack.c.l.b16 %v1687
        %v1720 = vpack.c.b16 %v1705, %v1704
        %v1721 = vpack.c.b16 %v1707, %v1706
        %v1722 = vpack.c.b16 %v1709, %v1708
        %v1723 = vpack.c.b16 %v1711, %v1710
        %v1724 = vpack.c.b16 %v1713, %v1712
        %v1725 = vpack.c.b16 %v1715, %v1714
        %v1726 = vpack.c.b16 %v1717, %v1716
        %v1727 = vpack.c.b16 %v1719, %v1718
        %1736 = vmatpush.bf16.msra.mxu0 %v1727
        %1737 = vmatpush.bf16.msra.mxu0 %v1726
        %1738 = vmatpush.bf16.msra.mxu0 %v1725
        %1739 = vmatpush.bf16.msra.mxu0 %v1724
        %1740 = vmatpush.bf16.msra.mxu0 %v1723
        %1741 = vmatpush.bf16.msra.mxu0 %v1722
        %1742 = vmatpush.bf16.msra.mxu0 %v1721
        %1743 = vmatpush.bf16.msra.mxu0 %v1720
        %1744 = vmatmul.bf16.gmra.mxu0 %v1670
        %v1745 = vpop.f32.mrf.mxu0
        %v1746 = vadd.f32 0.0, %v1745
        %v1747 = vpop.f32.mrf.mxu0
        %v1748 = vadd.f32 0.0, %v1747
        %1749 = vdwg.mxu0
        %v1766 = vunpack.c.l.b16 %v1648
        %v1767 = vunpack.c.l.b16 %v1649
        %v1768 = vunpack.c.l.b16 %v1650
        %v1769 = vunpack.c.l.b16 %v1651
        %v1770 = vunpack.c.l.b16 %v1652
        %v1771 = vunpack.c.l.b16 %v1653
        %v1772 = vunpack.c.l.b16 %v1654
        %v1773 = vunpack.c.l.b16 %v1655
        %v1774 = vunpack.c.l.b16 %v1656
        %v1775 = vunpack.c.l.b16 %v1657
        %v1776 = vunpack.c.l.b16 %v1658
        %v1777 = vunpack.c.l.b16 %v1659
        %v1778 = vunpack.c.l.b16 %v1660
        %v1779 = vunpack.c.l.b16 %v1661
        %v1780 = vunpack.c.l.b16 %v1662
        %v1781 = vunpack.c.l.b16 %v1663
        %v1782 = vpack.c.b16 %v1767, %v1766
        %v1783 = vpack.c.b16 %v1769, %v1768
        %v1784 = vpack.c.b16 %v1771, %v1770
        %v1785 = vpack.c.b16 %v1773, %v1772
        %v1786 = vpack.c.b16 %v1775, %v1774
        %v1787 = vpack.c.b16 %v1777, %v1776
        %v1788 = vpack.c.b16 %v1779, %v1778
        %v1789 = vpack.c.b16 %v1781, %v1780
        %1798 = vmatpush.bf16.msra.mxu0 %v1789
        %1799 = vmatpush.bf16.msra.mxu0 %v1788
        %1800 = vmatpush.bf16.msra.mxu0 %v1787
        %1801 = vmatpush.bf16.msra.mxu0 %v1786
        %1802 = vmatpush.bf16.msra.mxu0 %v1785
        %1803 = vmatpush.bf16.msra.mxu0 %v1784
        %1804 = vmatpush.bf16.msra.mxu0 %v1783
        %1805 = vmatpush.bf16.msra.mxu0 %v1782
        %1806 = vmatmul.bf16.gmra.mxu0 %v1646
        %v1807 = vpop.f32.mrf.mxu0
        %v1808 = vadd.f32 %v1746, %v1807
        %v1809 = vpop.f32.mrf.mxu0
        %v1810 = vadd.f32 %v1748, %v1809
        %1811 = vdwg.mxu0
        %v1812 = vrot.slane %v1638, 7
        %v1813 = vrot.slane %v1639, 7
        %v1814 = vsel %vm1148, %v1812, %v1813
        %v1815 = vsel %vm1148, %v1813, %v1812
        %v1816 = vmul.f32 %v1815, %v880
        %v1817 = vmul.f32 %v1814, %v881
        %v1818 = vpack.c.bf16 %v1817, %v1816
        %s1819 = scalar_lea.vmem [#allocation11], 576
        %v1820 = vld [vmem:[%s1819] sm:$0xf]
        %v1821 = vld [vmem:[%s1819 + $0x4] sm:$0xf]
        %v1822 = vld [vmem:[%s1819 + $0x8] sm:$0xf]
        %v1823 = vld [vmem:[%s1819 + $0xc] sm:$0xf]
        %v1824 = vld [vmem:[%s1819 + $0x10] sm:$0xf]
        %v1825 = vld [vmem:[%s1819 + $0x14] sm:$0xf]
        %v1826 = vld [vmem:[%s1819 + $0x18] sm:$0xf]
        %v1827 = vld [vmem:[%s1819 + $0x1c] sm:$0xf]
        %v1828 = vld [vmem:[%s1819 + $0x20] sm:$0xf]
        %v1829 = vld [vmem:[%s1819 + $0x24] sm:$0xf]
        %v1830 = vld [vmem:[%s1819 + $0x28] sm:$0xf]
        %v1831 = vld [vmem:[%s1819 + $0x2c] sm:$0xf]
        %v1832 = vld [vmem:[%s1819 + $0x30] sm:$0xf]
        %v1833 = vld [vmem:[%s1819 + $0x34] sm:$0xf]
        %v1834 = vld [vmem:[%s1819 + $0x38] sm:$0xf]
        %v1835 = vld [vmem:[%s1819 + $0x3c] sm:$0xf]
        %v1852 = vunpack.c.l.b16 %v1820
        %v1853 = vunpack.c.l.b16 %v1821
        %v1854 = vunpack.c.l.b16 %v1822
        %v1855 = vunpack.c.l.b16 %v1823
        %v1856 = vunpack.c.l.b16 %v1824
        %v1857 = vunpack.c.l.b16 %v1825
        %v1858 = vunpack.c.l.b16 %v1826
        %v1859 = vunpack.c.l.b16 %v1827
        %v1860 = vunpack.c.l.b16 %v1828
        %v1861 = vunpack.c.l.b16 %v1829
        %v1862 = vunpack.c.l.b16 %v1830
        %v1863 = vunpack.c.l.b16 %v1831
        %v1864 = vunpack.c.l.b16 %v1832
        %v1865 = vunpack.c.l.b16 %v1833
        %v1866 = vunpack.c.l.b16 %v1834
        %v1867 = vunpack.c.l.b16 %v1835
        %v1868 = vpack.c.b16 %v1853, %v1852
        %v1869 = vpack.c.b16 %v1855, %v1854
        %v1870 = vpack.c.b16 %v1857, %v1856
        %v1871 = vpack.c.b16 %v1859, %v1858
        %v1872 = vpack.c.b16 %v1861, %v1860
        %v1873 = vpack.c.b16 %v1863, %v1862
        %v1874 = vpack.c.b16 %v1865, %v1864
        %v1875 = vpack.c.b16 %v1867, %v1866
        %1884 = vmatpush.bf16.msra.mxu0 %v1875
        %1885 = vmatpush.bf16.msra.mxu0 %v1874
        %1886 = vmatpush.bf16.msra.mxu0 %v1873
        %1887 = vmatpush.bf16.msra.mxu0 %v1872
        %1888 = vmatpush.bf16.msra.mxu0 %v1871
        %1889 = vmatpush.bf16.msra.mxu0 %v1870
        %1890 = vmatpush.bf16.msra.mxu0 %v1869
        %1891 = vmatpush.bf16.msra.mxu0 %v1868
        %1892 = vmatmul.bf16.gmra.mxu0 %v1818
        %v1893 = vpop.f32.mrf.mxu0
        %v1894 = vadd.f32 0.0, %v1893
        %v1895 = vpop.f32.mrf.mxu0
        %v1896 = vadd.f32 0.0, %v1895
        %1897 = vdwg.mxu0
        %v1898 = vadd.f32 %v1808, %v1894
        %v1899 = vadd.f32 %v1810, %v1896
        %v1900 = vpack.c.bf16 %v1639, %v1638
        %s1901 = scalar_lea.vmem [#allocation11], 640
        %v1902 = vld [vmem:[%s1901] sm:$0xf]
        %v1903 = vld [vmem:[%s1901 + $0x4] sm:$0xf]
        %v1904 = vld [vmem:[%s1901 + $0x8] sm:$0xf]
        %v1905 = vld [vmem:[%s1901 + $0xc] sm:$0xf]
        %v1906 = vld [vmem:[%s1901 + $0x10] sm:$0xf]
        %v1907 = vld [vmem:[%s1901 + $0x14] sm:$0xf]
        %v1908 = vld [vmem:[%s1901 + $0x18] sm:$0xf]
        %v1909 = vld [vmem:[%s1901 + $0x1c] sm:$0xf]
        %v1910 = vld [vmem:[%s1901 + $0x20] sm:$0xf]
        %v1911 = vld [vmem:[%s1901 + $0x24] sm:$0xf]
        %v1912 = vld [vmem:[%s1901 + $0x28] sm:$0xf]
        %v1913 = vld [vmem:[%s1901 + $0x2c] sm:$0xf]
        %v1914 = vld [vmem:[%s1901 + $0x30] sm:$0xf]
        %v1915 = vld [vmem:[%s1901 + $0x34] sm:$0xf]
        %v1916 = vld [vmem:[%s1901 + $0x38] sm:$0xf]
        %v1917 = vld [vmem:[%s1901 + $0x3c] sm:$0xf]
        %v1934 = vunpack.c.l.b16 %v1902
        %v1935 = vunpack.c.l.b16 %v1903
        %v1936 = vunpack.c.l.b16 %v1904
        %v1937 = vunpack.c.l.b16 %v1905
        %v1938 = vunpack.c.l.b16 %v1906
        %v1939 = vunpack.c.l.b16 %v1907
        %v1940 = vunpack.c.l.b16 %v1908
        %v1941 = vunpack.c.l.b16 %v1909
        %v1942 = vunpack.c.l.b16 %v1910
        %v1943 = vunpack.c.l.b16 %v1911
        %v1944 = vunpack.c.l.b16 %v1912
        %v1945 = vunpack.c.l.b16 %v1913
        %v1946 = vunpack.c.l.b16 %v1914
        %v1947 = vunpack.c.l.b16 %v1915
        %v1948 = vunpack.c.l.b16 %v1916
        %v1949 = vunpack.c.l.b16 %v1917
        %v1950 = vpack.c.b16 %v1935, %v1934
        %v1951 = vpack.c.b16 %v1937, %v1936
        %v1952 = vpack.c.b16 %v1939, %v1938
        %v1953 = vpack.c.b16 %v1941, %v1940
        %v1954 = vpack.c.b16 %v1943, %v1942
        %v1955 = vpack.c.b16 %v1945, %v1944
        %v1956 = vpack.c.b16 %v1947, %v1946
        %v1957 = vpack.c.b16 %v1949, %v1948
        %1966 = vmatpush.bf16.msra.mxu0 %v1957
        %1967 = vmatpush.bf16.msra.mxu0 %v1956
        %1968 = vmatpush.bf16.msra.mxu0 %v1955
        %1969 = vmatpush.bf16.msra.mxu0 %v1954
        %1970 = vmatpush.bf16.msra.mxu0 %v1953
        %1971 = vmatpush.bf16.msra.mxu0 %v1952
        %1972 = vmatpush.bf16.msra.mxu0 %v1951
        %1973 = vmatpush.bf16.msra.mxu0 %v1950
        %1974 = vmatmul.bf16.gmra.mxu0 %v1900
        %v1975 = vpop.f32.mrf.mxu0
        %v1976 = vadd.f32 0.0, %v1975
        %v1977 = vpop.f32.mrf.mxu0
        %v1978 = vadd.f32 0.0, %v1977
        %1979 = vdwg.mxu0
        %v1980 = vadd.f32 %v1898, %v1976
        %v1981 = vadd.f32 %v1899, %v1978
        %v1982 = vrot.slane %v1638, 1
        %v1983 = vrot.slane %v1639, 1
        %v1984 = vsel %vm1319, %v1982, %v1983
        %v1985 = vsel %vm1319, %v1983, %v1982
        %v1986 = vmul.f32 %v1984, %v892
        %v1987 = vmul.f32 %v1985, %v893
        %v1988 = vpack.c.bf16 %v1987, %v1986
        %s1989 = scalar_lea.vmem [#allocation11], 704
        %v1990 = vld [vmem:[%s1989] sm:$0xf]
        %v1991 = vld [vmem:[%s1989 + $0x4] sm:$0xf]
        %v1992 = vld [vmem:[%s1989 + $0x8] sm:$0xf]
        %v1993 = vld [vmem:[%s1989 + $0xc] sm:$0xf]
        %v1994 = vld [vmem:[%s1989 + $0x10] sm:$0xf]
        %v1995 = vld [vmem:[%s1989 + $0x14] sm:$0xf]
        %v1996 = vld [vmem:[%s1989 + $0x18] sm:$0xf]
        %v1997 = vld [vmem:[%s1989 + $0x1c] sm:$0xf]
        %v1998 = vld [vmem:[%s1989 + $0x20] sm:$0xf]
        %v1999 = vld [vmem:[%s1989 + $0x24] sm:$0xf]
        %v2000 = vld [vmem:[%s1989 + $0x28] sm:$0xf]
        %v2001 = vld [vmem:[%s1989 + $0x2c] sm:$0xf]
        %v2002 = vld [vmem:[%s1989 + $0x30] sm:$0xf]
        %v2003 = vld [vmem:[%s1989 + $0x34] sm:$0xf]
        %v2004 = vld [vmem:[%s1989 + $0x38] sm:$0xf]
        %v2005 = vld [vmem:[%s1989 + $0x3c] sm:$0xf]
        %v2022 = vunpack.c.l.b16 %v1990
        %v2023 = vunpack.c.l.b16 %v1991
        %v2024 = vunpack.c.l.b16 %v1992
        %v2025 = vunpack.c.l.b16 %v1993
        %v2026 = vunpack.c.l.b16 %v1994
        %v2027 = vunpack.c.l.b16 %v1995
        %v2028 = vunpack.c.l.b16 %v1996
        %v2029 = vunpack.c.l.b16 %v1997
        %v2030 = vunpack.c.l.b16 %v1998
        %v2031 = vunpack.c.l.b16 %v1999
        %v2032 = vunpack.c.l.b16 %v2000
        %v2033 = vunpack.c.l.b16 %v2001
        %v2034 = vunpack.c.l.b16 %v2002
        %v2035 = vunpack.c.l.b16 %v2003
        %v2036 = vunpack.c.l.b16 %v2004
        %v2037 = vunpack.c.l.b16 %v2005
        %v2038 = vpack.c.b16 %v2023, %v2022
        %v2039 = vpack.c.b16 %v2025, %v2024
        %v2040 = vpack.c.b16 %v2027, %v2026
        %v2041 = vpack.c.b16 %v2029, %v2028
        %v2042 = vpack.c.b16 %v2031, %v2030
        %v2043 = vpack.c.b16 %v2033, %v2032
        %v2044 = vpack.c.b16 %v2035, %v2034
        %v2045 = vpack.c.b16 %v2037, %v2036
        %2054 = vmatpush.bf16.msra.mxu0 %v2045
        %2055 = vmatpush.bf16.msra.mxu0 %v2044
        %2056 = vmatpush.bf16.msra.mxu0 %v2043
        %2057 = vmatpush.bf16.msra.mxu0 %v2042
        %2058 = vmatpush.bf16.msra.mxu0 %v2041
        %2059 = vmatpush.bf16.msra.mxu0 %v2040
        %2060 = vmatpush.bf16.msra.mxu0 %v2039
        %2061 = vmatpush.bf16.msra.mxu0 %v2038
        %2062 = vmatmul.bf16.gmra.mxu0 %v1988
        %v2063 = vpop.f32.mrf.mxu0
        %v2064 = vadd.f32 0.0, %v2063
        %v2065 = vpop.f32.mrf.mxu0
        %v2066 = vadd.f32 0.0, %v2065
        %2067 = vdwg.mxu0
        %v2068 = vadd.f32 %v1980, %v2064
        %v2069 = vadd.f32 %v1981, %v2066
        %v2070 = vrot.slane %v1638, 2
        %v2071 = vrot.slane %v1639, 2
        %v2072 = vsel %vm1408, %v2070, %v2071
        %v2073 = vsel %vm1408, %v2071, %v2070
        %v2074 = vmul.f32 %v2072, %v904
        %v2075 = vmul.f32 %v2073, %v905
        %v2076 = vpack.c.bf16 %v2075, %v2074
        %s2077 = scalar_lea.vmem [#allocation11], 768
        %v2078 = vld [vmem:[%s2077] sm:$0xf]
        %v2079 = vld [vmem:[%s2077 + $0x4] sm:$0xf]
        %v2080 = vld [vmem:[%s2077 + $0x8] sm:$0xf]
        %v2081 = vld [vmem:[%s2077 + $0xc] sm:$0xf]
        %v2082 = vld [vmem:[%s2077 + $0x10] sm:$0xf]
        %v2083 = vld [vmem:[%s2077 + $0x14] sm:$0xf]
        %v2084 = vld [vmem:[%s2077 + $0x18] sm:$0xf]
        %v2085 = vld [vmem:[%s2077 + $0x1c] sm:$0xf]
        %v2086 = vld [vmem:[%s2077 + $0x20] sm:$0xf]
        %v2087 = vld [vmem:[%s2077 + $0x24] sm:$0xf]
        %v2088 = vld [vmem:[%s2077 + $0x28] sm:$0xf]
        %v2089 = vld [vmem:[%s2077 + $0x2c] sm:$0xf]
        %v2090 = vld [vmem:[%s2077 + $0x30] sm:$0xf]
        %v2091 = vld [vmem:[%s2077 + $0x34] sm:$0xf]
        %v2092 = vld [vmem:[%s2077 + $0x38] sm:$0xf]
        %v2093 = vld [vmem:[%s2077 + $0x3c] sm:$0xf]
        %v2110 = vunpack.c.l.b16 %v2078
        %v2111 = vunpack.c.l.b16 %v2079
        %v2112 = vunpack.c.l.b16 %v2080
        %v2113 = vunpack.c.l.b16 %v2081
        %v2114 = vunpack.c.l.b16 %v2082
        %v2115 = vunpack.c.l.b16 %v2083
        %v2116 = vunpack.c.l.b16 %v2084
        %v2117 = vunpack.c.l.b16 %v2085
        %v2118 = vunpack.c.l.b16 %v2086
        %v2119 = vunpack.c.l.b16 %v2087
        %v2120 = vunpack.c.l.b16 %v2088
        %v2121 = vunpack.c.l.b16 %v2089
        %v2122 = vunpack.c.l.b16 %v2090
        %v2123 = vunpack.c.l.b16 %v2091
        %v2124 = vunpack.c.l.b16 %v2092
        %v2125 = vunpack.c.l.b16 %v2093
        %v2126 = vpack.c.b16 %v2111, %v2110
        %v2127 = vpack.c.b16 %v2113, %v2112
        %v2128 = vpack.c.b16 %v2115, %v2114
        %v2129 = vpack.c.b16 %v2117, %v2116
        %v2130 = vpack.c.b16 %v2119, %v2118
        %v2131 = vpack.c.b16 %v2121, %v2120
        %v2132 = vpack.c.b16 %v2123, %v2122
        %v2133 = vpack.c.b16 %v2125, %v2124
        %2142 = vmatpush.bf16.msra.mxu0 %v2133
        %2143 = vmatpush.bf16.msra.mxu0 %v2132
        %2144 = vmatpush.bf16.msra.mxu0 %v2131
        %2145 = vmatpush.bf16.msra.mxu0 %v2130
        %2146 = vmatpush.bf16.msra.mxu0 %v2129
        %2147 = vmatpush.bf16.msra.mxu0 %v2128
        %2148 = vmatpush.bf16.msra.mxu0 %v2127
        %2149 = vmatpush.bf16.msra.mxu0 %v2126
        %2150 = vmatmul.bf16.gmra.mxu0 %v2076
        %v2151 = vpop.f32.mrf.mxu0
        %v2152 = vadd.f32 0.0, %v2151
        %v2153 = vpop.f32.mrf.mxu0
        %v2154 = vadd.f32 0.0, %v2153
        %2155 = vdwg.mxu0
        %v2156 = vadd.f32 %v2068, %v2152
        %v2157 = vadd.f32 %v2069, %v2154
        %v2158 = vrot.slane %v1638, 3
        %v2159 = vrot.slane %v1639, 3
        %v2160 = vsel %vm1497, %v2158, %v2159
        %v2161 = vsel %vm1497, %v2159, %v2158
        %v2162 = vmul.f32 %v2160, %v916
        %v2163 = vmul.f32 %v2161, %v917
        %v2164 = vpack.c.bf16 %v2163, %v2162
        %s2165 = scalar_lea.vmem [#allocation11], 832
        %v2166 = vld [vmem:[%s2165] sm:$0xf]
        %v2167 = vld [vmem:[%s2165 + $0x4] sm:$0xf]
        %v2168 = vld [vmem:[%s2165 + $0x8] sm:$0xf]
        %v2169 = vld [vmem:[%s2165 + $0xc] sm:$0xf]
        %v2170 = vld [vmem:[%s2165 + $0x10] sm:$0xf]
        %v2171 = vld [vmem:[%s2165 + $0x14] sm:$0xf]
        %v2172 = vld [vmem:[%s2165 + $0x18] sm:$0xf]
        %v2173 = vld [vmem:[%s2165 + $0x1c] sm:$0xf]
        %v2174 = vld [vmem:[%s2165 + $0x20] sm:$0xf]
        %v2175 = vld [vmem:[%s2165 + $0x24] sm:$0xf]
        %v2176 = vld [vmem:[%s2165 + $0x28] sm:$0xf]
        %v2177 = vld [vmem:[%s2165 + $0x2c] sm:$0xf]
        %v2178 = vld [vmem:[%s2165 + $0x30] sm:$0xf]
        %v2179 = vld [vmem:[%s2165 + $0x34] sm:$0xf]
        %v2180 = vld [vmem:[%s2165 + $0x38] sm:$0xf]
        %v2181 = vld [vmem:[%s2165 + $0x3c] sm:$0xf]
        %v2198 = vunpack.c.l.b16 %v2166
        %v2199 = vunpack.c.l.b16 %v2167
        %v2200 = vunpack.c.l.b16 %v2168
        %v2201 = vunpack.c.l.b16 %v2169
        %v2202 = vunpack.c.l.b16 %v2170
        %v2203 = vunpack.c.l.b16 %v2171
        %v2204 = vunpack.c.l.b16 %v2172
        %v2205 = vunpack.c.l.b16 %v2173
        %v2206 = vunpack.c.l.b16 %v2174
        %v2207 = vunpack.c.l.b16 %v2175
        %v2208 = vunpack.c.l.b16 %v2176
        %v2209 = vunpack.c.l.b16 %v2177
        %v2210 = vunpack.c.l.b16 %v2178
        %v2211 = vunpack.c.l.b16 %v2179
        %v2212 = vunpack.c.l.b16 %v2180
        %v2213 = vunpack.c.l.b16 %v2181
        %v2214 = vpack.c.b16 %v2199, %v2198
        %v2215 = vpack.c.b16 %v2201, %v2200
        %v2216 = vpack.c.b16 %v2203, %v2202
        %v2217 = vpack.c.b16 %v2205, %v2204
        %v2218 = vpack.c.b16 %v2207, %v2206
        %v2219 = vpack.c.b16 %v2209, %v2208
        %v2220 = vpack.c.b16 %v2211, %v2210
        %v2221 = vpack.c.b16 %v2213, %v2212
        %2230 = vmatpush.bf16.msra.mxu0 %v2221
        %2231 = vmatpush.bf16.msra.mxu0 %v2220
        %2232 = vmatpush.bf16.msra.mxu0 %v2219
        %2233 = vmatpush.bf16.msra.mxu0 %v2218
        %2234 = vmatpush.bf16.msra.mxu0 %v2217
        %2235 = vmatpush.bf16.msra.mxu0 %v2216
        %2236 = vmatpush.bf16.msra.mxu0 %v2215
        %2237 = vmatpush.bf16.msra.mxu0 %v2214
        %2238 = vmatmul.bf16.gmra.mxu0 %v2164
        %v2239 = vpop.f32.mrf.mxu0
        %v2240 = vadd.f32 0.0, %v2239
        %v2241 = vpop.f32.mrf.mxu0
        %v2242 = vadd.f32 0.0, %v2241
        %2243 = vdwg.mxu0
        %v2244 = vadd.f32 %v2156, %v2240
        %v2245 = vadd.f32 %v2157, %v2242
        %v2246 = vld [vmem:[%s6 + $0x1] sm:$0x1]
        %v2247 = vperm.slane %v2246, 0
        %v2248 = vadd.f32 %v2244, %v2247
        %v2249 = vadd.f32 %v2245, %v2247
        %v2250 = vmax.f32 %v2248, 0.0
        %v2251 = vmax.f32 %v2249, 0.0
        %v2252 = vadd.f32 %v2250, %v1590
        %v2253 = vadd.f32 %v2251, %v1591
        %v2254 = vld [vmem:[#allocation8 + $0x2] sm:$0x1]
        %v2255 = vld [vmem:[#allocation9 + $0x2] sm:$0x1]
        %2256 = vadd.xlane.f32.xlu0 %v2252
        %v2257 = vpop.xlane.xlu0 %2256
        %2258 = vadd.xlane.f32.xlu0 %v2253
        %v2259 = vpop.xlane.xlu0 %2258
        %v2260 = vmul.f32 %v2257, %v930
        %v2261 = vmul.f32 %v2259, %v930
        %v2262 = vsub.f32 %v2252, %v2260
        %v2263 = vsub.f32 %v2253, %v2261
        %v2264 = vmul.f32 %v2262, %v2262
        %v2265 = vmul.f32 %v2263, %v2263
        %2266 = vadd.xlane.f32.xlu0 %v2264
        %v2267 = vpop.xlane.xlu0 %2266
        %2268 = vadd.xlane.f32.xlu0 %v2265
        %v2269 = vpop.xlane.xlu0 %2268
        %v2270 = vmul.f32 %v2267, %v930
        %v2271 = vmul.f32 %v2269, %v930
        %v2272 = vadd.f32 %v2270, 1e-05
        %v2273 = vadd.f32 %v2271, 1e-05
        %v2274 = vrsqrt.pop %v2272
        %v2275 = vmul.f32 %v2274, %v2272
        %v2276 = vmul.f32 %v2275, %v2274
        %v2277 = vmul.f32 0.5, %v2276
        %v2278 = vsub.f32 1.5, %v2277
        %v2279 = vmul.f32 %v2274, %v2278
        %vm2280 = vweird.f32 %v2272
        %vm2281 = vweird.f32 %v2274
        %vm2282 = vmor %vm2280, %vm2281
        %v2283 = vsel %vm2282, %v2274, %v2279
        %v2284 = vrsqrt.pop %v2273
        %v2285 = vmul.f32 %v2284, %v2273
        %v2286 = vmul.f32 %v2285, %v2284
        %v2287 = vmul.f32 0.5, %v2286
        %v2288 = vsub.f32 1.5, %v2287
        %v2289 = vmul.f32 %v2284, %v2288
        %vm2290 = vweird.f32 %v2273
        %vm2291 = vweird.f32 %v2284
        %vm2292 = vmor %vm2290, %vm2291
        %v2293 = vsel %vm2292, %v2284, %v2289
        %v2294 = vmul.f32 %v2262, %v2283
        %v2295 = vmul.f32 %v2263, %v2293
        %v2296 = vperm.slane %v2254, 0
        %v2297 = vmul.f32 %v2294, %v2296
        %v2298 = vmul.f32 %v2295, %v2296
        %v2299 = vperm.slane %v2255, 0
        %v2300 = vadd.f32 %v2297, %v2299
        %v2301 = vadd.f32 %v2298, %v2299
        %v2302 = vrot.slane %v2300, 5
        %v2303 = vrot.slane %v2301, 5
        %v2304 = vsel %vm975, %v2302, %v2303
        %v2305 = vsel %vm975, %v2303, %v2302
        %v2306 = vmul.f32 %v2305, %v856
        %v2307 = vmul.f32 %v2304, %v857
        %v2308 = vpack.c.bf16 %v2307, %v2306
        %s2309 = scalar_lea.vmem [#allocation11], 896
        %v2310 = vld [vmem:[%s2309] sm:$0xf]
        %v2311 = vld [vmem:[%s2309 + $0x4] sm:$0xf]
        %v2312 = vld [vmem:[%s2309 + $0x8] sm:$0xf]
        %v2313 = vld [vmem:[%s2309 + $0xc] sm:$0xf]
        %v2314 = vld [vmem:[%s2309 + $0x10] sm:$0xf]
        %v2315 = vld [vmem:[%s2309 + $0x14] sm:$0xf]
        %v2316 = vld [vmem:[%s2309 + $0x18] sm:$0xf]
        %v2317 = vld [vmem:[%s2309 + $0x1c] sm:$0xf]
        %v2318 = vld [vmem:[%s2309 + $0x20] sm:$0xf]
        %v2319 = vld [vmem:[%s2309 + $0x24] sm:$0xf]
        %v2320 = vld [vmem:[%s2309 + $0x28] sm:$0xf]
        %v2321 = vld [vmem:[%s2309 + $0x2c] sm:$0xf]
        %v2322 = vld [vmem:[%s2309 + $0x30] sm:$0xf]
        %v2323 = vld [vmem:[%s2309 + $0x34] sm:$0xf]
        %v2324 = vld [vmem:[%s2309 + $0x38] sm:$0xf]
        %v2325 = vld [vmem:[%s2309 + $0x3c] sm:$0xf]
        %v2326 = vrot.slane %v2300, 6
        %v2327 = vrot.slane %v2301, 6
        %v2328 = vsel %vm999, %v2326, %v2327
        %v2329 = vsel %vm999, %v2327, %v2326
        %v2330 = vmul.f32 %v2329, %v868
        %v2331 = vmul.f32 %v2328, %v869
        %v2332 = vpack.c.bf16 %v2331, %v2330
        %s2333 = scalar_lea.vmem [#allocation11], 960
        %v2334 = vld [vmem:[%s2333] sm:$0xf]
        %v2335 = vld [vmem:[%s2333 + $0x4] sm:$0xf]
        %v2336 = vld [vmem:[%s2333 + $0x8] sm:$0xf]
        %v2337 = vld [vmem:[%s2333 + $0xc] sm:$0xf]
        %v2338 = vld [vmem:[%s2333 + $0x10] sm:$0xf]
        %v2339 = vld [vmem:[%s2333 + $0x14] sm:$0xf]
        %v2340 = vld [vmem:[%s2333 + $0x18] sm:$0xf]
        %v2341 = vld [vmem:[%s2333 + $0x1c] sm:$0xf]
        %v2342 = vld [vmem:[%s2333 + $0x20] sm:$0xf]
        %v2343 = vld [vmem:[%s2333 + $0x24] sm:$0xf]
        %v2344 = vld [vmem:[%s2333 + $0x28] sm:$0xf]
        %v2345 = vld [vmem:[%s2333 + $0x2c] sm:$0xf]
        %v2346 = vld [vmem:[%s2333 + $0x30] sm:$0xf]
        %v2347 = vld [vmem:[%s2333 + $0x34] sm:$0xf]
        %v2348 = vld [vmem:[%s2333 + $0x38] sm:$0xf]
        %v2349 = vld [vmem:[%s2333 + $0x3c] sm:$0xf]
        %v2366 = vunpack.c.l.b16 %v2334
        %v2367 = vunpack.c.l.b16 %v2335
        %v2368 = vunpack.c.l.b16 %v2336
        %v2369 = vunpack.c.l.b16 %v2337
        %v2370 = vunpack.c.l.b16 %v2338
        %v2371 = vunpack.c.l.b16 %v2339
        %v2372 = vunpack.c.l.b16 %v2340
        %v2373 = vunpack.c.l.b16 %v2341
        %v2374 = vunpack.c.l.b16 %v2342
        %v2375 = vunpack.c.l.b16 %v2343
        %v2376 = vunpack.c.l.b16 %v2344
        %v2377 = vunpack.c.l.b16 %v2345
        %v2378 = vunpack.c.l.b16 %v2346
        %v2379 = vunpack.c.l.b16 %v2347
        %v2380 = vunpack.c.l.b16 %v2348
        %v2381 = vunpack.c.l.b16 %v2349
        %v2382 = vpack.c.b16 %v2367, %v2366
        %v2383 = vpack.c.b16 %v2369, %v2368
        %v2384 = vpack.c.b16 %v2371, %v2370
        %v2385 = vpack.c.b16 %v2373, %v2372
        %v2386 = vpack.c.b16 %v2375, %v2374
        %v2387 = vpack.c.b16 %v2377, %v2376
        %v2388 = vpack.c.b16 %v2379, %v2378
        %v2389 = vpack.c.b16 %v2381, %v2380
        %2398 = vmatpush.bf16.msra.mxu0 %v2389
        %2399 = vmatpush.bf16.msra.mxu0 %v2388
        %2400 = vmatpush.bf16.msra.mxu0 %v2387
        %2401 = vmatpush.bf16.msra.mxu0 %v2386
        %2402 = vmatpush.bf16.msra.mxu0 %v2385
        %2403 = vmatpush.bf16.msra.mxu0 %v2384
        %2404 = vmatpush.bf16.msra.mxu0 %v2383
        %2405 = vmatpush.bf16.msra.mxu0 %v2382
        %2406 = vmatmul.bf16.gmra.mxu0 %v2332
        %v2407 = vpop.f32.mrf.mxu0
        %v2408 = vadd.f32 0.0, %v2407
        %v2409 = vpop.f32.mrf.mxu0
        %v2410 = vadd.f32 0.0, %v2409
        %2411 = vdwg.mxu0
        %v2428 = vunpack.c.l.b16 %v2310
        %v2429 = vunpack.c.l.b16 %v2311
        %v2430 = vunpack.c.l.b16 %v2312
        %v2431 = vunpack.c.l.b16 %v2313
        %v2432 = vunpack.c.l.b16 %v2314
        %v2433 = vunpack.c.l.b16 %v2315
        %v2434 = vunpack.c.l.b16 %v2316
        %v2435 = vunpack.c.l.b16 %v2317
        %v2436 = vunpack.c.l.b16 %v2318
        %v2437 = vunpack.c.l.b16 %v2319
        %v2438 = vunpack.c.l.b16 %v2320
        %v2439 = vunpack.c.l.b16 %v2321
        %v2440 = vunpack.c.l.b16 %v2322
        %v2441 = vunpack.c.l.b16 %v2323
        %v2442 = vunpack.c.l.b16 %v2324
        %v2443 = vunpack.c.l.b16 %v2325
        %v2444 = vpack.c.b16 %v2429, %v2428
        %v2445 = vpack.c.b16 %v2431, %v2430
        %v2446 = vpack.c.b16 %v2433, %v2432
        %v2447 = vpack.c.b16 %v2435, %v2434
        %v2448 = vpack.c.b16 %v2437, %v2436
        %v2449 = vpack.c.b16 %v2439, %v2438
        %v2450 = vpack.c.b16 %v2441, %v2440
        %v2451 = vpack.c.b16 %v2443, %v2442
        %2460 = vmatpush.bf16.msra.mxu0 %v2451
        %2461 = vmatpush.bf16.msra.mxu0 %v2450
        %2462 = vmatpush.bf16.msra.mxu0 %v2449
        %2463 = vmatpush.bf16.msra.mxu0 %v2448
        %2464 = vmatpush.bf16.msra.mxu0 %v2447
        %2465 = vmatpush.bf16.msra.mxu0 %v2446
        %2466 = vmatpush.bf16.msra.mxu0 %v2445
        %2467 = vmatpush.bf16.msra.mxu0 %v2444
        %2468 = vmatmul.bf16.gmra.mxu0 %v2308
        %v2469 = vpop.f32.mrf.mxu0
        %v2470 = vadd.f32 %v2408, %v2469
        %v2471 = vpop.f32.mrf.mxu0
        %v2472 = vadd.f32 %v2410, %v2471
        %2473 = vdwg.mxu0
        %v2474 = vrot.slane %v2300, 7
        %v2475 = vrot.slane %v2301, 7
        %v2476 = vsel %vm1148, %v2474, %v2475
        %v2477 = vsel %vm1148, %v2475, %v2474
        %v2478 = vmul.f32 %v2477, %v880
        %v2479 = vmul.f32 %v2476, %v881
        %v2480 = vpack.c.bf16 %v2479, %v2478
        %s2481 = scalar_lea.vmem [#allocation11], 1024
        %v2482 = vld [vmem:[%s2481] sm:$0xf]
        %v2483 = vld [vmem:[%s2481 + $0x4] sm:$0xf]
        %v2484 = vld [vmem:[%s2481 + $0x8] sm:$0xf]
        %v2485 = vld [vmem:[%s2481 + $0xc] sm:$0xf]
        %v2486 = vld [vmem:[%s2481 + $0x10] sm:$0xf]
        %v2487 = vld [vmem:[%s2481 + $0x14] sm:$0xf]
        %v2488 = vld [vmem:[%s2481 + $0x18] sm:$0xf]
        %v2489 = vld [vmem:[%s2481 + $0x1c] sm:$0xf]
        %v2490 = vld [vmem:[%s2481 + $0x20] sm:$0xf]
        %v2491 = vld [vmem:[%s2481 + $0x24] sm:$0xf]
        %v2492 = vld [vmem:[%s2481 + $0x28] sm:$0xf]
        %v2493 = vld [vmem:[%s2481 + $0x2c] sm:$0xf]
        %v2494 = vld [vmem:[%s2481 + $0x30] sm:$0xf]
        %v2495 = vld [vmem:[%s2481 + $0x34] sm:$0xf]
        %v2496 = vld [vmem:[%s2481 + $0x38] sm:$0xf]
        %v2497 = vld [vmem:[%s2481 + $0x3c] sm:$0xf]
        %v2514 = vunpack.c.l.b16 %v2482
        %v2515 = vunpack.c.l.b16 %v2483
        %v2516 = vunpack.c.l.b16 %v2484
        %v2517 = vunpack.c.l.b16 %v2485
        %v2518 = vunpack.c.l.b16 %v2486
        %v2519 = vunpack.c.l.b16 %v2487
        %v2520 = vunpack.c.l.b16 %v2488
        %v2521 = vunpack.c.l.b16 %v2489
        %v2522 = vunpack.c.l.b16 %v2490
        %v2523 = vunpack.c.l.b16 %v2491
        %v2524 = vunpack.c.l.b16 %v2492
        %v2525 = vunpack.c.l.b16 %v2493
        %v2526 = vunpack.c.l.b16 %v2494
        %v2527 = vunpack.c.l.b16 %v2495
        %v2528 = vunpack.c.l.b16 %v2496
        %v2529 = vunpack.c.l.b16 %v2497
        %v2530 = vpack.c.b16 %v2515, %v2514
        %v2531 = vpack.c.b16 %v2517, %v2516
        %v2532 = vpack.c.b16 %v2519, %v2518
        %v2533 = vpack.c.b16 %v2521, %v2520
        %v2534 = vpack.c.b16 %v2523, %v2522
        %v2535 = vpack.c.b16 %v2525, %v2524
        %v2536 = vpack.c.b16 %v2527, %v2526
        %v2537 = vpack.c.b16 %v2529, %v2528
        %2546 = vmatpush.bf16.msra.mxu0 %v2537
        %2547 = vmatpush.bf16.msra.mxu0 %v2536
        %2548 = vmatpush.bf16.msra.mxu0 %v2535
        %2549 = vmatpush.bf16.msra.mxu0 %v2534
        %2550 = vmatpush.bf16.msra.mxu0 %v2533
        %2551 = vmatpush.bf16.msra.mxu0 %v2532
        %2552 = vmatpush.bf16.msra.mxu0 %v2531
        %2553 = vmatpush.bf16.msra.mxu0 %v2530
        %2554 = vmatmul.bf16.gmra.mxu0 %v2480
        %v2555 = vpop.f32.mrf.mxu0
        %v2556 = vadd.f32 0.0, %v2555
        %v2557 = vpop.f32.mrf.mxu0
        %v2558 = vadd.f32 0.0, %v2557
        %2559 = vdwg.mxu0
        %v2560 = vadd.f32 %v2470, %v2556
        %v2561 = vadd.f32 %v2472, %v2558
        %v2562 = vpack.c.bf16 %v2301, %v2300
        %s2563 = scalar_lea.vmem [#allocation11], 1088
        %v2564 = vld [vmem:[%s2563] sm:$0xf]
        %v2565 = vld [vmem:[%s2563 + $0x4] sm:$0xf]
        %v2566 = vld [vmem:[%s2563 + $0x8] sm:$0xf]
        %v2567 = vld [vmem:[%s2563 + $0xc] sm:$0xf]
        %v2568 = vld [vmem:[%s2563 + $0x10] sm:$0xf]
        %v2569 = vld [vmem:[%s2563 + $0x14] sm:$0xf]
        %v2570 = vld [vmem:[%s2563 + $0x18] sm:$0xf]
        %v2571 = vld [vmem:[%s2563 + $0x1c] sm:$0xf]
        %v2572 = vld [vmem:[%s2563 + $0x20] sm:$0xf]
        %v2573 = vld [vmem:[%s2563 + $0x24] sm:$0xf]
        %v2574 = vld [vmem:[%s2563 + $0x28] sm:$0xf]
        %v2575 = vld [vmem:[%s2563 + $0x2c] sm:$0xf]
        %v2576 = vld [vmem:[%s2563 + $0x30] sm:$0xf]
        %v2577 = vld [vmem:[%s2563 + $0x34] sm:$0xf]
        %v2578 = vld [vmem:[%s2563 + $0x38] sm:$0xf]
        %v2579 = vld [vmem:[%s2563 + $0x3c] sm:$0xf]
        %v2596 = vunpack.c.l.b16 %v2564
        %v2597 = vunpack.c.l.b16 %v2565
        %v2598 = vunpack.c.l.b16 %v2566
        %v2599 = vunpack.c.l.b16 %v2567
        %v2600 = vunpack.c.l.b16 %v2568
        %v2601 = vunpack.c.l.b16 %v2569
        %v2602 = vunpack.c.l.b16 %v2570
        %v2603 = vunpack.c.l.b16 %v2571
        %v2604 = vunpack.c.l.b16 %v2572
        %v2605 = vunpack.c.l.b16 %v2573
        %v2606 = vunpack.c.l.b16 %v2574
        %v2607 = vunpack.c.l.b16 %v2575
        %v2608 = vunpack.c.l.b16 %v2576
        %v2609 = vunpack.c.l.b16 %v2577
        %v2610 = vunpack.c.l.b16 %v2578
        %v2611 = vunpack.c.l.b16 %v2579
        %v2612 = vpack.c.b16 %v2597, %v2596
        %v2613 = vpack.c.b16 %v2599, %v2598
        %v2614 = vpack.c.b16 %v2601, %v2600
        %v2615 = vpack.c.b16 %v2603, %v2602
        %v2616 = vpack.c.b16 %v2605, %v2604
        %v2617 = vpack.c.b16 %v2607, %v2606
        %v2618 = vpack.c.b16 %v2609, %v2608
        %v2619 = vpack.c.b16 %v2611, %v2610
        %2628 = vmatpush.bf16.msra.mxu0 %v2619
        %2629 = vmatpush.bf16.msra.mxu0 %v2618
        %2630 = vmatpush.bf16.msra.mxu0 %v2617
        %2631 = vmatpush.bf16.msra.mxu0 %v2616
        %2632 = vmatpush.bf16.msra.mxu0 %v2615
        %2633 = vmatpush.bf16.msra.mxu0 %v2614
        %2634 = vmatpush.bf16.msra.mxu0 %v2613
        %2635 = vmatpush.bf16.msra.mxu0 %v2612
        %2636 = vmatmul.bf16.gmra.mxu0 %v2562
        %v2637 = vpop.f32.mrf.mxu0
        %v2638 = vadd.f32 0.0, %v2637
        %v2639 = vpop.f32.mrf.mxu0
        %v2640 = vadd.f32 0.0, %v2639
        %2641 = vdwg.mxu0
        %v2642 = vadd.f32 %v2560, %v2638
        %v2643 = vadd.f32 %v2561, %v2640
        %v2644 = vrot.slane %v2300, 1
        %v2645 = vrot.slane %v2301, 1
        %v2646 = vsel %vm1319, %v2644, %v2645
        %v2647 = vsel %vm1319, %v2645, %v2644
        %v2648 = vmul.f32 %v2646, %v892
        %v2649 = vmul.f32 %v2647, %v893
        %v2650 = vpack.c.bf16 %v2649, %v2648
        %s2651 = scalar_lea.vmem [#allocation11], 1152
        %v2652 = vld [vmem:[%s2651] sm:$0xf]
        %v2653 = vld [vmem:[%s2651 + $0x4] sm:$0xf]
        %v2654 = vld [vmem:[%s2651 + $0x8] sm:$0xf]
        %v2655 = vld [vmem:[%s2651 + $0xc] sm:$0xf]
        %v2656 = vld [vmem:[%s2651 + $0x10] sm:$0xf]
        %v2657 = vld [vmem:[%s2651 + $0x14] sm:$0xf]
        %v2658 = vld [vmem:[%s2651 + $0x18] sm:$0xf]
        %v2659 = vld [vmem:[%s2651 + $0x1c] sm:$0xf]
        %v2660 = vld [vmem:[%s2651 + $0x20] sm:$0xf]
        %v2661 = vld [vmem:[%s2651 + $0x24] sm:$0xf]
        %v2662 = vld [vmem:[%s2651 + $0x28] sm:$0xf]
        %v2663 = vld [vmem:[%s2651 + $0x2c] sm:$0xf]
        %v2664 = vld [vmem:[%s2651 + $0x30] sm:$0xf]
        %v2665 = vld [vmem:[%s2651 + $0x34] sm:$0xf]
        %v2666 = vld [vmem:[%s2651 + $0x38] sm:$0xf]
        %v2667 = vld [vmem:[%s2651 + $0x3c] sm:$0xf]
        %v2684 = vunpack.c.l.b16 %v2652
        %v2685 = vunpack.c.l.b16 %v2653
        %v2686 = vunpack.c.l.b16 %v2654
        %v2687 = vunpack.c.l.b16 %v2655
        %v2688 = vunpack.c.l.b16 %v2656
        %v2689 = vunpack.c.l.b16 %v2657
        %v2690 = vunpack.c.l.b16 %v2658
        %v2691 = vunpack.c.l.b16 %v2659
        %v2692 = vunpack.c.l.b16 %v2660
        %v2693 = vunpack.c.l.b16 %v2661
        %v2694 = vunpack.c.l.b16 %v2662
        %v2695 = vunpack.c.l.b16 %v2663
        %v2696 = vunpack.c.l.b16 %v2664
        %v2697 = vunpack.c.l.b16 %v2665
        %v2698 = vunpack.c.l.b16 %v2666
        %v2699 = vunpack.c.l.b16 %v2667
        %v2700 = vpack.c.b16 %v2685, %v2684
        %v2701 = vpack.c.b16 %v2687, %v2686
        %v2702 = vpack.c.b16 %v2689, %v2688
        %v2703 = vpack.c.b16 %v2691, %v2690
        %v2704 = vpack.c.b16 %v2693, %v2692
        %v2705 = vpack.c.b16 %v2695, %v2694
        %v2706 = vpack.c.b16 %v2697, %v2696
        %v2707 = vpack.c.b16 %v2699, %v2698
        %2716 = vmatpush.bf16.msra.mxu0 %v2707
        %2717 = vmatpush.bf16.msra.mxu0 %v2706
        %2718 = vmatpush.bf16.msra.mxu0 %v2705
        %2719 = vmatpush.bf16.msra.mxu0 %v2704
        %2720 = vmatpush.bf16.msra.mxu0 %v2703
        %2721 = vmatpush.bf16.msra.mxu0 %v2702
        %2722 = vmatpush.bf16.msra.mxu0 %v2701
        %2723 = vmatpush.bf16.msra.mxu0 %v2700
        %2724 = vmatmul.bf16.gmra.mxu0 %v2650
        %v2725 = vpop.f32.mrf.mxu0
        %v2726 = vadd.f32 0.0, %v2725
        %v2727 = vpop.f32.mrf.mxu0
        %v2728 = vadd.f32 0.0, %v2727
        %2729 = vdwg.mxu0
        %v2730 = vadd.f32 %v2642, %v2726
        %v2731 = vadd.f32 %v2643, %v2728
        %v2732 = vrot.slane %v2300, 2
        %v2733 = vrot.slane %v2301, 2
        %v2734 = vsel %vm1408, %v2732, %v2733
        %v2735 = vsel %vm1408, %v2733, %v2732
        %v2736 = vmul.f32 %v2734, %v904
        %v2737 = vmul.f32 %v2735, %v905
        %v2738 = vpack.c.bf16 %v2737, %v2736
        %s2739 = scalar_lea.vmem [#allocation11], 1216
        %v2740 = vld [vmem:[%s2739] sm:$0xf]
        %v2741 = vld [vmem:[%s2739 + $0x4] sm:$0xf]
        %v2742 = vld [vmem:[%s2739 + $0x8] sm:$0xf]
        %v2743 = vld [vmem:[%s2739 + $0xc] sm:$0xf]
        %v2744 = vld [vmem:[%s2739 + $0x10] sm:$0xf]
        %v2745 = vld [vmem:[%s2739 + $0x14] sm:$0xf]
        %v2746 = vld [vmem:[%s2739 + $0x18] sm:$0xf]
        %v2747 = vld [vmem:[%s2739 + $0x1c] sm:$0xf]
        %v2748 = vld [vmem:[%s2739 + $0x20] sm:$0xf]
        %v2749 = vld [vmem:[%s2739 + $0x24] sm:$0xf]
        %v2750 = vld [vmem:[%s2739 + $0x28] sm:$0xf]
        %v2751 = vld [vmem:[%s2739 + $0x2c] sm:$0xf]
        %v2752 = vld [vmem:[%s2739 + $0x30] sm:$0xf]
        %v2753 = vld [vmem:[%s2739 + $0x34] sm:$0xf]
        %v2754 = vld [vmem:[%s2739 + $0x38] sm:$0xf]
        %v2755 = vld [vmem:[%s2739 + $0x3c] sm:$0xf]
        %v2772 = vunpack.c.l.b16 %v2740
        %v2773 = vunpack.c.l.b16 %v2741
        %v2774 = vunpack.c.l.b16 %v2742
        %v2775 = vunpack.c.l.b16 %v2743
        %v2776 = vunpack.c.l.b16 %v2744
        %v2777 = vunpack.c.l.b16 %v2745
        %v2778 = vunpack.c.l.b16 %v2746
        %v2779 = vunpack.c.l.b16 %v2747
        %v2780 = vunpack.c.l.b16 %v2748
        %v2781 = vunpack.c.l.b16 %v2749
        %v2782 = vunpack.c.l.b16 %v2750
        %v2783 = vunpack.c.l.b16 %v2751
        %v2784 = vunpack.c.l.b16 %v2752
        %v2785 = vunpack.c.l.b16 %v2753
        %v2786 = vunpack.c.l.b16 %v2754
        %v2787 = vunpack.c.l.b16 %v2755
        %v2788 = vpack.c.b16 %v2773, %v2772
        %v2789 = vpack.c.b16 %v2775, %v2774
        %v2790 = vpack.c.b16 %v2777, %v2776
        %v2791 = vpack.c.b16 %v2779, %v2778
        %v2792 = vpack.c.b16 %v2781, %v2780
        %v2793 = vpack.c.b16 %v2783, %v2782
        %v2794 = vpack.c.b16 %v2785, %v2784
        %v2795 = vpack.c.b16 %v2787, %v2786
        %2804 = vmatpush.bf16.msra.mxu0 %v2795
        %2805 = vmatpush.bf16.msra.mxu0 %v2794
        %2806 = vmatpush.bf16.msra.mxu0 %v2793
        %2807 = vmatpush.bf16.msra.mxu0 %v2792
        %2808 = vmatpush.bf16.msra.mxu0 %v2791
        %2809 = vmatpush.bf16.msra.mxu0 %v2790
        %2810 = vmatpush.bf16.msra.mxu0 %v2789
        %2811 = vmatpush.bf16.msra.mxu0 %v2788
        %2812 = vmatmul.bf16.gmra.mxu0 %v2738
        %v2813 = vpop.f32.mrf.mxu0
        %v2814 = vadd.f32 0.0, %v2813
        %v2815 = vpop.f32.mrf.mxu0
        %v2816 = vadd.f32 0.0, %v2815
        %2817 = vdwg.mxu0
        %v2818 = vadd.f32 %v2730, %v2814
        %v2819 = vadd.f32 %v2731, %v2816
        %v2820 = vrot.slane %v2300, 3
        %v2821 = vrot.slane %v2301, 3
        %v2822 = vsel %vm1497, %v2820, %v2821
        %v2823 = vsel %vm1497, %v2821, %v2820
        %v2824 = vmul.f32 %v2822, %v916
        %v2825 = vmul.f32 %v2823, %v917
        %v2826 = vpack.c.bf16 %v2825, %v2824
        %s2827 = scalar_lea.vmem [#allocation11], 1280
        %v2828 = vld [vmem:[%s2827] sm:$0xf]
        %v2829 = vld [vmem:[%s2827 + $0x4] sm:$0xf]
        %v2830 = vld [vmem:[%s2827 + $0x8] sm:$0xf]
        %v2831 = vld [vmem:[%s2827 + $0xc] sm:$0xf]
        %v2832 = vld [vmem:[%s2827 + $0x10] sm:$0xf]
        %v2833 = vld [vmem:[%s2827 + $0x14] sm:$0xf]
        %v2834 = vld [vmem:[%s2827 + $0x18] sm:$0xf]
        %v2835 = vld [vmem:[%s2827 + $0x1c] sm:$0xf]
        %v2836 = vld [vmem:[%s2827 + $0x20] sm:$0xf]
        %v2837 = vld [vmem:[%s2827 + $0x24] sm:$0xf]
        %v2838 = vld [vmem:[%s2827 + $0x28] sm:$0xf]
        %v2839 = vld [vmem:[%s2827 + $0x2c] sm:$0xf]
        %v2840 = vld [vmem:[%s2827 + $0x30] sm:$0xf]
        %v2841 = vld [vmem:[%s2827 + $0x34] sm:$0xf]
        %v2842 = vld [vmem:[%s2827 + $0x38] sm:$0xf]
        %v2843 = vld [vmem:[%s2827 + $0x3c] sm:$0xf]
        %v2860 = vunpack.c.l.b16 %v2828
        %v2861 = vunpack.c.l.b16 %v2829
        %v2862 = vunpack.c.l.b16 %v2830
        %v2863 = vunpack.c.l.b16 %v2831
        %v2864 = vunpack.c.l.b16 %v2832
        %v2865 = vunpack.c.l.b16 %v2833
        %v2866 = vunpack.c.l.b16 %v2834
        %v2867 = vunpack.c.l.b16 %v2835
        %v2868 = vunpack.c.l.b16 %v2836
        %v2869 = vunpack.c.l.b16 %v2837
        %v2870 = vunpack.c.l.b16 %v2838
        %v2871 = vunpack.c.l.b16 %v2839
        %v2872 = vunpack.c.l.b16 %v2840
        %v2873 = vunpack.c.l.b16 %v2841
        %v2874 = vunpack.c.l.b16 %v2842
        %v2875 = vunpack.c.l.b16 %v2843
        %v2876 = vpack.c.b16 %v2861, %v2860
        %v2877 = vpack.c.b16 %v2863, %v2862
        %v2878 = vpack.c.b16 %v2865, %v2864
        %v2879 = vpack.c.b16 %v2867, %v2866
        %v2880 = vpack.c.b16 %v2869, %v2868
        %v2881 = vpack.c.b16 %v2871, %v2870
        %v2882 = vpack.c.b16 %v2873, %v2872
        %v2883 = vpack.c.b16 %v2875, %v2874
        %2892 = vmatpush.bf16.msra.mxu0 %v2883
        %2893 = vmatpush.bf16.msra.mxu0 %v2882
        %2894 = vmatpush.bf16.msra.mxu0 %v2881
        %2895 = vmatpush.bf16.msra.mxu0 %v2880
        %2896 = vmatpush.bf16.msra.mxu0 %v2879
        %2897 = vmatpush.bf16.msra.mxu0 %v2878
        %2898 = vmatpush.bf16.msra.mxu0 %v2877
        %2899 = vmatpush.bf16.msra.mxu0 %v2876
        %2900 = vmatmul.bf16.gmra.mxu0 %v2826
        %v2901 = vpop.f32.mrf.mxu0
        %v2902 = vadd.f32 0.0, %v2901
        %v2903 = vpop.f32.mrf.mxu0
        %v2904 = vadd.f32 0.0, %v2903
        %2905 = vdwg.mxu0
        %v2906 = vadd.f32 %v2818, %v2902
        %v2907 = vadd.f32 %v2819, %v2904
        %v2908 = vld [vmem:[%s6 + $0x2] sm:$0x1]
        %v2909 = vperm.slane %v2908, 0
        %v2910 = vadd.f32 %v2906, %v2909
        %v2911 = vadd.f32 %v2907, %v2909
        %v2912 = vmax.f32 %v2910, 0.0
        %v2913 = vmax.f32 %v2911, 0.0
        %v2914 = vadd.f32 %v2912, %v2252
        %v2915 = vadd.f32 %v2913, %v2253
        %v2916 = vld [vmem:[#allocation8 + $0x3] sm:$0x1]
        %v2917 = vld [vmem:[#allocation9 + $0x3] sm:$0x1]
        %2918 = vadd.xlane.f32.xlu0 %v2914
        %v2919 = vpop.xlane.xlu0 %2918
        %2920 = vadd.xlane.f32.xlu0 %v2915
        %v2921 = vpop.xlane.xlu0 %2920
        %v2922 = vmul.f32 %v2919, %v930
        %v2923 = vmul.f32 %v2921, %v930
        %v2924 = vsub.f32 %v2914, %v2922
        %v2925 = vsub.f32 %v2915, %v2923
        %v2926 = vmul.f32 %v2924, %v2924
        %v2927 = vmul.f32 %v2925, %v2925
        %2928 = vadd.xlane.f32.xlu0 %v2926
        %v2929 = vpop.xlane.xlu0 %2928
        %2930 = vadd.xlane.f32.xlu0 %v2927
        %v2931 = vpop.xlane.xlu0 %2930
        %v2932 = vmul.f32 %v2929, %v930
        %v2933 = vmul.f32 %v2931, %v930
        %v2934 = vadd.f32 %v2932, 1e-05
        %v2935 = vadd.f32 %v2933, 1e-05
        %v2936 = vrsqrt.pop %v2934
        %v2937 = vmul.f32 %v2936, %v2934
        %v2938 = vmul.f32 %v2937, %v2936
        %v2939 = vmul.f32 0.5, %v2938
        %v2940 = vsub.f32 1.5, %v2939
        %v2941 = vmul.f32 %v2936, %v2940
        %vm2942 = vweird.f32 %v2934
        %vm2943 = vweird.f32 %v2936
        %vm2944 = vmor %vm2942, %vm2943
        %v2945 = vsel %vm2944, %v2936, %v2941
        %v2946 = vrsqrt.pop %v2935
        %v2947 = vmul.f32 %v2946, %v2935
        %v2948 = vmul.f32 %v2947, %v2946
        %v2949 = vmul.f32 0.5, %v2948
        %v2950 = vsub.f32 1.5, %v2949
        %v2951 = vmul.f32 %v2946, %v2950
        %vm2952 = vweird.f32 %v2935
        %vm2953 = vweird.f32 %v2946
        %vm2954 = vmor %vm2952, %vm2953
        %v2955 = vsel %vm2954, %v2946, %v2951
        %v2956 = vmul.f32 %v2924, %v2945
        %v2957 = vmul.f32 %v2925, %v2955
        %v2958 = vperm.slane %v2916, 0
        %v2959 = vmul.f32 %v2956, %v2958
        %v2960 = vmul.f32 %v2957, %v2958
        %v2961 = vperm.slane %v2917, 0
        %v2962 = vadd.f32 %v2959, %v2961
        %v2963 = vadd.f32 %v2960, %v2961
        %v2964 = vrot.slane %v2962, 5
        %v2965 = vrot.slane %v2963, 5
        %v2966 = vsel %vm975, %v2964, %v2965
        %v2967 = vsel %vm975, %v2965, %v2964
        %v2968 = vmul.f32 %v2967, %v856
        %v2969 = vmul.f32 %v2966, %v857
        %v2970 = vpack.c.bf16 %v2969, %v2968
        %s2971 = scalar_lea.vmem [#allocation11], 1344
        %v2972 = vld [vmem:[%s2971] sm:$0xf]
        %v2973 = vld [vmem:[%s2971 + $0x4] sm:$0xf]
        %v2974 = vld [vmem:[%s2971 + $0x8] sm:$0xf]
        %v2975 = vld [vmem:[%s2971 + $0xc] sm:$0xf]
        %v2976 = vld [vmem:[%s2971 + $0x10] sm:$0xf]
        %v2977 = vld [vmem:[%s2971 + $0x14] sm:$0xf]
        %v2978 = vld [vmem:[%s2971 + $0x18] sm:$0xf]
        %v2979 = vld [vmem:[%s2971 + $0x1c] sm:$0xf]
        %v2980 = vld [vmem:[%s2971 + $0x20] sm:$0xf]
        %v2981 = vld [vmem:[%s2971 + $0x24] sm:$0xf]
        %v2982 = vld [vmem:[%s2971 + $0x28] sm:$0xf]
        %v2983 = vld [vmem:[%s2971 + $0x2c] sm:$0xf]
        %v2984 = vld [vmem:[%s2971 + $0x30] sm:$0xf]
        %v2985 = vld [vmem:[%s2971 + $0x34] sm:$0xf]
        %v2986 = vld [vmem:[%s2971 + $0x38] sm:$0xf]
        %v2987 = vld [vmem:[%s2971 + $0x3c] sm:$0xf]
        %v2988 = vrot.slane %v2962, 6
        %v2989 = vrot.slane %v2963, 6
        %v2990 = vsel %vm999, %v2988, %v2989
        %v2991 = vsel %vm999, %v2989, %v2988
        %v2992 = vmul.f32 %v2991, %v868
        %v2993 = vmul.f32 %v2990, %v869
        %v2994 = vpack.c.bf16 %v2993, %v2992
        %s2995 = scalar_lea.vmem [#allocation11], 1408
        %v2996 = vld [vmem:[%s2995] sm:$0xf]
        %v2997 = vld [vmem:[%s2995 + $0x4] sm:$0xf]
        %v2998 = vld [vmem:[%s2995 + $0x8] sm:$0xf]
        %v2999 = vld [vmem:[%s2995 + $0xc] sm:$0xf]
        %v3000 = vld [vmem:[%s2995 + $0x10] sm:$0xf]
        %v3001 = vld [vmem:[%s2995 + $0x14] sm:$0xf]
        %v3002 = vld [vmem:[%s2995 + $0x18] sm:$0xf]
        %v3003 = vld [vmem:[%s2995 + $0x1c] sm:$0xf]
        %v3004 = vld [vmem:[%s2995 + $0x20] sm:$0xf]
        %v3005 = vld [vmem:[%s2995 + $0x24] sm:$0xf]
        %v3006 = vld [vmem:[%s2995 + $0x28] sm:$0xf]
        %v3007 = vld [vmem:[%s2995 + $0x2c] sm:$0xf]
        %v3008 = vld [vmem:[%s2995 + $0x30] sm:$0xf]
        %v3009 = vld [vmem:[%s2995 + $0x34] sm:$0xf]
        %v3010 = vld [vmem:[%s2995 + $0x38] sm:$0xf]
        %v3011 = vld [vmem:[%s2995 + $0x3c] sm:$0xf]
        %v3028 = vunpack.c.l.b16 %v2996
        %v3029 = vunpack.c.l.b16 %v2997
        %v3030 = vunpack.c.l.b16 %v2998
        %v3031 = vunpack.c.l.b16 %v2999
        %v3032 = vunpack.c.l.b16 %v3000
        %v3033 = vunpack.c.l.b16 %v3001
        %v3034 = vunpack.c.l.b16 %v3002
        %v3035 = vunpack.c.l.b16 %v3003
        %v3036 = vunpack.c.l.b16 %v3004
        %v3037 = vunpack.c.l.b16 %v3005
        %v3038 = vunpack.c.l.b16 %v3006
        %v3039 = vunpack.c.l.b16 %v3007
        %v3040 = vunpack.c.l.b16 %v3008
        %v3041 = vunpack.c.l.b16 %v3009
        %v3042 = vunpack.c.l.b16 %v3010
        %v3043 = vunpack.c.l.b16 %v3011
        %v3044 = vpack.c.b16 %v3029, %v3028
        %v3045 = vpack.c.b16 %v3031, %v3030
        %v3046 = vpack.c.b16 %v3033, %v3032
        %v3047 = vpack.c.b16 %v3035, %v3034
        %v3048 = vpack.c.b16 %v3037, %v3036
        %v3049 = vpack.c.b16 %v3039, %v3038
        %v3050 = vpack.c.b16 %v3041, %v3040
        %v3051 = vpack.c.b16 %v3043, %v3042
        %3060 = vmatpush.bf16.msra.mxu0 %v3051
        %3061 = vmatpush.bf16.msra.mxu0 %v3050
        %3062 = vmatpush.bf16.msra.mxu0 %v3049
        %3063 = vmatpush.bf16.msra.mxu0 %v3048
        %3064 = vmatpush.bf16.msra.mxu0 %v3047
        %3065 = vmatpush.bf16.msra.mxu0 %v3046
        %3066 = vmatpush.bf16.msra.mxu0 %v3045
        %3067 = vmatpush.bf16.msra.mxu0 %v3044
        %3068 = vmatmul.bf16.gmra.mxu0 %v2994
        %v3069 = vpop.f32.mrf.mxu0
        %v3070 = vadd.f32 0.0, %v3069
        %v3071 = vpop.f32.mrf.mxu0
        %v3072 = vadd.f32 0.0, %v3071
        %3073 = vdwg.mxu0
        %v3090 = vunpack.c.l.b16 %v2972
        %v3091 = vunpack.c.l.b16 %v2973
        %v3092 = vunpack.c.l.b16 %v2974
        %v3093 = vunpack.c.l.b16 %v2975
        %v3094 = vunpack.c.l.b16 %v2976
        %v3095 = vunpack.c.l.b16 %v2977
        %v3096 = vunpack.c.l.b16 %v2978
        %v3097 = vunpack.c.l.b16 %v2979
        %v3098 = vunpack.c.l.b16 %v2980
        %v3099 = vunpack.c.l.b16 %v2981
        %v3100 = vunpack.c.l.b16 %v2982
        %v3101 = vunpack.c.l.b16 %v2983
        %v3102 = vunpack.c.l.b16 %v2984
        %v3103 = vunpack.c.l.b16 %v2985
        %v3104 = vunpack.c.l.b16 %v2986
        %v3105 = vunpack.c.l.b16 %v2987
        %v3106 = vpack.c.b16 %v3091, %v3090
        %v3107 = vpack.c.b16 %v3093, %v3092
        %v3108 = vpack.c.b16 %v3095, %v3094
        %v3109 = vpack.c.b16 %v3097, %v3096
        %v3110 = vpack.c.b16 %v3099, %v3098
        %v3111 = vpack.c.b16 %v3101, %v3100
        %v3112 = vpack.c.b16 %v3103, %v3102
        %v3113 = vpack.c.b16 %v3105, %v3104
        %3122 = vmatpush.bf16.msra.mxu0 %v3113
        %3123 = vmatpush.bf16.msra.mxu0 %v3112
        %3124 = vmatpush.bf16.msra.mxu0 %v3111
        %3125 = vmatpush.bf16.msra.mxu0 %v3110
        %3126 = vmatpush.bf16.msra.mxu0 %v3109
        %3127 = vmatpush.bf16.msra.mxu0 %v3108
        %3128 = vmatpush.bf16.msra.mxu0 %v3107
        %3129 = vmatpush.bf16.msra.mxu0 %v3106
        %3130 = vmatmul.bf16.gmra.mxu0 %v2970
        %v3131 = vpop.f32.mrf.mxu0
        %v3132 = vadd.f32 %v3070, %v3131
        %v3133 = vpop.f32.mrf.mxu0
        %v3134 = vadd.f32 %v3072, %v3133
        %3135 = vdwg.mxu0
        %v3136 = vrot.slane %v2962, 7
        %v3137 = vrot.slane %v2963, 7
        %v3138 = vsel %vm1148, %v3136, %v3137
        %v3139 = vsel %vm1148, %v3137, %v3136
        %v3140 = vmul.f32 %v3139, %v880
        %v3141 = vmul.f32 %v3138, %v881
        %v3142 = vpack.c.bf16 %v3141, %v3140
        %s3143 = scalar_lea.vmem [#allocation11], 1472
        %v3144 = vld [vmem:[%s3143] sm:$0xf]
        %v3145 = vld [vmem:[%s3143 + $0x4] sm:$0xf]
        %v3146 = vld [vmem:[%s3143 + $0x8] sm:$0xf]
        %v3147 = vld [vmem:[%s3143 + $0xc] sm:$0xf]
        %v3148 = vld [vmem:[%s3143 + $0x10] sm:$0xf]
        %v3149 = vld [vmem:[%s3143 + $0x14] sm:$0xf]
        %v3150 = vld [vmem:[%s3143 + $0x18] sm:$0xf]
        %v3151 = vld [vmem:[%s3143 + $0x1c] sm:$0xf]
        %v3152 = vld [vmem:[%s3143 + $0x20] sm:$0xf]
        %v3153 = vld [vmem:[%s3143 + $0x24] sm:$0xf]
        %v3154 = vld [vmem:[%s3143 + $0x28] sm:$0xf]
        %v3155 = vld [vmem:[%s3143 + $0x2c] sm:$0xf]
        %v3156 = vld [vmem:[%s3143 + $0x30] sm:$0xf]
        %v3157 = vld [vmem:[%s3143 + $0x34] sm:$0xf]
        %v3158 = vld [vmem:[%s3143 + $0x38] sm:$0xf]
        %v3159 = vld [vmem:[%s3143 + $0x3c] sm:$0xf]
        %v3176 = vunpack.c.l.b16 %v3144
        %v3177 = vunpack.c.l.b16 %v3145
        %v3178 = vunpack.c.l.b16 %v3146
        %v3179 = vunpack.c.l.b16 %v3147
        %v3180 = vunpack.c.l.b16 %v3148
        %v3181 = vunpack.c.l.b16 %v3149
        %v3182 = vunpack.c.l.b16 %v3150
        %v3183 = vunpack.c.l.b16 %v3151
        %v3184 = vunpack.c.l.b16 %v3152
        %v3185 = vunpack.c.l.b16 %v3153
        %v3186 = vunpack.c.l.b16 %v3154
        %v3187 = vunpack.c.l.b16 %v3155
        %v3188 = vunpack.c.l.b16 %v3156
        %v3189 = vunpack.c.l.b16 %v3157
        %v3190 = vunpack.c.l.b16 %v3158
        %v3191 = vunpack.c.l.b16 %v3159
        %v3192 = vpack.c.b16 %v3177, %v3176
        %v3193 = vpack.c.b16 %v3179, %v3178
        %v3194 = vpack.c.b16 %v3181, %v3180
        %v3195 = vpack.c.b16 %v3183, %v3182
        %v3196 = vpack.c.b16 %v3185, %v3184
        %v3197 = vpack.c.b16 %v3187, %v3186
        %v3198 = vpack.c.b16 %v3189, %v3188
        %v3199 = vpack.c.b16 %v3191, %v3190
        %3208 = vmatpush.bf16.msra.mxu0 %v3199
        %3209 = vmatpush.bf16.msra.mxu0 %v3198
        %3210 = vmatpush.bf16.msra.mxu0 %v3197
        %3211 = vmatpush.bf16.msra.mxu0 %v3196
        %3212 = vmatpush.bf16.msra.mxu0 %v3195
        %3213 = vmatpush.bf16.msra.mxu0 %v3194
        %3214 = vmatpush.bf16.msra.mxu0 %v3193
        %3215 = vmatpush.bf16.msra.mxu0 %v3192
        %3216 = vmatmul.bf16.gmra.mxu0 %v3142
        %v3217 = vpop.f32.mrf.mxu0
        %v3218 = vadd.f32 0.0, %v3217
        %v3219 = vpop.f32.mrf.mxu0
        %v3220 = vadd.f32 0.0, %v3219
        %3221 = vdwg.mxu0
        %v3222 = vadd.f32 %v3132, %v3218
        %v3223 = vadd.f32 %v3134, %v3220
        %v3224 = vpack.c.bf16 %v2963, %v2962
        %s3225 = scalar_lea.vmem [#allocation11], 1536
        %v3226 = vld [vmem:[%s3225] sm:$0xf]
        %v3227 = vld [vmem:[%s3225 + $0x4] sm:$0xf]
        %v3228 = vld [vmem:[%s3225 + $0x8] sm:$0xf]
        %v3229 = vld [vmem:[%s3225 + $0xc] sm:$0xf]
        %v3230 = vld [vmem:[%s3225 + $0x10] sm:$0xf]
        %v3231 = vld [vmem:[%s3225 + $0x14] sm:$0xf]
        %v3232 = vld [vmem:[%s3225 + $0x18] sm:$0xf]
        %v3233 = vld [vmem:[%s3225 + $0x1c] sm:$0xf]
        %v3234 = vld [vmem:[%s3225 + $0x20] sm:$0xf]
        %v3235 = vld [vmem:[%s3225 + $0x24] sm:$0xf]
        %v3236 = vld [vmem:[%s3225 + $0x28] sm:$0xf]
        %v3237 = vld [vmem:[%s3225 + $0x2c] sm:$0xf]
        %v3238 = vld [vmem:[%s3225 + $0x30] sm:$0xf]
        %v3239 = vld [vmem:[%s3225 + $0x34] sm:$0xf]
        %v3240 = vld [vmem:[%s3225 + $0x38] sm:$0xf]
        %v3241 = vld [vmem:[%s3225 + $0x3c] sm:$0xf]
        %v3258 = vunpack.c.l.b16 %v3226
        %v3259 = vunpack.c.l.b16 %v3227
        %v3260 = vunpack.c.l.b16 %v3228
        %v3261 = vunpack.c.l.b16 %v3229
        %v3262 = vunpack.c.l.b16 %v3230
        %v3263 = vunpack.c.l.b16 %v3231
        %v3264 = vunpack.c.l.b16 %v3232
        %v3265 = vunpack.c.l.b16 %v3233
        %v3266 = vunpack.c.l.b16 %v3234
        %v3267 = vunpack.c.l.b16 %v3235
        %v3268 = vunpack.c.l.b16 %v3236
        %v3269 = vunpack.c.l.b16 %v3237
        %v3270 = vunpack.c.l.b16 %v3238
        %v3271 = vunpack.c.l.b16 %v3239
        %v3272 = vunpack.c.l.b16 %v3240
        %v3273 = vunpack.c.l.b16 %v3241
        %v3274 = vpack.c.b16 %v3259, %v3258
        %v3275 = vpack.c.b16 %v3261, %v3260
        %v3276 = vpack.c.b16 %v3263, %v3262
        %v3277 = vpack.c.b16 %v3265, %v3264
        %v3278 = vpack.c.b16 %v3267, %v3266
        %v3279 = vpack.c.b16 %v3269, %v3268
        %v3280 = vpack.c.b16 %v3271, %v3270
        %v3281 = vpack.c.b16 %v3273, %v3272
        %3290 = vmatpush.bf16.msra.mxu0 %v3281
        %3291 = vmatpush.bf16.msra.mxu0 %v3280
        %3292 = vmatpush.bf16.msra.mxu0 %v3279
        %3293 = vmatpush.bf16.msra.mxu0 %v3278
        %3294 = vmatpush.bf16.msra.mxu0 %v3277
        %3295 = vmatpush.bf16.msra.mxu0 %v3276
        %3296 = vmatpush.bf16.msra.mxu0 %v3275
        %3297 = vmatpush.bf16.msra.mxu0 %v3274
        %3298 = vmatmul.bf16.gmra.mxu0 %v3224
        %v3299 = vpop.f32.mrf.mxu0
        %v3300 = vadd.f32 0.0, %v3299
        %v3301 = vpop.f32.mrf.mxu0
        %v3302 = vadd.f32 0.0, %v3301
        %3303 = vdwg.mxu0
        %v3304 = vadd.f32 %v3222, %v3300
        %v3305 = vadd.f32 %v3223, %v3302
        %v3306 = vrot.slane %v2962, 1
        %v3307 = vrot.slane %v2963, 1
        %v3308 = vsel %vm1319, %v3306, %v3307
        %v3309 = vsel %vm1319, %v3307, %v3306
        %v3310 = vmul.f32 %v3308, %v892
        %v3311 = vmul.f32 %v3309, %v893
        %v3312 = vpack.c.bf16 %v3311, %v3310
        %s3313 = scalar_lea.vmem [#allocation11], 1600
        %v3314 = vld [vmem:[%s3313] sm:$0xf]
        %v3315 = vld [vmem:[%s3313 + $0x4] sm:$0xf]
        %v3316 = vld [vmem:[%s3313 + $0x8] sm:$0xf]
        %v3317 = vld [vmem:[%s3313 + $0xc] sm:$0xf]
        %v3318 = vld [vmem:[%s3313 + $0x10] sm:$0xf]
        %v3319 = vld [vmem:[%s3313 + $0x14] sm:$0xf]
        %v3320 = vld [vmem:[%s3313 + $0x18] sm:$0xf]
        %v3321 = vld [vmem:[%s3313 + $0x1c] sm:$0xf]
        %v3322 = vld [vmem:[%s3313 + $0x20] sm:$0xf]
        %v3323 = vld [vmem:[%s3313 + $0x24] sm:$0xf]
        %v3324 = vld [vmem:[%s3313 + $0x28] sm:$0xf]
        %v3325 = vld [vmem:[%s3313 + $0x2c] sm:$0xf]
        %v3326 = vld [vmem:[%s3313 + $0x30] sm:$0xf]
        %v3327 = vld [vmem:[%s3313 + $0x34] sm:$0xf]
        %v3328 = vld [vmem:[%s3313 + $0x38] sm:$0xf]
        %v3329 = vld [vmem:[%s3313 + $0x3c] sm:$0xf]
        %v3346 = vunpack.c.l.b16 %v3314
        %v3347 = vunpack.c.l.b16 %v3315
        %v3348 = vunpack.c.l.b16 %v3316
        %v3349 = vunpack.c.l.b16 %v3317
        %v3350 = vunpack.c.l.b16 %v3318
        %v3351 = vunpack.c.l.b16 %v3319
        %v3352 = vunpack.c.l.b16 %v3320
        %v3353 = vunpack.c.l.b16 %v3321
        %v3354 = vunpack.c.l.b16 %v3322
        %v3355 = vunpack.c.l.b16 %v3323
        %v3356 = vunpack.c.l.b16 %v3324
        %v3357 = vunpack.c.l.b16 %v3325
        %v3358 = vunpack.c.l.b16 %v3326
        %v3359 = vunpack.c.l.b16 %v3327
        %v3360 = vunpack.c.l.b16 %v3328
        %v3361 = vunpack.c.l.b16 %v3329
        %v3362 = vpack.c.b16 %v3347, %v3346
        %v3363 = vpack.c.b16 %v3349, %v3348
        %v3364 = vpack.c.b16 %v3351, %v3350
        %v3365 = vpack.c.b16 %v3353, %v3352
        %v3366 = vpack.c.b16 %v3355, %v3354
        %v3367 = vpack.c.b16 %v3357, %v3356
        %v3368 = vpack.c.b16 %v3359, %v3358
        %v3369 = vpack.c.b16 %v3361, %v3360
        %3378 = vmatpush.bf16.msra.mxu0 %v3369
        %3379 = vmatpush.bf16.msra.mxu0 %v3368
        %3380 = vmatpush.bf16.msra.mxu0 %v3367
        %3381 = vmatpush.bf16.msra.mxu0 %v3366
        %3382 = vmatpush.bf16.msra.mxu0 %v3365
        %3383 = vmatpush.bf16.msra.mxu0 %v3364
        %3384 = vmatpush.bf16.msra.mxu0 %v3363
        %3385 = vmatpush.bf16.msra.mxu0 %v3362
        %3386 = vmatmul.bf16.gmra.mxu0 %v3312
        %v3387 = vpop.f32.mrf.mxu0
        %v3388 = vadd.f32 0.0, %v3387
        %v3389 = vpop.f32.mrf.mxu0
        %v3390 = vadd.f32 0.0, %v3389
        %3391 = vdwg.mxu0
        %v3392 = vadd.f32 %v3304, %v3388
        %v3393 = vadd.f32 %v3305, %v3390
        %v3394 = vrot.slane %v2962, 2
        %v3395 = vrot.slane %v2963, 2
        %v3396 = vsel %vm1408, %v3394, %v3395
        %v3397 = vsel %vm1408, %v3395, %v3394
        %v3398 = vmul.f32 %v3396, %v904
        %v3399 = vmul.f32 %v3397, %v905
        %v3400 = vpack.c.bf16 %v3399, %v3398
        %s3401 = scalar_lea.vmem [#allocation11], 1664
        %v3402 = vld [vmem:[%s3401] sm:$0xf]
        %v3403 = vld [vmem:[%s3401 + $0x4] sm:$0xf]
        %v3404 = vld [vmem:[%s3401 + $0x8] sm:$0xf]
        %v3405 = vld [vmem:[%s3401 + $0xc] sm:$0xf]
        %v3406 = vld [vmem:[%s3401 + $0x10] sm:$0xf]
        %v3407 = vld [vmem:[%s3401 + $0x14] sm:$0xf]
        %v3408 = vld [vmem:[%s3401 + $0x18] sm:$0xf]
        %v3409 = vld [vmem:[%s3401 + $0x1c] sm:$0xf]
        %v3410 = vld [vmem:[%s3401 + $0x20] sm:$0xf]
        %v3411 = vld [vmem:[%s3401 + $0x24] sm:$0xf]
        %v3412 = vld [vmem:[%s3401 + $0x28] sm:$0xf]
        %v3413 = vld [vmem:[%s3401 + $0x2c] sm:$0xf]
        %v3414 = vld [vmem:[%s3401 + $0x30] sm:$0xf]
        %v3415 = vld [vmem:[%s3401 + $0x34] sm:$0xf]
        %v3416 = vld [vmem:[%s3401 + $0x38] sm:$0xf]
        %v3417 = vld [vmem:[%s3401 + $0x3c] sm:$0xf]
        %v3434 = vunpack.c.l.b16 %v3402
        %v3435 = vunpack.c.l.b16 %v3403
        %v3436 = vunpack.c.l.b16 %v3404
        %v3437 = vunpack.c.l.b16 %v3405
        %v3438 = vunpack.c.l.b16 %v3406
        %v3439 = vunpack.c.l.b16 %v3407
        %v3440 = vunpack.c.l.b16 %v3408
        %v3441 = vunpack.c.l.b16 %v3409
        %v3442 = vunpack.c.l.b16 %v3410
        %v3443 = vunpack.c.l.b16 %v3411
        %v3444 = vunpack.c.l.b16 %v3412
        %v3445 = vunpack.c.l.b16 %v3413
        %v3446 = vunpack.c.l.b16 %v3414
        %v3447 = vunpack.c.l.b16 %v3415
        %v3448 = vunpack.c.l.b16 %v3416
        %v3449 = vunpack.c.l.b16 %v3417
        %v3450 = vpack.c.b16 %v3435, %v3434
        %v3451 = vpack.c.b16 %v3437, %v3436
        %v3452 = vpack.c.b16 %v3439, %v3438
        %v3453 = vpack.c.b16 %v3441, %v3440
        %v3454 = vpack.c.b16 %v3443, %v3442
        %v3455 = vpack.c.b16 %v3445, %v3444
        %v3456 = vpack.c.b16 %v3447, %v3446
        %v3457 = vpack.c.b16 %v3449, %v3448
        %3466 = vmatpush.bf16.msra.mxu0 %v3457
        %3467 = vmatpush.bf16.msra.mxu0 %v3456
        %3468 = vmatpush.bf16.msra.mxu0 %v3455
        %3469 = vmatpush.bf16.msra.mxu0 %v3454
        %3470 = vmatpush.bf16.msra.mxu0 %v3453
        %3471 = vmatpush.bf16.msra.mxu0 %v3452
        %3472 = vmatpush.bf16.msra.mxu0 %v3451
        %3473 = vmatpush.bf16.msra.mxu0 %v3450
        %3474 = vmatmul.bf16.gmra.mxu0 %v3400
        %v3475 = vpop.f32.mrf.mxu0
        %v3476 = vadd.f32 0.0, %v3475
        %v3477 = vpop.f32.mrf.mxu0
        %v3478 = vadd.f32 0.0, %v3477
        %3479 = vdwg.mxu0
        %v3480 = vadd.f32 %v3392, %v3476
        %v3481 = vadd.f32 %v3393, %v3478
        %v3482 = vrot.slane %v2962, 3
        %v3483 = vrot.slane %v2963, 3
        %v3484 = vsel %vm1497, %v3482, %v3483
        %v3485 = vsel %vm1497, %v3483, %v3482
        %v3486 = vmul.f32 %v3484, %v916
        %v3487 = vmul.f32 %v3485, %v917
        %v3488 = vpack.c.bf16 %v3487, %v3486
        %s3489 = scalar_lea.vmem [#allocation11], 1728
        %v3490 = vld [vmem:[%s3489] sm:$0xf]
        %v3491 = vld [vmem:[%s3489 + $0x4] sm:$0xf]
        %v3492 = vld [vmem:[%s3489 + $0x8] sm:$0xf]
        %v3493 = vld [vmem:[%s3489 + $0xc] sm:$0xf]
        %v3494 = vld [vmem:[%s3489 + $0x10] sm:$0xf]
        %v3495 = vld [vmem:[%s3489 + $0x14] sm:$0xf]
        %v3496 = vld [vmem:[%s3489 + $0x18] sm:$0xf]
        %v3497 = vld [vmem:[%s3489 + $0x1c] sm:$0xf]
        %v3498 = vld [vmem:[%s3489 + $0x20] sm:$0xf]
        %v3499 = vld [vmem:[%s3489 + $0x24] sm:$0xf]
        %v3500 = vld [vmem:[%s3489 + $0x28] sm:$0xf]
        %v3501 = vld [vmem:[%s3489 + $0x2c] sm:$0xf]
        %v3502 = vld [vmem:[%s3489 + $0x30] sm:$0xf]
        %v3503 = vld [vmem:[%s3489 + $0x34] sm:$0xf]
        %v3504 = vld [vmem:[%s3489 + $0x38] sm:$0xf]
        %v3505 = vld [vmem:[%s3489 + $0x3c] sm:$0xf]
        %v3522 = vunpack.c.l.b16 %v3490
        %v3523 = vunpack.c.l.b16 %v3491
        %v3524 = vunpack.c.l.b16 %v3492
        %v3525 = vunpack.c.l.b16 %v3493
        %v3526 = vunpack.c.l.b16 %v3494
        %v3527 = vunpack.c.l.b16 %v3495
        %v3528 = vunpack.c.l.b16 %v3496
        %v3529 = vunpack.c.l.b16 %v3497
        %v3530 = vunpack.c.l.b16 %v3498
        %v3531 = vunpack.c.l.b16 %v3499
        %v3532 = vunpack.c.l.b16 %v3500
        %v3533 = vunpack.c.l.b16 %v3501
        %v3534 = vunpack.c.l.b16 %v3502
        %v3535 = vunpack.c.l.b16 %v3503
        %v3536 = vunpack.c.l.b16 %v3504
        %v3537 = vunpack.c.l.b16 %v3505
        %v3538 = vpack.c.b16 %v3523, %v3522
        %v3539 = vpack.c.b16 %v3525, %v3524
        %v3540 = vpack.c.b16 %v3527, %v3526
        %v3541 = vpack.c.b16 %v3529, %v3528
        %v3542 = vpack.c.b16 %v3531, %v3530
        %v3543 = vpack.c.b16 %v3533, %v3532
        %v3544 = vpack.c.b16 %v3535, %v3534
        %v3545 = vpack.c.b16 %v3537, %v3536
        %3554 = vmatpush.bf16.msra.mxu0 %v3545
        %3555 = vmatpush.bf16.msra.mxu0 %v3544
        %3556 = vmatpush.bf16.msra.mxu0 %v3543
        %3557 = vmatpush.bf16.msra.mxu0 %v3542
        %3558 = vmatpush.bf16.msra.mxu0 %v3541
        %3559 = vmatpush.bf16.msra.mxu0 %v3540
        %3560 = vmatpush.bf16.msra.mxu0 %v3539
        %3561 = vmatpush.bf16.msra.mxu0 %v3538
        %3562 = vmatmul.bf16.gmra.mxu0 %v3488
        %v3563 = vpop.f32.mrf.mxu0
        %v3564 = vadd.f32 0.0, %v3563
        %v3565 = vpop.f32.mrf.mxu0
        %v3566 = vadd.f32 0.0, %v3565
        %3567 = vdwg.mxu0
        %v3568 = vadd.f32 %v3480, %v3564
        %v3569 = vadd.f32 %v3481, %v3566
        %v3570 = vld [vmem:[%s6 + $0x3] sm:$0x1]
        %v3571 = vperm.slane %v3570, 0
        %v3572 = vadd.f32 %v3568, %v3571
        %v3573 = vadd.f32 %v3569, %v3571
        %v3574 = vmax.f32 %v3572, 0.0
        %v3575 = vmax.f32 %v3573, 0.0
        %v3576 = vadd.f32 %v3574, %v2914
        %v3577 = vadd.f32 %v3575, %v2915
        %v3578 = vld [vmem:[#allocation12] sm:$0x1]
        %v3579 = vld [vmem:[#allocation14] sm:$0x1]
        %3580 = vadd.xlane.f32.xlu0 %v3576
        %v3581 = vpop.xlane.xlu0 %3580
        %3582 = vadd.xlane.f32.xlu0 %v3577
        %v3583 = vpop.xlane.xlu0 %3582
        %v3584 = vmul.f32 %v3581, %v930
        %v3585 = vmul.f32 %v3583, %v930
        %v3586 = vsub.f32 %v3576, %v3584
        %v3587 = vsub.f32 %v3577, %v3585
        %v3588 = vmul.f32 %v3586, %v3586
        %v3589 = vmul.f32 %v3587, %v3587
        %3590 = vadd.xlane.f32.xlu0 %v3588
        %v3591 = vpop.xlane.xlu0 %3590
        %3592 = vadd.xlane.f32.xlu0 %v3589
        %v3593 = vpop.xlane.xlu0 %3592
        %v3594 = vmul.f32 %v3591, %v930
        %v3595 = vmul.f32 %v3593, %v930
        %v3596 = vadd.f32 %v3594, 1e-05
        %v3597 = vadd.f32 %v3595, 1e-05
        %v3598 = vrsqrt.pop %v3596
        %v3599 = vmul.f32 %v3598, %v3596
        %v3600 = vmul.f32 %v3599, %v3598
        %v3601 = vmul.f32 0.5, %v3600
        %v3602 = vsub.f32 1.5, %v3601
        %v3603 = vmul.f32 %v3598, %v3602
        %vm3604 = vweird.f32 %v3596
        %vm3605 = vweird.f32 %v3598
        %vm3606 = vmor %vm3604, %vm3605
        %v3607 = vsel %vm3606, %v3598, %v3603
        %v3608 = vrsqrt.pop %v3597
        %v3609 = vmul.f32 %v3608, %v3597
        %v3610 = vmul.f32 %v3609, %v3608
        %v3611 = vmul.f32 0.5, %v3610
        %v3612 = vsub.f32 1.5, %v3611
        %v3613 = vmul.f32 %v3608, %v3612
        %vm3614 = vweird.f32 %v3597
        %vm3615 = vweird.f32 %v3608
        %vm3616 = vmor %vm3614, %vm3615
        %v3617 = vsel %vm3616, %v3608, %v3613
        %v3618 = vmul.f32 %v3586, %v3607
        %v3619 = vmul.f32 %v3587, %v3617
        %v3621 = vperm.slane %v3578, 0
        %v3623 = vmul.f32 %v3618, %v3621
        %v3624 = vmul.f32 %v3619, %v3621
        %v3626 = vperm.slane %v3579, 0
        %v3628 = vadd.f32 %v3623, %v3626
        %v3629 = vadd.f32 %v3624, %v3626
        %v3630 = vpack.c.bf16 %v3629, %v3628
        %v3631 = vld [vmem:[#allocation15] sm:$0xff]
        %v3632 = vld [vmem:[#allocation15 + $0x8] sm:$0xf]
        %v3633 = vld [vmem:[#allocation15 + $0xc] sm:$0xff]
        %v3634 = vld [vmem:[#allocation15 + $0x14] sm:$0xf]
        %v3635 = vld [vmem:[#allocation15 + $0x18] sm:$0xff]
        %v3636 = vld [vmem:[#allocation15 + $0x20] sm:$0xf]
        %v3637 = vld [vmem:[#allocation15 + $0x24] sm:$0xff]
        %v3638 = vld [vmem:[#allocation15 + $0x2c] sm:$0xf]
        %v3639 = vld [vmem:[#allocation15 + $0x30] sm:$0xff]
        %v3640 = vld [vmem:[#allocation15 + $0x38] sm:$0xf]
        %v3641 = vld [vmem:[#allocation15 + $0x3c] sm:$0xff]
        %v3642 = vld [vmem:[#allocation15 + $0x44] sm:$0xf]
        %v3643 = vld [vmem:[#allocation15 + $0x48] sm:$0xff]
        %v3644 = vld [vmem:[#allocation15 + $0x50] sm:$0xf]
        %v3645 = vld [vmem:[#allocation15 + $0x54] sm:$0xff]
        %v3646 = vld [vmem:[#allocation15 + $0x5c] sm:$0xf]
        %v3647 = vld [vmem:[#allocation15 + $0x60] sm:$0xff]
        %v3648 = vld [vmem:[#allocation15 + $0x68] sm:$0xf]
        %v3649 = vld [vmem:[#allocation15 + $0x6c] sm:$0xff]
        %v3650 = vld [vmem:[#allocation15 + $0x74] sm:$0xf]
        %v3651 = vld [vmem:[#allocation15 + $0x78] sm:$0xff]
        %v3652 = vld [vmem:[#allocation15 + $0x80] sm:$0xf]
        %v3653 = vld [vmem:[#allocation15 + $0x84] sm:$0xff]
        %v3654 = vld [vmem:[#allocation15 + $0x8c] sm:$0xf]
        %v3655 = vld [vmem:[#allocation15 + $0x90] sm:$0xff]
        %v3656 = vld [vmem:[#allocation15 + $0x98] sm:$0xf]
        %v3657 = vld [vmem:[#allocation15 + $0x9c] sm:$0xff]
        %v3658 = vld [vmem:[#allocation15 + $0xa4] sm:$0xf]
        %v3659 = vld [vmem:[#allocation15 + $0xa8] sm:$0xff]
        %v3660 = vld [vmem:[#allocation15 + $0xb0] sm:$0xf]
        %v3661 = vld [vmem:[#allocation15 + $0xb4] sm:$0xff]
        %v3662 = vld [vmem:[#allocation15 + $0xbc] sm:$0xf]
        %v3663 = vld [vmem:[%s10] sm:$0x7]
        %v3665 = vperm.slane %v3663, 0
        %v3666 = vperm.slane %v3663, 1
        %v3667 = vperm.slane %v3663, 2
        %v3703 = vunpack.c.l.b16 %v3631
        %v3704 = vunpack.c.h.b16 %v3631
        %v3705 = vunpack.c.l.b16 %v3632
        %v3706 = vunpack.c.l.b16 %v3633
        %v3707 = vunpack.c.h.b16 %v3633
        %v3708 = vunpack.c.l.b16 %v3634
        %v3709 = vunpack.c.l.b16 %v3635
        %v3710 = vunpack.c.h.b16 %v3635
        %v3711 = vunpack.c.l.b16 %v3636
        %v3712 = vunpack.c.l.b16 %v3637
        %v3713 = vunpack.c.h.b16 %v3637
        %v3714 = vunpack.c.l.b16 %v3638
        %v3715 = vunpack.c.l.b16 %v3639
        %v3716 = vunpack.c.h.b16 %v3639
        %v3717 = vunpack.c.l.b16 %v3640
        %v3718 = vunpack.c.l.b16 %v3641
        %v3719 = vunpack.c.h.b16 %v3641
        %v3720 = vunpack.c.l.b16 %v3642
        %v3721 = vunpack.c.l.b16 %v3643
        %v3722 = vunpack.c.h.b16 %v3643
        %v3723 = vunpack.c.l.b16 %v3644
        %v3724 = vunpack.c.l.b16 %v3645
        %v3725 = vunpack.c.h.b16 %v3645
        %v3726 = vunpack.c.l.b16 %v3646
        %v3727 = vunpack.c.l.b16 %v3647
        %v3728 = vunpack.c.h.b16 %v3647
        %v3729 = vunpack.c.l.b16 %v3648
        %v3730 = vunpack.c.l.b16 %v3649
        %v3731 = vunpack.c.h.b16 %v3649
        %v3732 = vunpack.c.l.b16 %v3650
        %v3733 = vunpack.c.l.b16 %v3651
        %v3734 = vunpack.c.h.b16 %v3651
        %v3735 = vunpack.c.l.b16 %v3652
        %v3736 = vunpack.c.l.b16 %v3653
        %v3737 = vunpack.c.h.b16 %v3653
        %v3738 = vunpack.c.l.b16 %v3654
        %v3739 = vunpack.c.l.b16 %v3655
        %v3740 = vunpack.c.h.b16 %v3655
        %v3741 = vunpack.c.l.b16 %v3656
        %v3742 = vunpack.c.l.b16 %v3657
        %v3743 = vunpack.c.h.b16 %v3657
        %v3744 = vunpack.c.l.b16 %v3658
        %v3745 = vunpack.c.l.b16 %v3659
        %v3746 = vunpack.c.h.b16 %v3659
        %v3747 = vunpack.c.l.b16 %v3660
        %v3748 = vunpack.c.l.b16 %v3661
        %v3749 = vunpack.c.h.b16 %v3661
        %v3750 = vunpack.c.l.b16 %v3662
        %v3751 = vpack.c.b16 %v3706, %v3703
        %v3752 = vpack.c.b16 %v3707, %v3704
        %v3753 = vpack.c.b16 %v3708, %v3705
        %v3754 = vpack.c.b16 %v3712, %v3709
        %v3755 = vpack.c.b16 %v3713, %v3710
        %v3756 = vpack.c.b16 %v3714, %v3711
        %v3757 = vpack.c.b16 %v3718, %v3715
        %v3758 = vpack.c.b16 %v3719, %v3716
        %v3759 = vpack.c.b16 %v3720, %v3717
        %v3760 = vpack.c.b16 %v3724, %v3721
        %v3761 = vpack.c.b16 %v3725, %v3722
        %v3762 = vpack.c.b16 %v3726, %v3723
        %v3763 = vpack.c.b16 %v3730, %v3727
        %v3764 = vpack.c.b16 %v3731, %v3728
        %v3765 = vpack.c.b16 %v3732, %v3729
        %v3766 = vpack.c.b16 %v3736, %v3733
        %v3767 = vpack.c.b16 %v3737, %v3734
        %v3768 = vpack.c.b16 %v3738, %v3735
        %v3769 = vpack.c.b16 %v3742, %v3739
        %v3770 = vpack.c.b16 %v3743, %v3740
        %v3771 = vpack.c.b16 %v3744, %v3741
        %v3772 = vpack.c.b16 %v3748, %v3745
        %v3773 = vpack.c.b16 %v3749, %v3746
        %v3774 = vpack.c.b16 %v3750, %v3747
        %3799 = vmatpush.bf16.msra.mxu0 %v3772
        %3800 = vmatpush.bf16.msra.mxu0 %v3769
        %3801 = vmatpush.bf16.msra.mxu0 %v3766
        %3802 = vmatpush.bf16.msra.mxu0 %v3763
        %3803 = vmatpush.bf16.msra.mxu0 %v3760
        %3804 = vmatpush.bf16.msra.mxu0 %v3757
        %3805 = vmatpush.bf16.msra.mxu0 %v3754
        %3806 = vmatpush.bf16.msra.mxu0 %v3751
        %3807 = vmatmul.bf16.gmra.mxu0 %v3630
        %v3808 = vpop.f32.mrf.mxu0
        %v3809 = vadd.f32 %v3665, %v3808
        %v3810 = vpop.f32.mrf.mxu0
        %v3811 = vadd.f32 %v3665, %v3810
        %3812 = vdwg.mxu0
        %3813 = vmatpush.bf16.msra.mxu0 %v3773
        %3814 = vmatpush.bf16.msra.mxu0 %v3770
        %3815 = vmatpush.bf16.msra.mxu0 %v3767
        %3816 = vmatpush.bf16.msra.mxu0 %v3764
        %3817 = vmatpush.bf16.msra.mxu0 %v3761
        %3818 = vmatpush.bf16.msra.mxu0 %v3758
        %3819 = vmatpush.bf16.msra.mxu0 %v3755
        %3820 = vmatpush.bf16.msra.mxu0 %v3752
        %3821 = vmatmul.bf16.gmra.mxu0 %v3630
        %v3822 = vpop.f32.mrf.mxu0
        %v3823 = vadd.f32 %v3666, %v3822
        %v3824 = vpop.f32.mrf.mxu0
        %v3825 = vadd.f32 %v3666, %v3824
        %3826 = vdwg.mxu0
        %3827 = vmatpush.bf16.msra.mxu0 %v3774
        %3828 = vmatpush.bf16.msra.mxu0 %v3771
        %3829 = vmatpush.bf16.msra.mxu0 %v3768
        %3830 = vmatpush.bf16.msra.mxu0 %v3765
        %3831 = vmatpush.bf16.msra.mxu0 %v3762
        %3832 = vmatpush.bf16.msra.mxu0 %v3759
        %3833 = vmatpush.bf16.msra.mxu0 %v3756
        %3834 = vmatpush.bf16.msra.mxu0 %v3753
        %3835 = vmatmul.bf16.gmra.mxu0 %v3630
        %v3836 = vpop.f32.mrf.mxu0
        %v3837 = vadd.f32 %v3667, %v3836
        %v3838 = vpop.f32.mrf.mxu0
        %v3839 = vadd.f32 %v3667, %v3838
        %3840 = vdwg.mxu0
        %v3841 = vld [vmem:[%s707] sm:$0x1]
        %v3842 = vmul.f32 %v3841, -1e+30
        %v3843 = vmul.f32 %v3809, 0.25
        %v3844 = vmul.f32 %v3811, 0.25
        %v3845 = vpack.c.bf16 %v3843, %v3843
        %v3846 = vpack.c.bf16 %v3844, %v3844
        %v3847 = vpack.c.bf16 %v3823, %v3823
        %v3848 = vpack.c.bf16 %v3825, %v3825
        %v3850 = vperm.slane %v3842, 0
        %v3854 = vunpack.c.l.b16 %v3845
        %v3855 = vunpack.c.l.b16 %v3846
        %v3856 = vpack.c.b16 %v3855, %v3854
        %v3859 = vunpack.c.l.b16 %v3847
        %v3860 = vunpack.c.l.b16 %v3848
        %v3861 = vpack.c.b16 %v3860, %v3859
        %vm3862 = vcmask 130048
        %v3864 = vsel %vm3862, %v3856, 0
        %v3867 = vsel %vm3862, %v3861, 0
        %3869 = vmatpush.bf16.xpose.msra.mxu0 0
        %3870 = vmatpush.bf16.xpose.msra.mxu0 0
        %3871 = vmatpush.bf16.xpose.msra.mxu0 0
        %3872 = vmatpush.bf16.xpose.msra.mxu0 0
        %3873 = vmatpush.bf16.xpose.msra.mxu0 0
        %3874 = vmatpush.bf16.xpose.msra.mxu0 0
        %3875 = vmatpush.bf16.xpose.msra.mxu0 0
        %3876 = vmatpush.bf16.xpose.msra.mxu0 %v3867
        %3877 = vmatmul.bf16.gmra.mxu0 %v3864
        %v3878 = vpop.f32.mrf.mxu0
        %v3879 = vadd.f32 %v3850, %v3878
        %v3880 = vpop.f32.mrf.mxu0
        %v3881 = vadd.f32 %v3850, %v3880
        %3882 = vdwg.mxu0
        %v3883 = vsel %vm3862, %v3879, -inf
        %3884 = vmax.xlane.f32.xlu0 %v3883
        %v3885 = vpop.xlane.xlu0 %3884
        %v3886 = vsel %vm3862, %v3881, -inf
        %3887 = vmax.xlane.f32.xlu0 %v3886
        %v3888 = vpop.xlane.xlu0 %3887
        %v3889 = vsub.f32 %v3879, %v3885
        %v3890 = vsub.f32 %v3881, %v3888
        %v3891 = vmul.f32 %v3889, 1.442695
        %v3892 = vpow.pop %v3891
        %v3893 = vmul.f32 %v3890, 1.442695
        %v3894 = vpow.pop %v3893
        %v3895 = vsel %vm3862, %v3892, 0.0
        %3896 = vadd.xlane.f32.xlu0 %v3895
        %v3897 = vpop.xlane.xlu0 %3896
        %v3898 = vsel %vm3862, %v3894, 0.0
        %3899 = vadd.xlane.f32.xlu0 %v3898
        %v3900 = vpop.xlane.xlu0 %3899
        %v3901 = vpack.c.bf16 %v3892, %v3892
        %v3902 = vpack.c.bf16 %v3894, %v3894
        %v3903 = vpack.c.bf16 %v3837, %v3837
        %v3904 = vpack.c.bf16 %v3839, %v3839
        %v3907 = vunpack.c.l.b16 %v3901
        %v3908 = vunpack.c.l.b16 %v3902
        %v3909 = vpack.c.b16 %v3908, %v3907
        %v3912 = vunpack.c.l.b16 %v3903
        %v3913 = vunpack.c.l.b16 %v3904
        %v3914 = vpack.c.b16 %v3913, %v3912
        %v3917 = vsel %vm3862, %v3909, 0
        %3919 = vmatpush.bf16.msra.mxu0 0
        %3920 = vmatpush.bf16.msra.mxu0 0
        %3921 = vmatpush.bf16.msra.mxu0 0
        %3922 = vmatpush.bf16.msra.mxu0 0
        %3923 = vmatpush.bf16.msra.mxu0 0
        %3924 = vmatpush.bf16.msra.mxu0 0
        %3925 = vmatpush.bf16.msra.mxu0 0
        %3926 = vmatpush.bf16.msra.mxu0 %v3914
        %3927 = vmatmul.bf16.gmra.mxu0 %v3917
        %v3928 = vpop.f32.mrf.mxu0
        %v3929 = vadd.f32 0.0, %v3928
        %v3930 = vpop.f32.mrf.mxu0
        %v3931 = vadd.f32 0.0, %v3930
        %3932 = vdwg.mxu0
        %v3933 = vrcp.pop %v3897
        %v3934 = vrcp.pop %v3900
        %v3935 = vmul.f32 %v3929, %v3933
        %v3936 = vmul.f32 %v3931, %v3934
        %v3937 = vpack.c.bf16 %v3936, %v3935
        %v3938 = vld [vmem:[#allocation17] sm:$0xf]
        %v3939 = vld [vmem:[#allocation17 + $0x4] sm:$0xf]
        %3940 = vrot.lane.b32.xlu0 %v3856, 112
        %v3941 = vpop.permute.xlu0 %3940
        %3942 = vrot.lane.b32.xlu0 %v3861, 112
        %v3943 = vpop.permute.xlu0 %3942
        %v3945 = vsel %vm3862, %v3941, 0
        %v3948 = vsel %vm3862, %v3943, 0
        %3950 = vmatpush.bf16.xpose.msra.mxu0 0
        %3951 = vmatpush.bf16.xpose.msra.mxu0 0
        %3952 = vmatpush.bf16.xpose.msra.mxu0 0
        %3953 = vmatpush.bf16.xpose.msra.mxu0 0
        %3954 = vmatpush.bf16.xpose.msra.mxu0 0
        %3955 = vmatpush.bf16.xpose.msra.mxu0 0
        %3956 = vmatpush.bf16.xpose.msra.mxu0 0
        %3957 = vmatpush.bf16.xpose.msra.mxu0 %v3948
        %3958 = vmatmul.bf16.gmra.mxu0 %v3945
        %v3959 = vpop.f32.mrf.mxu0
        %v3960 = vadd.f32 %v3850, %v3959
        %v3961 = vpop.f32.mrf.mxu0
        %v3962 = vadd.f32 %v3850, %v3961
        %3963 = vdwg.mxu0
        %v3964 = vsel %vm3862, %v3960, -inf
        %3965 = vmax.xlane.f32.xlu0 %v3964
        %v3966 = vpop.xlane.xlu0 %3965
        %v3967 = vsel %vm3862, %v3962, -inf
        %3968 = vmax.xlane.f32.xlu0 %v3967
        %v3969 = vpop.xlane.xlu0 %3968
        %v3970 = vsub.f32 %v3960, %v3966
        %v3971 = vsub.f32 %v3962, %v3969
        %v3972 = vmul.f32 %v3970, 1.442695
        %v3973 = vpow.pop %v3972
        %v3974 = vmul.f32 %v3971, 1.442695
        %v3975 = vpow.pop %v3974
        %v3976 = vsel %vm3862, %v3973, 0.0
        %3977 = vadd.xlane.f32.xlu0 %v3976
        %v3978 = vpop.xlane.xlu0 %3977
        %v3979 = vsel %vm3862, %v3975, 0.0
        %3980 = vadd.xlane.f32.xlu0 %v3979
        %v3981 = vpop.xlane.xlu0 %3980
        %v3982 = vpack.c.bf16 %v3973, %v3973
        %v3983 = vpack.c.bf16 %v3975, %v3975
        %v3986 = vunpack.c.l.b16 %v3982
        %v3987 = vunpack.c.l.b16 %v3983
        %v3988 = vpack.c.b16 %v3987, %v3986
        %3989 = vrot.lane.b32.xlu0 %v3914, 112
        %v3990 = vpop.permute.xlu0 %3989
        %v3993 = vsel %vm3862, %v3988, 0
        %3995 = vmatpush.bf16.msra.mxu0 0
        %3996 = vmatpush.bf16.msra.mxu0 0
        %3997 = vmatpush.bf16.msra.mxu0 0
        %3998 = vmatpush.bf16.msra.mxu0 0
        %3999 = vmatpush.bf16.msra.mxu0 0
        %4000 = vmatpush.bf16.msra.mxu0 0
        %4001 = vmatpush.bf16.msra.mxu0 0
        %4002 = vmatpush.bf16.msra.mxu0 %v3990
        %4003 = vmatmul.bf16.gmra.mxu0 %v3993
        %v4004 = vpop.f32.mrf.mxu0
        %v4005 = vadd.f32 0.0, %v4004
        %v4006 = vpop.f32.mrf.mxu0
        %v4007 = vadd.f32 0.0, %v4006
        %4008 = vdwg.mxu0
        %v4009 = vrcp.pop %v3978
        %v4010 = vrcp.pop %v3981
        %v4011 = vmul.f32 %v4005, %v4009
        %v4012 = vmul.f32 %v4007, %v4010
        %v4013 = vpack.c.bf16 %v4012, %v4011
        %v4014 = vld [vmem:[#allocation17 + $0x8] sm:$0xf]
        %v4015 = vld [vmem:[#allocation17 + $0xc] sm:$0xf]
        %v4018 = vunpack.c.l.b16 %v4014
        %v4019 = vunpack.c.l.b16 %v4015
        %v4020 = vpack.c.b16 %v4019, %v4018
        %v4023 = vsel %vm3862, %v4013, 0
        %4025 = vmatpush.bf16.msra.mxu0 0
        %4026 = vmatpush.bf16.msra.mxu0 0
        %4027 = vmatpush.bf16.msra.mxu0 0
        %4028 = vmatpush.bf16.msra.mxu0 0
        %4029 = vmatpush.bf16.msra.mxu0 0
        %4030 = vmatpush.bf16.msra.mxu0 0
        %4031 = vmatpush.bf16.msra.mxu0 0
        %4032 = vmatpush.bf16.msra.mxu0 %v4020
        %4033 = vmatmul.bf16.gmra.mxu0 %v4023
        %v4034 = vpop.f32.mrf.mxu0
        %v4035 = vadd.f32 0.0, %v4034
        %v4036 = vpop.f32.mrf.mxu0
        %v4037 = vadd.f32 0.0, %v4036
        %4038 = vdwg.mxu0
        %v4041 = vunpack.c.l.b16 %v3938
        %v4042 = vunpack.c.l.b16 %v3939
        %v4043 = vpack.c.b16 %v4042, %v4041
        %v4046 = vsel %vm3862, %v3937, 0
        %4048 = vmatpush.bf16.msra.mxu0 0
        %4049 = vmatpush.bf16.msra.mxu0 0
        %4050 = vmatpush.bf16.msra.mxu0 0
        %4051 = vmatpush.bf16.msra.mxu0 0
        %4052 = vmatpush.bf16.msra.mxu0 0
        %4053 = vmatpush.bf16.msra.mxu0 0
        %4054 = vmatpush.bf16.msra.mxu0 0
        %4055 = vmatpush.bf16.msra.mxu0 %v4043
        %4056 = vmatmul.bf16.gmra.mxu0 %v4046
        %v4057 = vpop.f32.mrf.mxu0
        %v4058 = vadd.f32 %v4035, %v4057
        %v4059 = vpop.f32.mrf.mxu0
        %v4060 = vadd.f32 %v4037, %v4059
        %4061 = vdwg.mxu0
        %4062 = vrot.lane.b32.xlu0 %v3856, 96
        %v4063 = vpop.permute.xlu0 %4062
        %4064 = vrot.lane.b32.xlu0 %v3861, 96
        %v4065 = vpop.permute.xlu0 %4064
        %v4067 = vsel %vm3862, %v4063, 0
        %v4070 = vsel %vm3862, %v4065, 0
        %4072 = vmatpush.bf16.xpose.msra.mxu0 0
        %4073 = vmatpush.bf16.xpose.msra.mxu0 0
        %4074 = vmatpush.bf16.xpose.msra.mxu0 0
        %4075 = vmatpush.bf16.xpose.msra.mxu0 0
        %4076 = vmatpush.bf16.xpose.msra.mxu0 0
        %4077 = vmatpush.bf16.xpose.msra.mxu0 0
        %4078 = vmatpush.bf16.xpose.msra.mxu0 0
        %4079 = vmatpush.bf16.xpose.msra.mxu0 %v4070
        %4080 = vmatmul.bf16.gmra.mxu0 %v4067
        %v4081 = vpop.f32.mrf.mxu0
        %v4082 = vadd.f32 %v3850, %v4081
        %v4083 = vpop.f32.mrf.mxu0
        %v4084 = vadd.f32 %v3850, %v4083
        %4085 = vdwg.mxu0
        %v4086 = vsel %vm3862, %v4082, -inf
        %4087 = vmax.xlane.f32.xlu0 %v4086
        %v4088 = vpop.xlane.xlu0 %4087
        %v4089 = vsel %vm3862, %v4084, -inf
        %4090 = vmax.xlane.f32.xlu0 %v4089
        %v4091 = vpop.xlane.xlu0 %4090
        %v4092 = vsub.f32 %v4082, %v4088
        %v4093 = vsub.f32 %v4084, %v4091
        %v4094 = vmul.f32 %v4092, 1.442695
        %v4095 = vpow.pop %v4094
        %v4096 = vmul.f32 %v4093, 1.442695
        %v4097 = vpow.pop %v4096
        %v4098 = vsel %vm3862, %v4095, 0.0
        %4099 = vadd.xlane.f32.xlu0 %v4098
        %v4100 = vpop.xlane.xlu0 %4099
        %v4101 = vsel %vm3862, %v4097, 0.0
        %4102 = vadd.xlane.f32.xlu0 %v4101
        %v4103 = vpop.xlane.xlu0 %4102
        %v4104 = vpack.c.bf16 %v4095, %v4095
        %v4105 = vpack.c.bf16 %v4097, %v4097
        %v4108 = vunpack.c.l.b16 %v4104
        %v4109 = vunpack.c.l.b16 %v4105
        %v4110 = vpack.c.b16 %v4109, %v4108
        %4111 = vrot.lane.b32.xlu0 %v3914, 96
        %v4112 = vpop.permute.xlu0 %4111
        %v4115 = vsel %vm3862, %v4110, 0
        %4117 = vmatpush.bf16.msra.mxu0 0
        %4118 = vmatpush.bf16.msra.mxu0 0
        %4119 = vmatpush.bf16.msra.mxu0 0
        %4120 = vmatpush.bf16.msra.mxu0 0
        %4121 = vmatpush.bf16.msra.mxu0 0
        %4122 = vmatpush.bf16.msra.mxu0 0
        %4123 = vmatpush.bf16.msra.mxu0 0
        %4124 = vmatpush.bf16.msra.mxu0 %v4112
        %4125 = vmatmul.bf16.gmra.mxu0 %v4115
        %v4126 = vpop.f32.mrf.mxu0
        %v4127 = vadd.f32 0.0, %v4126
        %v4128 = vpop.f32.mrf.mxu0
        %v4129 = vadd.f32 0.0, %v4128
        %4130 = vdwg.mxu0
        %v4131 = vrcp.pop %v4100
        %v4132 = vrcp.pop %v4103
        %v4133 = vmul.f32 %v4127, %v4131
        %v4134 = vmul.f32 %v4129, %v4132
        %v4135 = vpack.c.bf16 %v4134, %v4133
        %v4136 = vld [vmem:[#allocation17 + $0x10] sm:$0xf]
        %v4137 = vld [vmem:[#allocation17 + $0x14] sm:$0xf]
        %v4140 = vunpack.c.l.b16 %v4136
        %v4141 = vunpack.c.l.b16 %v4137
        %v4142 = vpack.c.b16 %v4141, %v4140
        %v4145 = vsel %vm3862, %v4135, 0
        %4147 = vmatpush.bf16.msra.mxu0 0
        %4148 = vmatpush.bf16.msra.mxu0 0
        %4149 = vmatpush.bf16.msra.mxu0 0
        %4150 = vmatpush.bf16.msra.mxu0 0
        %4151 = vmatpush.bf16.msra.mxu0 0
        %4152 = vmatpush.bf16.msra.mxu0 0
        %4153 = vmatpush.bf16.msra.mxu0 0
        %4154 = vmatpush.bf16.msra.mxu0 %v4142
        %4155 = vmatmul.bf16.gmra.mxu0 %v4145
        %v4156 = vpop.f32.mrf.mxu0
        %v4157 = vadd.f32 0.0, %v4156
        %v4158 = vpop.f32.mrf.mxu0
        %v4159 = vadd.f32 0.0, %v4158
        %4160 = vdwg.mxu0
        %v4161 = vadd.f32 %v4058, %v4157
        %v4162 = vadd.f32 %v4060, %v4159
        %4163 = vrot.lane.b32.xlu0 %v3856, 80
        %v4164 = vpop.permute.xlu0 %4163
        %4165 = vrot.lane.b32.xlu0 %v3861, 80
        %v4166 = vpop.permute.xlu0 %4165
        %v4168 = vsel %vm3862, %v4164, 0
        %v4171 = vsel %vm3862, %v4166, 0
        %4173 = vmatpush.bf16.xpose.msra.mxu0 0
        %4174 = vmatpush.bf16.xpose.msra.mxu0 0
        %4175 = vmatpush.bf16.xpose.msra.mxu0 0
        %4176 = vmatpush.bf16.xpose.msra.mxu0 0
        %4177 = vmatpush.bf16.xpose.msra.mxu0 0
        %4178 = vmatpush.bf16.xpose.msra.mxu0 0
        %4179 = vmatpush.bf16.xpose.msra.mxu0 0
        %4180 = vmatpush.bf16.xpose.msra.mxu0 %v4171
        %4181 = vmatmul.bf16.gmra.mxu0 %v4168
        %v4182 = vpop.f32.mrf.mxu0
        %v4183 = vadd.f32 %v3850, %v4182
        %v4184 = vpop.f32.mrf.mxu0
        %v4185 = vadd.f32 %v3850, %v4184
        %4186 = vdwg.mxu0
        %v4187 = vsel %vm3862, %v4183, -inf
        %4188 = vmax.xlane.f32.xlu0 %v4187
        %v4189 = vpop.xlane.xlu0 %4188
        %v4190 = vsel %vm3862, %v4185, -inf
        %4191 = vmax.xlane.f32.xlu0 %v4190
        %v4192 = vpop.xlane.xlu0 %4191
        %v4193 = vsub.f32 %v4183, %v4189
        %v4194 = vsub.f32 %v4185, %v4192
        %v4195 = vmul.f32 %v4193, 1.442695
        %v4196 = vpow.pop %v4195
        %v4197 = vmul.f32 %v4194, 1.442695
        %v4198 = vpow.pop %v4197
        %v4199 = vsel %vm3862, %v4196, 0.0
        %4200 = vadd.xlane.f32.xlu0 %v4199
        %v4201 = vpop.xlane.xlu0 %4200
        %v4202 = vsel %vm3862, %v4198, 0.0
        %4203 = vadd.xlane.f32.xlu0 %v4202
        %v4204 = vpop.xlane.xlu0 %4203
        %v4205 = vpack.c.bf16 %v4196, %v4196
        %v4206 = vpack.c.bf16 %v4198, %v4198
        %v4209 = vunpack.c.l.b16 %v4205
        %v4210 = vunpack.c.l.b16 %v4206
        %v4211 = vpack.c.b16 %v4210, %v4209
        %4212 = vrot.lane.b32.xlu0 %v3914, 80
        %v4213 = vpop.permute.xlu0 %4212
        %v4216 = vsel %vm3862, %v4211, 0
        %4218 = vmatpush.bf16.msra.mxu0 0
        %4219 = vmatpush.bf16.msra.mxu0 0
        %4220 = vmatpush.bf16.msra.mxu0 0
        %4221 = vmatpush.bf16.msra.mxu0 0
        %4222 = vmatpush.bf16.msra.mxu0 0
        %4223 = vmatpush.bf16.msra.mxu0 0
        %4224 = vmatpush.bf16.msra.mxu0 0
        %4225 = vmatpush.bf16.msra.mxu0 %v4213
        %4226 = vmatmul.bf16.gmra.mxu0 %v4216
        %v4227 = vpop.f32.mrf.mxu0
        %v4228 = vadd.f32 0.0, %v4227
        %v4229 = vpop.f32.mrf.mxu0
        %v4230 = vadd.f32 0.0, %v4229
        %4231 = vdwg.mxu0
        %v4232 = vrcp.pop %v4201
        %v4233 = vrcp.pop %v4204
        %v4234 = vmul.f32 %v4228, %v4232
        %v4235 = vmul.f32 %v4230, %v4233
        %v4236 = vpack.c.bf16 %v4235, %v4234
        %v4237 = vld [vmem:[#allocation17 + $0x18] sm:$0xf]
        %v4238 = vld [vmem:[#allocation17 + $0x1c] sm:$0xf]
        %v4241 = vunpack.c.l.b16 %v4237
        %v4242 = vunpack.c.l.b16 %v4238
        %v4243 = vpack.c.b16 %v4242, %v4241
        %v4246 = vsel %vm3862, %v4236, 0
        %4248 = vmatpush.bf16.msra.mxu0 0
        %4249 = vmatpush.bf16.msra.mxu0 0
        %4250 = vmatpush.bf16.msra.mxu0 0
        %4251 = vmatpush.bf16.msra.mxu0 0
        %4252 = vmatpush.bf16.msra.mxu0 0
        %4253 = vmatpush.bf16.msra.mxu0 0
        %4254 = vmatpush.bf16.msra.mxu0 0
        %4255 = vmatpush.bf16.msra.mxu0 %v4243
        %4256 = vmatmul.bf16.gmra.mxu0 %v4246
        %v4257 = vpop.f32.mrf.mxu0
        %v4258 = vadd.f32 0.0, %v4257
        %v4259 = vpop.f32.mrf.mxu0
        %v4260 = vadd.f32 0.0, %v4259
        %4261 = vdwg.mxu0
        %v4262 = vadd.f32 %v4161, %v4258
        %v4263 = vadd.f32 %v4162, %v4260
        %4264 = vrot.lane.b32.xlu0 %v3856, 64
        %v4265 = vpop.permute.xlu0 %4264
        %4266 = vrot.lane.b32.xlu0 %v3861, 64
        %v4267 = vpop.permute.xlu0 %4266
        %v4269 = vsel %vm3862, %v4265, 0
        %v4272 = vsel %vm3862, %v4267, 0
        %4274 = vmatpush.bf16.xpose.msra.mxu0 0
        %4275 = vmatpush.bf16.xpose.msra.mxu0 0
        %4276 = vmatpush.bf16.xpose.msra.mxu0 0
        %4277 = vmatpush.bf16.xpose.msra.mxu0 0
        %4278 = vmatpush.bf16.xpose.msra.mxu0 0
        %4279 = vmatpush.bf16.xpose.msra.mxu0 0
        %4280 = vmatpush.bf16.xpose.msra.mxu0 0
        %4281 = vmatpush.bf16.xpose.msra.mxu0 %v4272
        %4282 = vmatmul.bf16.gmra.mxu0 %v4269
        %v4283 = vpop.f32.mrf.mxu0
        %v4284 = vadd.f32 %v3850, %v4283
        %v4285 = vpop.f32.mrf.mxu0
        %v4286 = vadd.f32 %v3850, %v4285
        %4287 = vdwg.mxu0
        %v4288 = vsel %vm3862, %v4284, -inf
        %4289 = vmax.xlane.f32.xlu0 %v4288
        %v4290 = vpop.xlane.xlu0 %4289
        %v4291 = vsel %vm3862, %v4286, -inf
        %4292 = vmax.xlane.f32.xlu0 %v4291
        %v4293 = vpop.xlane.xlu0 %4292
        %v4294 = vsub.f32 %v4284, %v4290
        %v4295 = vsub.f32 %v4286, %v4293
        %v4296 = vmul.f32 %v4294, 1.442695
        %v4297 = vpow.pop %v4296
        %v4298 = vmul.f32 %v4295, 1.442695
        %v4299 = vpow.pop %v4298
        %v4300 = vsel %vm3862, %v4297, 0.0
        %4301 = vadd.xlane.f32.xlu0 %v4300
        %v4302 = vpop.xlane.xlu0 %4301
        %v4303 = vsel %vm3862, %v4299, 0.0
        %4304 = vadd.xlane.f32.xlu0 %v4303
        %v4305 = vpop.xlane.xlu0 %4304
        %v4306 = vpack.c.bf16 %v4297, %v4297
        %v4307 = vpack.c.bf16 %v4299, %v4299
        %v4310 = vunpack.c.l.b16 %v4306
        %v4311 = vunpack.c.l.b16 %v4307
        %v4312 = vpack.c.b16 %v4311, %v4310
        %4313 = vrot.lane.b32.xlu0 %v3914, 64
        %v4314 = vpop.permute.xlu0 %4313
        %v4317 = vsel %vm3862, %v4312, 0
        %4319 = vmatpush.bf16.msra.mxu0 0
        %4320 = vmatpush.bf16.msra.mxu0 0
        %4321 = vmatpush.bf16.msra.mxu0 0
        %4322 = vmatpush.bf16.msra.mxu0 0
        %4323 = vmatpush.bf16.msra.mxu0 0
        %4324 = vmatpush.bf16.msra.mxu0 0
        %4325 = vmatpush.bf16.msra.mxu0 0
        %4326 = vmatpush.bf16.msra.mxu0 %v4314
        %4327 = vmatmul.bf16.gmra.mxu0 %v4317
        %v4328 = vpop.f32.mrf.mxu0
        %v4329 = vadd.f32 0.0, %v4328
        %v4330 = vpop.f32.mrf.mxu0
        %v4331 = vadd.f32 0.0, %v4330
        %4332 = vdwg.mxu0
        %v4333 = vrcp.pop %v4302
        %v4334 = vrcp.pop %v4305
        %v4335 = vmul.f32 %v4329, %v4333
        %v4336 = vmul.f32 %v4331, %v4334
        %v4337 = vpack.c.bf16 %v4336, %v4335
        %v4338 = vld [vmem:[#allocation17 + $0x20] sm:$0xf]
        %v4339 = vld [vmem:[#allocation17 + $0x24] sm:$0xf]
        %v4342 = vunpack.c.l.b16 %v4338
        %v4343 = vunpack.c.l.b16 %v4339
        %v4344 = vpack.c.b16 %v4343, %v4342
        %v4347 = vsel %vm3862, %v4337, 0
        %4349 = vmatpush.bf16.msra.mxu0 0
        %4350 = vmatpush.bf16.msra.mxu0 0
        %4351 = vmatpush.bf16.msra.mxu0 0
        %4352 = vmatpush.bf16.msra.mxu0 0
        %4353 = vmatpush.bf16.msra.mxu0 0
        %4354 = vmatpush.bf16.msra.mxu0 0
        %4355 = vmatpush.bf16.msra.mxu0 0
        %4356 = vmatpush.bf16.msra.mxu0 %v4344
        %4357 = vmatmul.bf16.gmra.mxu0 %v4347
        %v4358 = vpop.f32.mrf.mxu0
        %v4359 = vadd.f32 0.0, %v4358
        %v4360 = vpop.f32.mrf.mxu0
        %v4361 = vadd.f32 0.0, %v4360
        %4362 = vdwg.mxu0
        %v4363 = vadd.f32 %v4262, %v4359
        %v4364 = vadd.f32 %v4263, %v4361
        %4365 = vrot.lane.b32.xlu0 %v3856, 48
        %v4366 = vpop.permute.xlu0 %4365
        %4367 = vrot.lane.b32.xlu0 %v3861, 48
        %v4368 = vpop.permute.xlu0 %4367
        %v4370 = vsel %vm3862, %v4366, 0
        %v4373 = vsel %vm3862, %v4368, 0
        %4375 = vmatpush.bf16.xpose.msra.mxu0 0
        %4376 = vmatpush.bf16.xpose.msra.mxu0 0
        %4377 = vmatpush.bf16.xpose.msra.mxu0 0
        %4378 = vmatpush.bf16.xpose.msra.mxu0 0
        %4379 = vmatpush.bf16.xpose.msra.mxu0 0
        %4380 = vmatpush.bf16.xpose.msra.mxu0 0
        %4381 = vmatpush.bf16.xpose.msra.mxu0 0
        %4382 = vmatpush.bf16.xpose.msra.mxu0 %v4373
        %4383 = vmatmul.bf16.gmra.mxu0 %v4370
        %v4384 = vpop.f32.mrf.mxu0
        %v4385 = vadd.f32 %v3850, %v4384
        %v4386 = vpop.f32.mrf.mxu0
        %v4387 = vadd.f32 %v3850, %v4386
        %4388 = vdwg.mxu0
        %v4389 = vsel %vm3862, %v4385, -inf
        %4390 = vmax.xlane.f32.xlu0 %v4389
        %v4391 = vpop.xlane.xlu0 %4390
        %v4392 = vsel %vm3862, %v4387, -inf
        %4393 = vmax.xlane.f32.xlu0 %v4392
        %v4394 = vpop.xlane.xlu0 %4393
        %v4395 = vsub.f32 %v4385, %v4391
        %v4396 = vsub.f32 %v4387, %v4394
        %v4397 = vmul.f32 %v4395, 1.442695
        %v4398 = vpow.pop %v4397
        %v4399 = vmul.f32 %v4396, 1.442695
        %v4400 = vpow.pop %v4399
        %v4401 = vsel %vm3862, %v4398, 0.0
        %4402 = vadd.xlane.f32.xlu0 %v4401
        %v4403 = vpop.xlane.xlu0 %4402
        %v4404 = vsel %vm3862, %v4400, 0.0
        %4405 = vadd.xlane.f32.xlu0 %v4404
        %v4406 = vpop.xlane.xlu0 %4405
        %v4407 = vpack.c.bf16 %v4398, %v4398
        %v4408 = vpack.c.bf16 %v4400, %v4400
        %v4411 = vunpack.c.l.b16 %v4407
        %v4412 = vunpack.c.l.b16 %v4408
        %v4413 = vpack.c.b16 %v4412, %v4411
        %4414 = vrot.lane.b32.xlu0 %v3914, 48
        %v4415 = vpop.permute.xlu0 %4414
        %v4418 = vsel %vm3862, %v4413, 0
        %4420 = vmatpush.bf16.msra.mxu0 0
        %4421 = vmatpush.bf16.msra.mxu0 0
        %4422 = vmatpush.bf16.msra.mxu0 0
        %4423 = vmatpush.bf16.msra.mxu0 0
        %4424 = vmatpush.bf16.msra.mxu0 0
        %4425 = vmatpush.bf16.msra.mxu0 0
        %4426 = vmatpush.bf16.msra.mxu0 0
        %4427 = vmatpush.bf16.msra.mxu0 %v4415
        %4428 = vmatmul.bf16.gmra.mxu0 %v4418
        %v4429 = vpop.f32.mrf.mxu0
        %v4430 = vadd.f32 0.0, %v4429
        %v4431 = vpop.f32.mrf.mxu0
        %v4432 = vadd.f32 0.0, %v4431
        %4433 = vdwg.mxu0
        %v4434 = vrcp.pop %v4403
        %v4435 = vrcp.pop %v4406
        %v4436 = vmul.f32 %v4430, %v4434
        %v4437 = vmul.f32 %v4432, %v4435
        %v4438 = vpack.c.bf16 %v4437, %v4436
        %v4439 = vld [vmem:[#allocation17 + $0x28] sm:$0xf]
        %v4440 = vld [vmem:[#allocation17 + $0x2c] sm:$0xf]
        %v4443 = vunpack.c.l.b16 %v4439
        %v4444 = vunpack.c.l.b16 %v4440
        %v4445 = vpack.c.b16 %v4444, %v4443
        %v4448 = vsel %vm3862, %v4438, 0
        %4450 = vmatpush.bf16.msra.mxu0 0
        %4451 = vmatpush.bf16.msra.mxu0 0
        %4452 = vmatpush.bf16.msra.mxu0 0
        %4453 = vmatpush.bf16.msra.mxu0 0
        %4454 = vmatpush.bf16.msra.mxu0 0
        %4455 = vmatpush.bf16.msra.mxu0 0
        %4456 = vmatpush.bf16.msra.mxu0 0
        %4457 = vmatpush.bf16.msra.mxu0 %v4445
        %4458 = vmatmul.bf16.gmra.mxu0 %v4448
        %v4459 = vpop.f32.mrf.mxu0
        %v4460 = vadd.f32 0.0, %v4459
        %v4461 = vpop.f32.mrf.mxu0
        %v4462 = vadd.f32 0.0, %v4461
        %4463 = vdwg.mxu0
        %v4464 = vadd.f32 %v4363, %v4460
        %v4465 = vadd.f32 %v4364, %v4462
        %4466 = vrot.lane.b32.xlu0 %v3856, 32
        %v4467 = vpop.permute.xlu0 %4466
        %4468 = vrot.lane.b32.xlu0 %v3861, 32
        %v4469 = vpop.permute.xlu0 %4468
        %v4471 = vsel %vm3862, %v4467, 0
        %v4474 = vsel %vm3862, %v4469, 0
        %4476 = vmatpush.bf16.xpose.msra.mxu0 0
        %4477 = vmatpush.bf16.xpose.msra.mxu0 0
        %4478 = vmatpush.bf16.xpose.msra.mxu0 0
        %4479 = vmatpush.bf16.xpose.msra.mxu0 0
        %4480 = vmatpush.bf16.xpose.msra.mxu0 0
        %4481 = vmatpush.bf16.xpose.msra.mxu0 0
        %4482 = vmatpush.bf16.xpose.msra.mxu0 0
        %4483 = vmatpush.bf16.xpose.msra.mxu0 %v4474
        %4484 = vmatmul.bf16.gmra.mxu0 %v4471
        %v4485 = vpop.f32.mrf.mxu0
        %v4486 = vadd.f32 %v3850, %v4485
        %v4487 = vpop.f32.mrf.mxu0
        %v4488 = vadd.f32 %v3850, %v4487
        %4489 = vdwg.mxu0
        %v4490 = vsel %vm3862, %v4486, -inf
        %4491 = vmax.xlane.f32.xlu0 %v4490
        %v4492 = vpop.xlane.xlu0 %4491
        %v4493 = vsel %vm3862, %v4488, -inf
        %4494 = vmax.xlane.f32.xlu0 %v4493
        %v4495 = vpop.xlane.xlu0 %4494
        %v4496 = vsub.f32 %v4486, %v4492
        %v4497 = vsub.f32 %v4488, %v4495
        %v4498 = vmul.f32 %v4496, 1.442695
        %v4499 = vpow.pop %v4498
        %v4500 = vmul.f32 %v4497, 1.442695
        %v4501 = vpow.pop %v4500
        %v4502 = vsel %vm3862, %v4499, 0.0
        %4503 = vadd.xlane.f32.xlu0 %v4502
        %v4504 = vpop.xlane.xlu0 %4503
        %v4505 = vsel %vm3862, %v4501, 0.0
        %4506 = vadd.xlane.f32.xlu0 %v4505
        %v4507 = vpop.xlane.xlu0 %4506
        %v4508 = vpack.c.bf16 %v4499, %v4499
        %v4509 = vpack.c.bf16 %v4501, %v4501
        %v4512 = vunpack.c.l.b16 %v4508
        %v4513 = vunpack.c.l.b16 %v4509
        %v4514 = vpack.c.b16 %v4513, %v4512
        %4515 = vrot.lane.b32.xlu0 %v3914, 32
        %v4516 = vpop.permute.xlu0 %4515
        %v4519 = vsel %vm3862, %v4514, 0
        %4521 = vmatpush.bf16.msra.mxu0 0
        %4522 = vmatpush.bf16.msra.mxu0 0
        %4523 = vmatpush.bf16.msra.mxu0 0
        %4524 = vmatpush.bf16.msra.mxu0 0
        %4525 = vmatpush.bf16.msra.mxu0 0
        %4526 = vmatpush.bf16.msra.mxu0 0
        %4527 = vmatpush.bf16.msra.mxu0 0
        %4528 = vmatpush.bf16.msra.mxu0 %v4516
        %4529 = vmatmul.bf16.gmra.mxu0 %v4519
        %v4530 = vpop.f32.mrf.mxu0
        %v4531 = vadd.f32 0.0, %v4530
        %v4532 = vpop.f32.mrf.mxu0
        %v4533 = vadd.f32 0.0, %v4532
        %4534 = vdwg.mxu0
        %v4535 = vrcp.pop %v4504
        %v4536 = vrcp.pop %v4507
        %v4537 = vmul.f32 %v4531, %v4535
        %v4538 = vmul.f32 %v4533, %v4536
        %v4539 = vpack.c.bf16 %v4538, %v4537
        %v4540 = vld [vmem:[#allocation17 + $0x30] sm:$0xf]
        %v4541 = vld [vmem:[#allocation17 + $0x34] sm:$0xf]
        %v4544 = vunpack.c.l.b16 %v4540
        %v4545 = vunpack.c.l.b16 %v4541
        %v4546 = vpack.c.b16 %v4545, %v4544
        %v4549 = vsel %vm3862, %v4539, 0
        %4551 = vmatpush.bf16.msra.mxu0 0
        %4552 = vmatpush.bf16.msra.mxu0 0
        %4553 = vmatpush.bf16.msra.mxu0 0
        %4554 = vmatpush.bf16.msra.mxu0 0
        %4555 = vmatpush.bf16.msra.mxu0 0
        %4556 = vmatpush.bf16.msra.mxu0 0
        %4557 = vmatpush.bf16.msra.mxu0 0
        %4558 = vmatpush.bf16.msra.mxu0 %v4546
        %4559 = vmatmul.bf16.gmra.mxu0 %v4549
        %v4560 = vpop.f32.mrf.mxu0
        %v4561 = vadd.f32 0.0, %v4560
        %v4562 = vpop.f32.mrf.mxu0
        %v4563 = vadd.f32 0.0, %v4562
        %4564 = vdwg.mxu0
        %v4565 = vadd.f32 %v4464, %v4561
        %v4566 = vadd.f32 %v4465, %v4563
        %4567 = vrot.lane.b32.xlu0 %v3856, 16
        %v4568 = vpop.permute.xlu0 %4567
        %4569 = vrot.lane.b32.xlu0 %v3861, 16
        %v4570 = vpop.permute.xlu0 %4569
        %v4572 = vsel %vm3862, %v4568, 0
        %v4575 = vsel %vm3862, %v4570, 0
        %4577 = vmatpush.bf16.xpose.msra.mxu0 0
        %4578 = vmatpush.bf16.xpose.msra.mxu0 0
        %4579 = vmatpush.bf16.xpose.msra.mxu0 0
        %4580 = vmatpush.bf16.xpose.msra.mxu0 0
        %4581 = vmatpush.bf16.xpose.msra.mxu0 0
        %4582 = vmatpush.bf16.xpose.msra.mxu0 0
        %4583 = vmatpush.bf16.xpose.msra.mxu0 0
        %4584 = vmatpush.bf16.xpose.msra.mxu0 %v4575
        %4585 = vmatmul.bf16.gmra.mxu0 %v4572
        %v4586 = vpop.f32.mrf.mxu0
        %v4587 = vadd.f32 %v3850, %v4586
        %v4588 = vpop.f32.mrf.mxu0
        %v4589 = vadd.f32 %v3850, %v4588
        %4590 = vdwg.mxu0
        %v4591 = vsel %vm3862, %v4587, -inf
        %4592 = vmax.xlane.f32.xlu0 %v4591
        %v4593 = vpop.xlane.xlu0 %4592
        %v4594 = vsel %vm3862, %v4589, -inf
        %4595 = vmax.xlane.f32.xlu0 %v4594
        %v4596 = vpop.xlane.xlu0 %4595
        %v4597 = vsub.f32 %v4587, %v4593
        %v4598 = vsub.f32 %v4589, %v4596
        %v4599 = vmul.f32 %v4597, 1.442695
        %v4600 = vpow.pop %v4599
        %v4601 = vmul.f32 %v4598, 1.442695
        %v4602 = vpow.pop %v4601
        %v4603 = vsel %vm3862, %v4600, 0.0
        %4604 = vadd.xlane.f32.xlu0 %v4603
        %v4605 = vpop.xlane.xlu0 %4604
        %v4606 = vsel %vm3862, %v4602, 0.0
        %4607 = vadd.xlane.f32.xlu0 %v4606
        %v4608 = vpop.xlane.xlu0 %4607
        %v4609 = vpack.c.bf16 %v4600, %v4600
        %v4610 = vpack.c.bf16 %v4602, %v4602
        %v4613 = vunpack.c.l.b16 %v4609
        %v4614 = vunpack.c.l.b16 %v4610
        %v4615 = vpack.c.b16 %v4614, %v4613
        %4616 = vrot.lane.b32.xlu0 %v3914, 16
        %v4617 = vpop.permute.xlu0 %4616
        %v4620 = vsel %vm3862, %v4615, 0
        %4622 = vmatpush.bf16.msra.mxu0 0
        %4623 = vmatpush.bf16.msra.mxu0 0
        %4624 = vmatpush.bf16.msra.mxu0 0
        %4625 = vmatpush.bf16.msra.mxu0 0
        %4626 = vmatpush.bf16.msra.mxu0 0
        %4627 = vmatpush.bf16.msra.mxu0 0
        %4628 = vmatpush.bf16.msra.mxu0 0
        %4629 = vmatpush.bf16.msra.mxu0 %v4617
        %4630 = vmatmul.bf16.gmra.mxu0 %v4620
        %v4631 = vpop.f32.mrf.mxu0
        %v4632 = vadd.f32 0.0, %v4631
        %v4633 = vpop.f32.mrf.mxu0
        %v4634 = vadd.f32 0.0, %v4633
        %4635 = vdwg.mxu0
        %v4636 = vrcp.pop %v4605
        %v4637 = vrcp.pop %v4608
        %v4638 = vmul.f32 %v4632, %v4636
        %v4639 = vmul.f32 %v4634, %v4637
        %v4640 = vpack.c.bf16 %v4639, %v4638
        %v4641 = vld [vmem:[#allocation17 + $0x38] sm:$0xf]
        %v4642 = vld [vmem:[#allocation17 + $0x3c] sm:$0xf]
        %v4645 = vunpack.c.l.b16 %v4641
        %v4646 = vunpack.c.l.b16 %v4642
        %v4647 = vpack.c.b16 %v4646, %v4645
        %v4650 = vsel %vm3862, %v4640, 0
        %4652 = vmatpush.bf16.msra.mxu0 0
        %4653 = vmatpush.bf16.msra.mxu0 0
        %4654 = vmatpush.bf16.msra.mxu0 0
        %4655 = vmatpush.bf16.msra.mxu0 0
        %4656 = vmatpush.bf16.msra.mxu0 0
        %4657 = vmatpush.bf16.msra.mxu0 0
        %4658 = vmatpush.bf16.msra.mxu0 0
        %4659 = vmatpush.bf16.msra.mxu0 %v4647
        %4660 = vmatmul.bf16.gmra.mxu0 %v4650
        %v4661 = vpop.f32.mrf.mxu0
        %v4662 = vadd.f32 0.0, %v4661
        %v4663 = vpop.f32.mrf.mxu0
        %v4664 = vadd.f32 0.0, %v4663
        %4665 = vdwg.mxu0
        %v4666 = vadd.f32 %v4565, %v4662
        %v4667 = vadd.f32 %v4566, %v4664
        %v4668 = vld [vmem:[%s12] sm:$0x1]
        %v4670 = vperm.slane %v4668, 0
        %v4672 = vadd.f32 %v4666, %v4670
        %v4673 = vadd.f32 %v4667, %v4670
        %v4674 = vadd.f32 %v4672, %v3576
        %v4675 = vadd.f32 %v4673, %v3577
        %v4676 = vld [vmem:[%s13] sm:$0x1]
        %v4677 = vld [vmem:[%s14] sm:$0x1]
        %4678 = vadd.xlane.f32.xlu0 %v4674
        %v4679 = vpop.xlane.xlu0 %4678
        %4680 = vadd.xlane.f32.xlu0 %v4675
        %v4681 = vpop.xlane.xlu0 %4680
        %v4682 = vmul.f32 %v4679, %v930
        %v4683 = vmul.f32 %v4681, %v930
        %v4684 = vsub.f32 %v4674, %v4682
        %v4685 = vsub.f32 %v4675, %v4683
        %v4686 = vmul.f32 %v4684, %v4684
        %v4687 = vmul.f32 %v4685, %v4685
        %4688 = vadd.xlane.f32.xlu0 %v4686
        %v4689 = vpop.xlane.xlu0 %4688
        %4690 = vadd.xlane.f32.xlu0 %v4687
        %v4691 = vpop.xlane.xlu0 %4690
        %v4692 = vmul.f32 %v4689, %v930
        %v4693 = vmul.f32 %v4691, %v930
        %v4694 = vadd.f32 %v4692, 1e-05
        %v4695 = vadd.f32 %v4693, 1e-05
        %v4696 = vrsqrt.pop %v4694
        %v4697 = vmul.f32 %v4696, %v4694
        %v4698 = vmul.f32 %v4697, %v4696
        %v4699 = vmul.f32 0.5, %v4698
        %v4700 = vsub.f32 1.5, %v4699
        %v4701 = vmul.f32 %v4696, %v4700
        %vm4702 = vweird.f32 %v4694
        %vm4703 = vweird.f32 %v4696
        %vm4704 = vmor %vm4702, %vm4703
        %v4705 = vsel %vm4704, %v4696, %v4701
        %v4706 = vrsqrt.pop %v4695
        %v4707 = vmul.f32 %v4706, %v4695
        %v4708 = vmul.f32 %v4707, %v4706
        %v4709 = vmul.f32 0.5, %v4708
        %v4710 = vsub.f32 1.5, %v4709
        %v4711 = vmul.f32 %v4706, %v4710
        %vm4712 = vweird.f32 %v4695
        %vm4713 = vweird.f32 %v4706
        %vm4714 = vmor %vm4712, %vm4713
        %v4715 = vsel %vm4714, %v4706, %v4711
        %v4716 = vmul.f32 %v4684, %v4705
        %v4717 = vmul.f32 %v4685, %v4715
        %v4719 = vperm.slane %v4676, 0
        %v4721 = vmul.f32 %v4716, %v4719
        %v4722 = vmul.f32 %v4717, %v4719
        %v4724 = vperm.slane %v4677, 0
        %v4726 = vadd.f32 %v4721, %v4724
        %v4727 = vadd.f32 %v4722, %v4724
        %v4728 = vpack.c.bf16 %v4727, %v4726
        %v4729 = vld [vmem:[#allocation18] sm:$0xf]
        %v4730 = vld [vmem:[#allocation18 + $0x4] sm:$0xf]
        %v4731 = vld [vmem:[#allocation18 + $0x8] sm:$0xf]
        %v4732 = vld [vmem:[#allocation18 + $0xc] sm:$0xf]
        %v4733 = vld [vmem:[#allocation18 + $0x10] sm:$0xf]
        %v4734 = vld [vmem:[#allocation18 + $0x14] sm:$0xf]
        %v4735 = vld [vmem:[#allocation18 + $0x18] sm:$0xf]
        %v4736 = vld [vmem:[#allocation18 + $0x1c] sm:$0xf]
        %v4737 = vld [vmem:[#allocation18 + $0x20] sm:$0xf]
        %v4738 = vld [vmem:[#allocation18 + $0x24] sm:$0xf]
        %v4739 = vld [vmem:[#allocation18 + $0x28] sm:$0xf]
        %v4740 = vld [vmem:[#allocation18 + $0x2c] sm:$0xf]
        %v4741 = vld [vmem:[#allocation18 + $0x30] sm:$0xf]
        %v4742 = vld [vmem:[#allocation18 + $0x34] sm:$0xf]
        %v4743 = vld [vmem:[#allocation18 + $0x38] sm:$0xf]
        %v4744 = vld [vmem:[#allocation18 + $0x3c] sm:$0xf]
        %v4745 = vld [vmem:[%s16] sm:$0x1]
        %v4747 = vperm.slane %v4745, 0
        %v4765 = vunpack.c.l.b16 %v4729
        %v4766 = vunpack.c.l.b16 %v4730
        %v4767 = vunpack.c.l.b16 %v4731
        %v4768 = vunpack.c.l.b16 %v4732
        %v4769 = vunpack.c.l.b16 %v4733
        %v4770 = vunpack.c.l.b16 %v4734
        %v4771 = vunpack.c.l.b16 %v4735
        %v4772 = vunpack.c.l.b16 %v4736
        %v4773 = vunpack.c.l.b16 %v4737
        %v4774 = vunpack.c.l.b16 %v4738
        %v4775 = vunpack.c.l.b16 %v4739
        %v4776 = vunpack.c.l.b16 %v4740
        %v4777 = vunpack.c.l.b16 %v4741
        %v4778 = vunpack.c.l.b16 %v4742
        %v4779 = vunpack.c.l.b16 %v4743
        %v4780 = vunpack.c.l.b16 %v4744
        %v4781 = vpack.c.b16 %v4766, %v4765
        %v4782 = vpack.c.b16 %v4768, %v4767
        %v4783 = vpack.c.b16 %v4770, %v4769
        %v4784 = vpack.c.b16 %v4772, %v4771
        %v4785 = vpack.c.b16 %v4774, %v4773
        %v4786 = vpack.c.b16 %v4776, %v4775
        %v4787 = vpack.c.b16 %v4778, %v4777
        %v4788 = vpack.c.b16 %v4780, %v4779
        %4797 = vmatpush.bf16.msra.mxu0 %v4788
        %4798 = vmatpush.bf16.msra.mxu0 %v4787
        %4799 = vmatpush.bf16.msra.mxu0 %v4786
        %4800 = vmatpush.bf16.msra.mxu0 %v4785
        %4801 = vmatpush.bf16.msra.mxu0 %v4784
        %4802 = vmatpush.bf16.msra.mxu0 %v4783
        %4803 = vmatpush.bf16.msra.mxu0 %v4782
        %4804 = vmatpush.bf16.msra.mxu0 %v4781
        %4805 = vmatmul.bf16.gmra.mxu0 %v4728
        %v4806 = vpop.f32.mrf.mxu0
        %v4807 = vadd.f32 %v4747, %v4806
        %v4808 = vpop.f32.mrf.mxu0
        %v4809 = vadd.f32 %v4747, %v4808
        %4810 = vdwg.mxu0
        %v4811 = vmax.f32 %v4807, 0.0
        %v4812 = vmax.f32 %v4809, 0.0
        %v4813 = vpack.c.bf16 %v4812, %v4811
        %v4814 = vld [vmem:[#allocation20] sm:$0xf]
        %v4815 = vld [vmem:[#allocation20 + $0x4] sm:$0xf]
        %v4816 = vld [vmem:[#allocation20 + $0x8] sm:$0xf]
        %v4817 = vld [vmem:[#allocation20 + $0xc] sm:$0xf]
        %v4818 = vld [vmem:[#allocation20 + $0x10] sm:$0xf]
        %v4819 = vld [vmem:[#allocation20 + $0x14] sm:$0xf]
        %v4820 = vld [vmem:[#allocation20 + $0x18] sm:$0xf]
        %v4821 = vld [vmem:[#allocation20 + $0x1c] sm:$0xf]
        %v4822 = vld [vmem:[#allocation20 + $0x20] sm:$0xf]
        %v4823 = vld [vmem:[#allocation20 + $0x24] sm:$0xf]
        %v4824 = vld [vmem:[#allocation20 + $0x28] sm:$0xf]
        %v4825 = vld [vmem:[#allocation20 + $0x2c] sm:$0xf]
        %v4826 = vld [vmem:[#allocation20 + $0x30] sm:$0xf]
        %v4827 = vld [vmem:[#allocation20 + $0x34] sm:$0xf]
        %v4828 = vld [vmem:[#allocation20 + $0x38] sm:$0xf]
        %v4829 = vld [vmem:[#allocation20 + $0x3c] sm:$0xf]
        %v4830 = vld [vmem:[%s18] sm:$0x1]
        %v4832 = vperm.slane %v4830, 0
        %v4850 = vunpack.c.l.b16 %v4814
        %v4851 = vunpack.c.l.b16 %v4815
        %v4852 = vunpack.c.l.b16 %v4816
        %v4853 = vunpack.c.l.b16 %v4817
        %v4854 = vunpack.c.l.b16 %v4818
        %v4855 = vunpack.c.l.b16 %v4819
        %v4856 = vunpack.c.l.b16 %v4820
        %v4857 = vunpack.c.l.b16 %v4821
        %v4858 = vunpack.c.l.b16 %v4822
        %v4859 = vunpack.c.l.b16 %v4823
        %v4860 = vunpack.c.l.b16 %v4824
        %v4861 = vunpack.c.l.b16 %v4825
        %v4862 = vunpack.c.l.b16 %v4826
        %v4863 = vunpack.c.l.b16 %v4827
        %v4864 = vunpack.c.l.b16 %v4828
        %v4865 = vunpack.c.l.b16 %v4829
        %v4866 = vpack.c.b16 %v4851, %v4850
        %v4867 = vpack.c.b16 %v4853, %v4852
        %v4868 = vpack.c.b16 %v4855, %v4854
        %v4869 = vpack.c.b16 %v4857, %v4856
        %v4870 = vpack.c.b16 %v4859, %v4858
        %v4871 = vpack.c.b16 %v4861, %v4860
        %v4872 = vpack.c.b16 %v4863, %v4862
        %v4873 = vpack.c.b16 %v4865, %v4864
        %4882 = vmatpush.bf16.msra.mxu0 %v4873
        %4883 = vmatpush.bf16.msra.mxu0 %v4872
        %4884 = vmatpush.bf16.msra.mxu0 %v4871
        %4885 = vmatpush.bf16.msra.mxu0 %v4870
        %4886 = vmatpush.bf16.msra.mxu0 %v4869
        %4887 = vmatpush.bf16.msra.mxu0 %v4868
        %4888 = vmatpush.bf16.msra.mxu0 %v4867
        %4889 = vmatpush.bf16.msra.mxu0 %v4866
        %4890 = vmatmul.bf16.gmra.mxu0 %v4813
        %v4891 = vpop.f32.mrf.mxu0
        %v4892 = vadd.f32 %v4832, %v4891
        %v4893 = vpop.f32.mrf.mxu0
        %v4894 = vadd.f32 %v4832, %v4893
        %4895 = vdwg.mxu0
        %v4896 = vadd.f32 %v4892, %v4674
        %v4897 = vadd.f32 %v4894, %v4675
        %4898 = vst [vmem:[%s811] sm:$0xff] %v4896
        %4899 = vst [vmem:[%s811 + $0x8] sm:$0xff] %v4897
        %s4900 = sand.u32 %s458, 1
        %s4901 = scalar_lea.sflag [#allocation4], %s4900
        %s4902 = sand.u32 %s458, 1
        %s4903 = smul.addr %s4902, 16
        %s4904 = scalar_lea.vmem [#allocation21], %s4903
        // Predicated region
        $region145: #{tpu_custom_call.1} parent=95 // pred_check
          %p4905 = pneg %p468
        $region146: #{tpu_custom_call.1} parent=95 // pred_check_branch
          %4907 = sbr.rel (%p4905) target = $region148
        $region147: #{tpu_custom_call.1} parent=95 // pred_region
          %4909 = vsyncadd %s4901, 0
          %s4910 = smul.addr %s41, 2
          %s4911 = smul.addr %s4910, 8
          %s4912 = scalar_lea.hbm %s19, %s4911
          %s4913 = sshll.u32 %s4904, 4
          %s4914 = int_to_ptr.vmem [resolvable:$true] %s4913
          %s4915 = sshll.u32 %s4912, 4
          %s4916 = int_to_ptr.hbm [resolvable:$true] %s4915
          %4921 = dma.vmem_to_hbm [thread:$0]  %s4914, 256, %s4916, %s4901, 128, 128, 8
        $region148: #{tpu_custom_call.1} parent=95 // pred_fallthru
          _
      $region96: #{tpu_custom_call.1} parent=5 // pred_fallthru
        _
      %p4922 = scmp.le.s32.totalorder 2, %s36
      // Predicated region
      $region149: #{tpu_custom_call.1} parent=5 // pred_check
        %p4923 = pneg %p4922
      $region150: #{tpu_custom_call.1} parent=5 // pred_check_branch
        %4925 = sbr.rel (%p4923) target = $region152
      $region151: #{tpu_custom_call.1} parent=5 // pred_region
        %s4926 = ssub.s32 %s36, 2
        // Predicated region
        $region153: #{tpu_custom_call.1} parent=151 // pred_check
          %p4927 = pneg %p474
        $region154: #{tpu_custom_call.1} parent=151 // pred_check_branch
          %4929 = sbr.rel (%p4927) target = $region156
        $region155: #{tpu_custom_call.1} parent=151 // pred_region
          %s4930 = sand.u32 %s459, 1
          %s4931 = scalar_lea.sflag [#allocation4], %s4930
          %s4932 = sand.u32 %s459, 1
          %s4933 = smul.addr %s4932, 16
          %s4934 = scalar_lea.vmem [#allocation21], %s4933
          %4936 = dma.done %s4931, 256
        $region156: #{tpu_custom_call.1} parent=151 // pred_fallthru
          _
      $region152: #{tpu_custom_call.1} parent=5 // pred_fallthru
        _
    $region6: #{tpu_custom_call.1} parent=1 // loop_footer
      %s40 = sadd.s32 1, %s36
    $region7: #{tpu_custom_call.1} parent=1 // loop_footer_branch
      %35 = sbr.rel target = $region3
    $region8: #{tpu_custom_call.1} parent=1 // loop_exit
      _
    %4937 = vsyncpa [#allocation3], 1
    %s4938 = scalar_lea.sflag [#allocation3], 1
    %4939 = vsyncpa %s4938, 1
    %4940 = vsyncpa [#allocation6], 1
    %4941 = vsyncpa [#allocation10], 1
    %4942 = vsyncpa [#allocation13], 1
    %4943 = vsyncpa [#allocation16], 1
    %4944 = vsyncpa [#allocation19], 1
    %4945 = vsyncpa [#allocation4], 1
    %s4946 = scalar_lea.sflag [#allocation4], 1
    %4947 = vsyncpa %s4946, 1

</llo_original>
